<compile_context>
chip_gen: v6e
topology: v6e:2x2x1
jax: 0.10.0
libtpu: 0.0.40
codegen_flags: <defaults>
</compile_context>

<pallas_src>
import functools

import jax
import jax.numpy as jnp
from jax.experimental import pallas as pl
from jax.experimental.pallas import tpu as pltpu


# ----------------------------------------------------------------------------
# in-kernel helpers (traced inside the Pallas kernel body)
# ----------------------------------------------------------------------------
def _layer_norm_c(x, w, b):
    # WithBias_LayerNorm over channels (axis 0) per pixel, biased variance.
    mu = jnp.mean(x, axis=0, keepdims=True)
    xc = x - mu
    var = jnp.mean(xc * xc, axis=0, keepdims=True)
    return xc * jax.lax.rsqrt(var + 1e-5) * w + b


def _l2_normalize_rows(x):
    # torch.nn.functional.normalize(dim=-1): x / max(||x||_2, 1e-12)
    nrm = jnp.sqrt(jnp.sum(x * x, axis=1, keepdims=True))
    return x / jnp.maximum(nrm, 1e-12)


def _gelu_tanh(x):
    c = 0.7978845608028654  # sqrt(2/pi)
    return 0.5 * x * (1.0 + jnp.tanh(c * (x + 0.044715 * x * x * x)))


def _mm(w, x):
    # 1x1 conv as (Cout, Cin) @ (Cin, N); bf16 operands, f32 accumulation.
    return jnp.dot(w.astype(jnp.bfloat16), x.astype(jnp.bfloat16),
                   preferred_element_type=jnp.float32)


def _dwconv3x3(x, w9, b, masks, img_w):
    # Depthwise 3x3 (padding=1) on a channels-first flattened (R, B*H*W) slab.
    # Each tap is an XLU lane rotation + precomputed border mask (masks[4] is
    # None: the centre tap needs no mask).  The masks also kill any roll wrap
    # across image / batch boundaries.
    hw = x.shape[1]
    acc = x * w9[:, 4:5]                      # centre tap, no mask needed
    tap = 0
    for dh in (-1, 0, 1):
        for dw in (-1, 0, 1):
            if dh == 0 and dw == 0:
                tap += 1
                continue
            off = dh * img_w + dw
            shifted = pltpu.roll(x, (-off) % hw, axis=1)
            acc = acc + (shifted * masks[tap]) * w9[:, tap:tap + 1]
            tap += 1
    return acc + b


# ----------------------------------------------------------------------------
# fused SPFI kernel: one grid step == one branch (m or n), batch folded into
# the lane axis.  Everything (2x LN + attention + LN + FFN + residuals) stays
# in VMEM.
# ----------------------------------------------------------------------------
def _spfi_kernel(t_ref, x_ref, rc_ref, bias_ref, vec_ref, dw_ref, mat_ref,
                 o_ref, *, dim, hidden, num_heads, img_h, img_w, batch):
    C, Hd = dim, hidden
    HW = img_h * img_w

    t = t_ref[...].astype(jnp.float32)          # (C, B*HW)
    x = x_ref[...].astype(jnp.float32)          # (C, B*HW)
    vec = vec_ref[...]                          # (Pv, 1)  f32
    dwp = dw_ref[...]                           # (Pd, 9)  f32
    mat = mat_ref[...]                          # (Pm, Wm) f32
    head_bias = bias_ref[...]                   # (C, C)   f32 (0 / -1e30)

    # ---- unpack the packed parameter slabs (static, 8-aligned offsets) ----
    off = [0]

    def vtake(n):
        s = off[0]
        off[0] = s + n
        return vec[s:s + n, :]

    nt_w, nt_b = vtake(C), vtake(C)
    nx_w, nx_b = vtake(C), vtake(C)
    nf_w, nf_b = vtake(C), vtake(C)
    q_b, q_dw_b = vtake(C), vtake(C)
    kv_b, kv_dw_b = vtake(2 * C), vtake(2 * C)
    proj_b = vtake(C)
    temp_full = vtake(C)                        # per-channel temperature
    pi_b, dwc_b, po_b = vtake(2 * Hd), vtake(2 * Hd), vtake(C)

    q_dw_w = dwp[0:C, :]
    kv_dw_w = dwp[C:3 * C, :]
    ffn_dw_w = dwp[3 * C:3 * C + 2 * Hd, :]

    q_w = mat[0:C, :C]
    kv_w = mat[C:3 * C, :C]
    proj_w = mat[3 * C:4 * C, :C]
    pi_w = mat[4 * C:4 * C + 2 * Hd, :C]
    po_w = mat[4 * C + 2 * Hd:5 * C + 2 * Hd, :Hd]

    # ---- 3x3 border masks, shared by all three depthwise convs ----
    rc = rc_ref[...]                            # (2, B*HW) int32
    row = rc[0:1, :]
    col = rc[1:2, :]
    masks = []
    for dh in (-1, 0, 1):
        for dw in (-1, 0, 1):
            if dh == 0 and dw == 0:
                masks.append(None)
                continue
            ok = ((row + dh >= 0) & (row + dh < img_h) &
                  (col + dw >= 0) & (col + dw < img_w))
            masks.append(ok.astype(jnp.float32))

    # ---------------- cross attention ----------------
    tn = _layer_norm_c(t, nt_w, nt_b)           # x_q  = LN(branch)
    xn = _layer_norm_c(x, nx_w, nx_b)           # x_kv = LN(x)

    q = _dwconv3x3(_mm(q_w, tn) + q_b, q_dw_w, q_dw_b, masks, img_w)     # (C, BHW)
    kv = _dwconv3x3(_mm(kv_w, xn) + kv_b, kv_dw_w, kv_dw_b, masks, img_w)  # (2C, BHW)
    k = kv[:C, :]
    v = kv[C:, :]

    # per-image attention (L2-norm / softmax must not mix batches); batch is
    # static and tiny so this is an unrolled loop over aligned lane slices.
    outs = []
    for b in range(batch):
        qb = q[:, b * HW:(b + 1) * HW]
        kb = k[:, b * HW:(b + 1) * HW]
        vb = v[:, b * HW:(b + 1) * HW]
        qn = _l2_normalize_rows(qb).astype(jnp.bfloat16)
        kn = _l2_normalize_rows(kb).astype(jnp.bfloat16)
        s = jax.lax.dot_general(qn, kn, (((1,), (1,)), ((), ())),
                                preferred_element_type=jnp.float32)       # (C, C)
        s = s * temp_full + head_bias           # scale, then mask cross-head
        s = s - jnp.max(s, axis=-1, keepdims=True)
        e = jnp.exp(s)
        p = e / jnp.sum(e, axis=-1, keepdims=True)                        # exact div
        outs.append(jnp.dot(p.astype(jnp.bfloat16), vb.astype(jnp.bfloat16),
                            preferred_element_type=jnp.float32))          # (C, HW)
    attn_sp = outs[0] if batch == 1 else jnp.concatenate(outs, axis=1)    # (C, BHW)

    t1 = t + _mm(proj_w, attn_sp) + proj_b      # first residual

    # ---------------- gated-GELU FFN ----------------
    fn = _layer_norm_c(t1, nf_w, nf_b)
    h2 = _dwconv3x3(_mm(pi_w, fn) + pi_b, ffn_dw_w, dwc_b, masks, img_w)  # (2Hd, BHW)
    g = _gelu_tanh(h2[:Hd, :]) * h2[Hd:, :]
    o_ref[...] = (t1 + _mm(po_w, g) + po_b).astype(o_ref.dtype)


# ----------------------------------------------------------------------------
# host-side glue
# ----------------------------------------------------------------------------
def _pack_branch(norm_t, norm_x, norm_f, attn, ffn, dim, hidden, num_heads):
    ch = dim // num_heads
    temp_full = jnp.repeat(attn["temperature"].reshape(num_heads), ch).reshape(dim, 1)
    vec = jnp.concatenate([
        norm_t["w"], norm_t["b"], norm_x["w"], norm_x["b"], norm_f["w"], norm_f["b"],
        attn["q_b"], attn["q_dw_b"], attn["kv_b"], attn["kv_dw_b"], attn["proj_b"],
        temp_full, ffn["pi_b"], ffn["dw_b"], ffn["po_b"]], axis=0).astype(jnp.float32)
    dw = jnp.concatenate([attn["q_dw_w"], attn["kv_dw_w"], ffn["dw_w"]],
                         axis=0).astype(jnp.float32)
    wm = max(dim, hidden)

    def pad(w):
        return jnp.pad(w, ((0, 0), (0, wm - w.shape[1])))

    mat = jnp.concatenate([pad(attn["q_w"]), pad(attn["kv_w"]), pad(attn["proj_w"]),
                           pad(ffn["pi_w"]), pad(ffn["po_w"])], axis=0).astype(jnp.float32)
    return vec, dw, mat


def spfi_forward(x, m, n, params, num_heads):
    B, C, H, W = x.shape
    HW = H * W
    BHW = B * HW
    hidden = params["ffn1"]["po_w"].shape[1]

    def to_cbhw(a):                              # (B,C,H,W) -> (C, B*H*W)
        return jnp.transpose(a, (1, 0, 2, 3)).reshape(C, BHW)

    xf = to_cbhw(x)
    t_stack = jnp.stack([to_cbhw(m), to_cbhw(n)], axis=0)        # (2, C, BHW)

    # per-lane image row/col indices (drives the in-kernel 3x3 border masks)
    row = jnp.tile(jnp.repeat(jnp.arange(H, dtype=jnp.int32), W), B)
    col = jnp.tile(jnp.arange(W, dtype=jnp.int32), B * H)
    rc = jnp.stack([row, col], axis=0)                           # (2, BHW)

    # additive block-diagonal head mask: 0 within a head, -1e30 across heads
    ch = C // num_heads
    hid = jnp.repeat(jnp.arange(num_heads, dtype=jnp.int32), ch)
    head_bias = jnp.where(hid[:, None] == hid[None, :], 0.0, -1e30).astype(jnp.float32)

    vec0, dw0, mat0 = _pack_branch(params["norm_m"], params["norm1"], params["norm2"],
                                   params["atten1"], params["ffn1"], C, hidden, num_heads)
    vec1, dw1, mat1 = _pack_branch(params["norm_n"], params["norm1"], params["norm3"],
                                   params["atten2"], params["ffn2"], C, hidden, num_heads)
    vec = jnp.stack([vec0, vec1], axis=0)
    dww = jnp.stack([dw0, dw1], axis=0)
    mat = jnp.stack([mat0, mat1], axis=0)
    Pv, Pd = vec.shape[1], dww.shape[1]
    Pm, Wm = mat.shape[1], mat.shape[2]

    kernel = functools.partial(_spfi_kernel, dim=C, hidden=hidden,
                               num_heads=num_heads, img_h=H, img_w=W, batch=B)

    out = pl.pallas_call(
        kernel,
        out_shape=jax.ShapeDtypeStruct((2, C, BHW), x.dtype),
        grid=(2,),
        in_specs=[
            pl.BlockSpec((None, C, BHW), lambda g: (g, 0, 0)),   # m/n stack (per branch)
            pl.BlockSpec((C, BHW), lambda g: (0, 0)),            # x (shared)
            pl.BlockSpec((2, BHW), lambda g: (0, 0)),            # row/col idx (shared)
            pl.BlockSpec((C, C), lambda g: (0, 0)),              # head bias (shared)
            pl.BlockSpec((None, Pv, 1), lambda g: (g, 0, 0)),    # column-vector slab
            pl.BlockSpec((None, Pd, 9), lambda g: (g, 0, 0)),    # depthwise weight slab
            pl.BlockSpec((None, Pm, Wm), lambda g: (g, 0, 0)),   # 1x1 weight slab
        ],
        out_specs=pl.BlockSpec((None, C, BHW), lambda g: (g, 0, 0)),
        compiler_params=pltpu.CompilerParams(dimension_semantics=("parallel",)),
    )(t_stack, xf, rc, head_bias, vec, dww, mat)

    def from_cbhw(a):                            # (C, B*H*W) -> (B,C,H,W)
        return jnp.transpose(a.reshape(C, B, H, W), (1, 0, 2, 3))

    return x, from_cbhw(out[0]), from_cbhw(out[1])


# ----------------------------------------------------------------------------
# pure-JAX reference (NCHW, torch-style ops) with the same bf16 matmul
# operand casts and tanh-GELU as the kernel — validates layout, masks, roll
# direction, head handling and packing independently of the Pallas path.
# ----------------------------------------------------------------------------
def _layer_norm_ref(x, w, b):
    mu = jnp.mean(x, axis=1, keepdims=True)
    var = jnp.mean((x - mu) ** 2, axis=1, keepdims=True)
    return ((x - mu) * jax.lax.rsqrt(var + 1e-5) * w.reshape(1, -1, 1, 1)
            + b.reshape(1, -1, 1, 1))


def _conv1x1_ref(x, w, b):
    y = jnp.einsum("oc,bchw->bohw", w.astype(jnp.bfloat16), x.astype(jnp.bfloat16),
                   preferred_element_type=jnp.float32)
    return y + b.reshape(1, -1, 1, 1)


def _dwconv_ref(x, w9, b):
    cc = x.shape[1]
    k = w9.reshape(cc, 1, 3, 3)
    y = jax.lax.conv_general_dilated(x, k, (1, 1), ((1, 1), (1, 1)),
                                     dimension_numbers=("NCHW", "OIHW", "NCHW"),
                                     feature_group_count=cc)
    return y + b.reshape(1, -1, 1, 1)


def _cross_attn_ref(x_q, x_kv, p, num_heads):
    B, C, H, W = x_q.shape
    q = _dwconv_ref(_conv1x1_ref(x_q, p["q_w"], p["q_b"]), p["q_dw_w"], p["q_dw_b"])
    kv = _dwconv_ref(_conv1x1_ref(x_kv, p["kv_w"], p["kv_b"]), p["kv_dw_w"], p["kv_dw_b"])
    k, v = kv[:, :C], kv[:, C:]

    def split(z):
        return z.reshape(B, num_heads, C // num_heads, H * W)

    q, k, v = split(q), split(k), split(v)
    q = q / jnp.maximum(jnp.sqrt(jnp.sum(q * q, axis=-1, keepdims=True)), 1e-12)
    k = k / jnp.maximum(jnp.sqrt(jnp.sum(k * k, axis=-1, keepdims=True)), 1e-12)
    a = jnp.einsum("bhcd,bhed->bhce", q.astype(jnp.bfloat16), k.astype(jnp.bfloat16),
                   preferred_element_type=jnp.float32)
    a = a * p["temperature"].reshape(1, num_heads, 1, 1)
    a = jax.nn.softmax(a, axis=-1)
    out = jnp.einsum("bhce,bhed->bhcd", a.astype(jnp.bfloat16), v.astype(jnp.bfloat16),
                     preferred_element_type=jnp.float32)
    return _conv1x1_ref(out.reshape(B, C, H, W), p["proj_w"], p["proj_b"])


def _ffn_ref(x, p):
    h = _dwconv_ref(_conv1x1_ref(x, p["pi_w"], p["pi_b"]), p["dw_w"], p["dw_b"])
    hidden = h.shape[1] // 2
    g = _gelu_tanh(h[:, :hidden]) * h[:, hidden:]
    return _conv1x1_ref(g, p["po_w"], p["po_b"])


def spfi_reference(x, m, n, params, num_heads):
    ln = _layer_norm_ref
    m1 = m + _cross_attn_ref(ln(m, params["norm_m"]["w"], params["norm_m"]["b"]),
                             ln(x, params["norm1"]["w"], params["norm1"]["b"]),
                             params["atten1"], num_heads)
    m2 = m1 + _ffn_ref(ln(m1, params["norm2"]["w"], params["norm2"]["b"]), params["ffn1"])
    n1 = n + _cross_attn_ref(ln(n, params["norm_n"]["w"], params["norm_n"]["b"]),
                             ln(x, params["norm1"]["w"], params["norm1"]["b"]),
                             params["atten2"], num_heads)
    n2 = n1 + _ffn_ref(ln(n1, params["norm3"]["w"], params["norm3"]["b"]), params["ffn2"])
    return x, m2, n2


# ----------------------------------------------------------------------------
# deterministic parameter init (shapes mirror the PyTorch __init__).
# Conversion from trained torch weights:
#   * 1x1 conv  (Cout, Cin, 1, 1) -> (Cout, Cin)
#   * depthwise (C, 1, 3, 3)      -> (C, 9)   (row-major tap order)
#   * biases    (C,)              -> (C, 1)
# ----------------------------------------------------------------------------
def init_params(key, dim, num_heads, ffn_expansion_factor):
    hidden = int(dim * ffn_expansion_factor)
    keys = iter(jax.random.split(key, 64))

    def w(shape, scale=0.1):
        return (scale * jax.random.normal(next(keys), shape)).astype(jnp.float32)

    def ln():
        return {"w": 1.0 + w((dim, 1), 0.05), "b": w((dim, 1), 0.05)}

    def attn():
        return {"temperature": 1.0 + w((num_heads,), 0.2),
                "q_w": w((dim, dim)), "q_b": w((dim, 1), 0.02),
                "q_dw_w": w((dim, 9)), "q_dw_b": w((dim, 1), 0.02),
                "kv_w": w((2 * dim, dim)), "kv_b": w((2 * dim, 1), 0.02),
                "kv_dw_w": w((2 * dim, 9)), "kv_dw_b": w((2 * dim, 1), 0.02),
                "proj_w": w((dim, dim)), "proj_b": w((dim, 1), 0.02)}

    def ffn():
        return {"pi_w": w((2 * hidden, dim)), "pi_b": w((2 * hidden, 1), 0.02),
                "dw_w": w((2 * hidden, 9)), "dw_b": w((2 * hidden, 1), 0.02),
                "po_w": w((dim, hidden)), "po_b": w((dim, 1), 0.02)}

    return {"norm_m": ln(), "norm_n": ln(),
            "norm1": ln(), "norm2": ln(), "norm3": ln(),
            "atten1": attn(), "atten2": attn(),
            "ffn1": ffn(), "ffn2": ffn()}


# ----------------------------------------------------------------------------
if __name__ == "__main__":
    B, C, H, W = 2, 8, 16, 16          # torch NCHW: (2, 8, 16, 16)
    num_heads = 2
    ffn_expansion_factor = 2.0

    key = jax.random.PRNGKey(0)
    kx, km, kn, kp = jax.random.split(key, 4)
    x = jax.random.normal(kx, (B, C, H, W), jnp.float32)
    m = jax.random.normal(km, (B, C, H, W), jnp.float32)
    n = jax.random.normal(kn, (B, C, H, W), jnp.float32)
    params = init_params(kp, C, num_heads, ffn_expansion_factor)

    fwd = jax.jit(functools.partial(spfi_forward, num_heads=num_heads))
    xo, mo, no = fwd(x, m, n, params)
    jax.block_until_ready((xo, mo, no))

    ref = jax.jit(functools.partial(spfi_reference, num_heads=num_heads))
    xr, mr, nr = ref(x, m, n, params)
    jax.block_until_ready((xr, mr, nr))

    assert xo.shape == (B, C, H, W)
    assert mo.shape == (B, C, H, W)
    assert no.shape == (B, C, H, W)
    assert bool(jnp.all(jnp.isfinite(mo))) and bool(jnp.all(jnp.isfinite(no)))
    err = max(float(jnp.max(jnp.abs(mo - mr))), float(jnp.max(jnp.abs(no - nr))))
    assert err < 2e-2, f"kernel/reference mismatch: max abs err = {err}"
    print("KERNEL_OK")
</pallas_src>

<mosaic_0001>
module attributes {stable_mosaic.version = 11 : i64} {
  func.func @_spfi_kernel(%arg0: i32, %arg1: memref<1x8x512xf32, #tpu.memory_space<vmem>>, %arg2: memref<8x512xf32, #tpu.memory_space<vmem>>, %arg3: memref<2x512xi32, #tpu.memory_space<vmem>>, %arg4: memref<8x8xf32, #tpu.memory_space<vmem>>, %arg5: memref<1x184x1xf32, #tpu.memory_space<vmem>>, %arg6: memref<1x56x9xf32, #tpu.memory_space<vmem>>, %arg7: memref<1x72x16xf32, #tpu.memory_space<vmem>>, %arg8: memref<1x8x512xf32, #tpu.memory_space<vmem>>) attributes {dimension_semantics = [#tpu.dimension_semantics<parallel>], iteration_bounds = array<i64: 2>, scalar_prefetch = 0 : i64, scratch_operands = 0 : i64, tpu.core_type = #tpu.core_type<tc>, window_params = [{transform_indices = @transform_0, window_bounds = array<i64: 1, 8, 512>}, {pipeline_mode = #tpu.pipeline_mode<synchronous>, transform_indices = @transform_1, window_bounds = array<i64: 8, 512>}, {pipeline_mode = #tpu.pipeline_mode<synchronous>, transform_indices = @transform_2, window_bounds = array<i64: 2, 512>}, {pipeline_mode = #tpu.pipeline_mode<synchronous>, transform_indices = @transform_3, window_bounds = array<i64: 8, 8>}, {transform_indices = @transform_4, window_bounds = array<i64: 1, 184, 1>}, {transform_indices = @transform_5, window_bounds = array<i64: 1, 56, 9>}, {transform_indices = @transform_6, window_bounds = array<i64: 1, 72, 16>}, {transform_indices = @transform_7, window_bounds = array<i64: 1, 8, 512>}]} {
    %c0 = arith.constant 0 : index
    %c0_0 = arith.constant 0 : index
    %c0_1 = arith.constant 0 : index
    %0 = vector.load %arg1[%c0, %c0_0, %c0_1] : memref<1x8x512xf32, #tpu.memory_space<vmem>>, vector<1x8x512xf32>
    %1 = vector.shape_cast %0 : vector<1x8x512xf32> to vector<8x512xf32>
    %c0_2 = arith.constant 0 : index
    %c0_3 = arith.constant 0 : index
    %2 = vector.load %arg2[%c0_2, %c0_3] : memref<8x512xf32, #tpu.memory_space<vmem>>, vector<8x512xf32>
    %c0_4 = arith.constant 0 : index
    %c0_5 = arith.constant 0 : index
    %c0_6 = arith.constant 0 : index
    %3 = vector.load %arg5[%c0_4, %c0_5, %c0_6] : memref<1x184x1xf32, #tpu.memory_space<vmem>>, vector<1x184x1xf32>
    %4 = vector.shape_cast %3 : vector<1x184x1xf32> to vector<184x1xf32>
    %c0_7 = arith.constant 0 : index
    %c0_8 = arith.constant 0 : index
    %c0_9 = arith.constant 0 : index
    %5 = vector.load %arg6[%c0_7, %c0_8, %c0_9] : memref<1x56x9xf32, #tpu.memory_space<vmem>>, vector<1x56x9xf32>
    %6 = vector.shape_cast %5 : vector<1x56x9xf32> to vector<56x9xf32>
    %c0_10 = arith.constant 0 : index
    %c0_11 = arith.constant 0 : index
    %c0_12 = arith.constant 0 : index
    %7 = vector.load %arg7[%c0_10, %c0_11, %c0_12] : memref<1x72x16xf32, #tpu.memory_space<vmem>>, vector<1x72x16xf32>
    %8 = vector.shape_cast %7 : vector<1x72x16xf32> to vector<72x16xf32>
    %c0_13 = arith.constant 0 : index
    %c0_14 = arith.constant 0 : index
    %9 = vector.load %arg4[%c0_13, %c0_14] : memref<8x8xf32, #tpu.memory_space<vmem>>, vector<8x8xf32>
    %10 = vector.extract_strided_slice %4 {offsets = [0, 0], sizes = [8, 1], strides = [1, 1]} : vector<184x1xf32> to vector<8x1xf32>
    %11 = vector.extract_strided_slice %4 {offsets = [8, 0], sizes = [8, 1], strides = [1, 1]} : vector<184x1xf32> to vector<8x1xf32>
    %12 = vector.extract_strided_slice %4 {offsets = [16, 0], sizes = [8, 1], strides = [1, 1]} : vector<184x1xf32> to vector<8x1xf32>
    %13 = vector.extract_strided_slice %4 {offsets = [24, 0], sizes = [8, 1], strides = [1, 1]} : vector<184x1xf32> to vector<8x1xf32>
    %14 = vector.extract_strided_slice %4 {offsets = [32, 0], sizes = [8, 1], strides = [1, 1]} : vector<184x1xf32> to vector<8x1xf32>
    %15 = vector.extract_strided_slice %4 {offsets = [40, 0], sizes = [8, 1], strides = [1, 1]} : vector<184x1xf32> to vector<8x1xf32>
    %16 = vector.extract_strided_slice %4 {offsets = [48, 0], sizes = [8, 1], strides = [1, 1]} : vector<184x1xf32> to vector<8x1xf32>
    %17 = vector.extract_strided_slice %4 {offsets = [56, 0], sizes = [8, 1], strides = [1, 1]} : vector<184x1xf32> to vector<8x1xf32>
    %18 = vector.extract_strided_slice %4 {offsets = [64, 0], sizes = [16, 1], strides = [1, 1]} : vector<184x1xf32> to vector<16x1xf32>
    %19 = vector.extract_strided_slice %4 {offsets = [80, 0], sizes = [16, 1], strides = [1, 1]} : vector<184x1xf32> to vector<16x1xf32>
    %20 = vector.extract_strided_slice %4 {offsets = [96, 0], sizes = [8, 1], strides = [1, 1]} : vector<184x1xf32> to vector<8x1xf32>
    %21 = vector.extract_strided_slice %4 {offsets = [104, 0], sizes = [8, 1], strides = [1, 1]} : vector<184x1xf32> to vector<8x1xf32>
    %22 = vector.extract_strided_slice %4 {offsets = [112, 0], sizes = [32, 1], strides = [1, 1]} : vector<184x1xf32> to vector<32x1xf32>
    %23 = vector.extract_strided_slice %4 {offsets = [144, 0], sizes = [32, 1], strides = [1, 1]} : vector<184x1xf32> to vector<32x1xf32>
    %24 = vector.extract_strided_slice %4 {offsets = [176, 0], sizes = [8, 1], strides = [1, 1]} : vector<184x1xf32> to vector<8x1xf32>
    %25 = vector.extract_strided_slice %6 {offsets = [0, 0], sizes = [8, 9], strides = [1, 1]} : vector<56x9xf32> to vector<8x9xf32>
    %26 = vector.extract_strided_slice %6 {offsets = [8, 0], sizes = [16, 9], strides = [1, 1]} : vector<56x9xf32> to vector<16x9xf32>
    %27 = vector.extract_strided_slice %6 {offsets = [24, 0], sizes = [32, 9], strides = [1, 1]} : vector<56x9xf32> to vector<32x9xf32>
    %28 = vector.extract_strided_slice %8 {offsets = [0, 0], sizes = [8, 8], strides = [1, 1]} : vector<72x16xf32> to vector<8x8xf32>
    %29 = vector.extract_strided_slice %8 {offsets = [8, 0], sizes = [16, 8], strides = [1, 1]} : vector<72x16xf32> to vector<16x8xf32>
    %30 = vector.extract_strided_slice %8 {offsets = [24, 0], sizes = [8, 8], strides = [1, 1]} : vector<72x16xf32> to vector<8x8xf32>
    %31 = vector.extract_strided_slice %8 {offsets = [32, 0], sizes = [32, 8], strides = [1, 1]} : vector<72x16xf32> to vector<32x8xf32>
    %32 = vector.extract_strided_slice %8 {offsets = [64, 0], sizes = [8, 16], strides = [1, 1]} : vector<72x16xf32> to vector<8x16xf32>
    %c0_15 = arith.constant 0 : index
    %c0_16 = arith.constant 0 : index
    %33 = vector.load %arg3[%c0_15, %c0_16] : memref<2x512xi32, #tpu.memory_space<vmem>>, vector<2x512xi32>
    %34 = vector.extract_strided_slice %33 {offsets = [0, 0], sizes = [1, 512], strides = [1, 1]} : vector<2x512xi32> to vector<1x512xi32>
    %35 = vector.extract_strided_slice %33 {offsets = [1, 0], sizes = [1, 512], strides = [1, 1]} : vector<2x512xi32> to vector<1x512xi32>
    %c-1_i32 = arith.constant -1 : i32
    %36 = vector.broadcast %c-1_i32 : i32 to vector<1x512xi32>
    %37 = arith.addi %34, %36 : vector<1x512xi32>
    %c0_i32 = arith.constant 0 : i32
    %38 = vector.broadcast %c0_i32 : i32 to vector<1x512xi32>
    %39 = arith.cmpi sge, %37, %38 : vector<1x512xi32>
    %c-1_i32_17 = arith.constant -1 : i32
    %40 = vector.broadcast %c-1_i32_17 : i32 to vector<1x512xi32>
    %41 = arith.addi %34, %40 : vector<1x512xi32>
    %c16_i32 = arith.constant 16 : i32
    %42 = vector.broadcast %c16_i32 : i32 to vector<1x512xi32>
    %43 = arith.cmpi slt, %41, %42 : vector<1x512xi32>
    %44 = arith.andi %39, %43 : vector<1x512xi1>
    %c-1_i32_18 = arith.constant -1 : i32
    %45 = vector.broadcast %c-1_i32_18 : i32 to vector<1x512xi32>
    %46 = arith.addi %35, %45 : vector<1x512xi32>
    %c0_i32_19 = arith.constant 0 : i32
    %47 = vector.broadcast %c0_i32_19 : i32 to vector<1x512xi32>
    %48 = arith.cmpi sge, %46, %47 : vector<1x512xi32>
    %49 = arith.andi %44, %48 : vector<1x512xi1>
    %c-1_i32_20 = arith.constant -1 : i32
    %50 = vector.broadcast %c-1_i32_20 : i32 to vector<1x512xi32>
    %51 = arith.addi %35, %50 : vector<1x512xi32>
    %c16_i32_21 = arith.constant 16 : i32
    %52 = vector.broadcast %c16_i32_21 : i32 to vector<1x512xi32>
    %53 = arith.cmpi slt, %51, %52 : vector<1x512xi32>
    %54 = arith.andi %49, %53 : vector<1x512xi1>
    %55 = arith.extui %54 : vector<1x512xi1> to vector<1x512xi32>
    %56 = arith.sitofp %55 : vector<1x512xi32> to vector<1x512xf32>
    %c-1_i32_22 = arith.constant -1 : i32
    %57 = vector.broadcast %c-1_i32_22 : i32 to vector<1x512xi32>
    %58 = arith.addi %34, %57 : vector<1x512xi32>
    %c0_i32_23 = arith.constant 0 : i32
    %59 = vector.broadcast %c0_i32_23 : i32 to vector<1x512xi32>
    %60 = arith.cmpi sge, %58, %59 : vector<1x512xi32>
    %c-1_i32_24 = arith.constant -1 : i32
    %61 = vector.broadcast %c-1_i32_24 : i32 to vector<1x512xi32>
    %62 = arith.addi %34, %61 : vector<1x512xi32>
    %c16_i32_25 = arith.constant 16 : i32
    %63 = vector.broadcast %c16_i32_25 : i32 to vector<1x512xi32>
    %64 = arith.cmpi slt, %62, %63 : vector<1x512xi32>
    %65 = arith.andi %60, %64 : vector<1x512xi1>
    %c0_i32_26 = arith.constant 0 : i32
    %66 = vector.broadcast %c0_i32_26 : i32 to vector<1x512xi32>
    %67 = arith.addi %35, %66 : vector<1x512xi32>
    %c0_i32_27 = arith.constant 0 : i32
    %68 = vector.broadcast %c0_i32_27 : i32 to vector<1x512xi32>
    %69 = arith.cmpi sge, %67, %68 : vector<1x512xi32>
    %70 = arith.andi %65, %69 : vector<1x512xi1>
    %c0_i32_28 = arith.constant 0 : i32
    %71 = vector.broadcast %c0_i32_28 : i32 to vector<1x512xi32>
    %72 = arith.addi %35, %71 : vector<1x512xi32>
    %c16_i32_29 = arith.constant 16 : i32
    %73 = vector.broadcast %c16_i32_29 : i32 to vector<1x512xi32>
    %74 = arith.cmpi slt, %72, %73 : vector<1x512xi32>
    %75 = arith.andi %70, %74 : vector<1x512xi1>
    %76 = arith.extui %75 : vector<1x512xi1> to vector<1x512xi32>
    %77 = arith.sitofp %76 : vector<1x512xi32> to vector<1x512xf32>
    %c-1_i32_30 = arith.constant -1 : i32
    %78 = vector.broadcast %c-1_i32_30 : i32 to vector<1x512xi32>
    %79 = arith.addi %34, %78 : vector<1x512xi32>
    %c0_i32_31 = arith.constant 0 : i32
    %80 = vector.broadcast %c0_i32_31 : i32 to vector<1x512xi32>
    %81 = arith.cmpi sge, %79, %80 : vector<1x512xi32>
    %c-1_i32_32 = arith.constant -1 : i32
    %82 = vector.broadcast %c-1_i32_32 : i32 to vector<1x512xi32>
    %83 = arith.addi %34, %82 : vector<1x512xi32>
    %c16_i32_33 = arith.constant 16 : i32
    %84 = vector.broadcast %c16_i32_33 : i32 to vector<1x512xi32>
    %85 = arith.cmpi slt, %83, %84 : vector<1x512xi32>
    %86 = arith.andi %81, %85 : vector<1x512xi1>
    %c1_i32 = arith.constant 1 : i32
    %87 = vector.broadcast %c1_i32 : i32 to vector<1x512xi32>
    %88 = arith.addi %35, %87 : vector<1x512xi32>
    %c0_i32_34 = arith.constant 0 : i32
    %89 = vector.broadcast %c0_i32_34 : i32 to vector<1x512xi32>
    %90 = arith.cmpi sge, %88, %89 : vector<1x512xi32>
    %91 = arith.andi %86, %90 : vector<1x512xi1>
    %c1_i32_35 = arith.constant 1 : i32
    %92 = vector.broadcast %c1_i32_35 : i32 to vector<1x512xi32>
    %93 = arith.addi %35, %92 : vector<1x512xi32>
    %c16_i32_36 = arith.constant 16 : i32
    %94 = vector.broadcast %c16_i32_36 : i32 to vector<1x512xi32>
    %95 = arith.cmpi slt, %93, %94 : vector<1x512xi32>
    %96 = arith.andi %91, %95 : vector<1x512xi1>
    %97 = arith.extui %96 : vector<1x512xi1> to vector<1x512xi32>
    %98 = arith.sitofp %97 : vector<1x512xi32> to vector<1x512xf32>
    %c0_i32_37 = arith.constant 0 : i32
    %99 = vector.broadcast %c0_i32_37 : i32 to vector<1x512xi32>
    %100 = arith.addi %34, %99 : vector<1x512xi32>
    %c0_i32_38 = arith.constant 0 : i32
    %101 = vector.broadcast %c0_i32_38 : i32 to vector<1x512xi32>
    %102 = arith.cmpi sge, %100, %101 : vector<1x512xi32>
    %c0_i32_39 = arith.constant 0 : i32
    %103 = vector.broadcast %c0_i32_39 : i32 to vector<1x512xi32>
    %104 = arith.addi %34, %103 : vector<1x512xi32>
    %c16_i32_40 = arith.constant 16 : i32
    %105 = vector.broadcast %c16_i32_40 : i32 to vector<1x512xi32>
    %106 = arith.cmpi slt, %104, %105 : vector<1x512xi32>
    %107 = arith.andi %102, %106 : vector<1x512xi1>
    %c-1_i32_41 = arith.constant -1 : i32
    %108 = vector.broadcast %c-1_i32_41 : i32 to vector<1x512xi32>
    %109 = arith.addi %35, %108 : vector<1x512xi32>
    %c0_i32_42 = arith.constant 0 : i32
    %110 = vector.broadcast %c0_i32_42 : i32 to vector<1x512xi32>
    %111 = arith.cmpi sge, %109, %110 : vector<1x512xi32>
    %112 = arith.andi %107, %111 : vector<1x512xi1>
    %c-1_i32_43 = arith.constant -1 : i32
    %113 = vector.broadcast %c-1_i32_43 : i32 to vector<1x512xi32>
    %114 = arith.addi %35, %113 : vector<1x512xi32>
    %c16_i32_44 = arith.constant 16 : i32
    %115 = vector.broadcast %c16_i32_44 : i32 to vector<1x512xi32>
    %116 = arith.cmpi slt, %114, %115 : vector<1x512xi32>
    %117 = arith.andi %112, %116 : vector<1x512xi1>
    %118 = arith.extui %117 : vector<1x512xi1> to vector<1x512xi32>
    %119 = arith.sitofp %118 : vector<1x512xi32> to vector<1x512xf32>
    %c0_i32_45 = arith.constant 0 : i32
    %120 = vector.broadcast %c0_i32_45 : i32 to vector<1x512xi32>
    %121 = arith.addi %34, %120 : vector<1x512xi32>
    %c0_i32_46 = arith.constant 0 : i32
    %122 = vector.broadcast %c0_i32_46 : i32 to vector<1x512xi32>
    %123 = arith.cmpi sge, %121, %122 : vector<1x512xi32>
    %c0_i32_47 = arith.constant 0 : i32
    %124 = vector.broadcast %c0_i32_47 : i32 to vector<1x512xi32>
    %125 = arith.addi %34, %124 : vector<1x512xi32>
    %c16_i32_48 = arith.constant 16 : i32
    %126 = vector.broadcast %c16_i32_48 : i32 to vector<1x512xi32>
    %127 = arith.cmpi slt, %125, %126 : vector<1x512xi32>
    %128 = arith.andi %123, %127 : vector<1x512xi1>
    %c1_i32_49 = arith.constant 1 : i32
    %129 = vector.broadcast %c1_i32_49 : i32 to vector<1x512xi32>
    %130 = arith.addi %35, %129 : vector<1x512xi32>
    %c0_i32_50 = arith.constant 0 : i32
    %131 = vector.broadcast %c0_i32_50 : i32 to vector<1x512xi32>
    %132 = arith.cmpi sge, %130, %131 : vector<1x512xi32>
    %133 = arith.andi %128, %132 : vector<1x512xi1>
    %c1_i32_51 = arith.constant 1 : i32
    %134 = vector.broadcast %c1_i32_51 : i32 to vector<1x512xi32>
    %135 = arith.addi %35, %134 : vector<1x512xi32>
    %c16_i32_52 = arith.constant 16 : i32
    %136 = vector.broadcast %c16_i32_52 : i32 to vector<1x512xi32>
    %137 = arith.cmpi slt, %135, %136 : vector<1x512xi32>
    %138 = arith.andi %133, %137 : vector<1x512xi1>
    %139 = arith.extui %138 : vector<1x512xi1> to vector<1x512xi32>
    %140 = arith.sitofp %139 : vector<1x512xi32> to vector<1x512xf32>
    %c1_i32_53 = arith.constant 1 : i32
    %141 = vector.broadcast %c1_i32_53 : i32 to vector<1x512xi32>
    %142 = arith.addi %34, %141 : vector<1x512xi32>
    %c0_i32_54 = arith.constant 0 : i32
    %143 = vector.broadcast %c0_i32_54 : i32 to vector<1x512xi32>
    %144 = arith.cmpi sge, %142, %143 : vector<1x512xi32>
    %c1_i32_55 = arith.constant 1 : i32
    %145 = vector.broadcast %c1_i32_55 : i32 to vector<1x512xi32>
    %146 = arith.addi %34, %145 : vector<1x512xi32>
    %c16_i32_56 = arith.constant 16 : i32
    %147 = vector.broadcast %c16_i32_56 : i32 to vector<1x512xi32>
    %148 = arith.cmpi slt, %146, %147 : vector<1x512xi32>
    %149 = arith.andi %144, %148 : vector<1x512xi1>
    %c-1_i32_57 = arith.constant -1 : i32
    %150 = vector.broadcast %c-1_i32_57 : i32 to vector<1x512xi32>
    %151 = arith.addi %35, %150 : vector<1x512xi32>
    %c0_i32_58 = arith.constant 0 : i32
    %152 = vector.broadcast %c0_i32_58 : i32 to vector<1x512xi32>
    %153 = arith.cmpi sge, %151, %152 : vector<1x512xi32>
    %154 = arith.andi %149, %153 : vector<1x512xi1>
    %c-1_i32_59 = arith.constant -1 : i32
    %155 = vector.broadcast %c-1_i32_59 : i32 to vector<1x512xi32>
    %156 = arith.addi %35, %155 : vector<1x512xi32>
    %c16_i32_60 = arith.constant 16 : i32
    %157 = vector.broadcast %c16_i32_60 : i32 to vector<1x512xi32>
    %158 = arith.cmpi slt, %156, %157 : vector<1x512xi32>
    %159 = arith.andi %154, %158 : vector<1x512xi1>
    %160 = arith.extui %159 : vector<1x512xi1> to vector<1x512xi32>
    %161 = arith.sitofp %160 : vector<1x512xi32> to vector<1x512xf32>
    %c1_i32_61 = arith.constant 1 : i32
    %162 = vector.broadcast %c1_i32_61 : i32 to vector<1x512xi32>
    %163 = arith.addi %34, %162 : vector<1x512xi32>
    %c0_i32_62 = arith.constant 0 : i32
    %164 = vector.broadcast %c0_i32_62 : i32 to vector<1x512xi32>
    %165 = arith.cmpi sge, %163, %164 : vector<1x512xi32>
    %c1_i32_63 = arith.constant 1 : i32
    %166 = vector.broadcast %c1_i32_63 : i32 to vector<1x512xi32>
    %167 = arith.addi %34, %166 : vector<1x512xi32>
    %c16_i32_64 = arith.constant 16 : i32
    %168 = vector.broadcast %c16_i32_64 : i32 to vector<1x512xi32>
    %169 = arith.cmpi slt, %167, %168 : vector<1x512xi32>
    %170 = arith.andi %165, %169 : vector<1x512xi1>
    %c0_i32_65 = arith.constant 0 : i32
    %171 = vector.broadcast %c0_i32_65 : i32 to vector<1x512xi32>
    %172 = arith.addi %35, %171 : vector<1x512xi32>
    %c0_i32_66 = arith.constant 0 : i32
    %173 = vector.broadcast %c0_i32_66 : i32 to vector<1x512xi32>
    %174 = arith.cmpi sge, %172, %173 : vector<1x512xi32>
    %175 = arith.andi %170, %174 : vector<1x512xi1>
    %c0_i32_67 = arith.constant 0 : i32
    %176 = vector.broadcast %c0_i32_67 : i32 to vector<1x512xi32>
    %177 = arith.addi %35, %176 : vector<1x512xi32>
    %c16_i32_68 = arith.constant 16 : i32
    %178 = vector.broadcast %c16_i32_68 : i32 to vector<1x512xi32>
    %179 = arith.cmpi slt, %177, %178 : vector<1x512xi32>
    %180 = arith.andi %175, %179 : vector<1x512xi1>
    %181 = arith.extui %180 : vector<1x512xi1> to vector<1x512xi32>
    %182 = arith.sitofp %181 : vector<1x512xi32> to vector<1x512xf32>
    %c1_i32_69 = arith.constant 1 : i32
    %183 = vector.broadcast %c1_i32_69 : i32 to vector<1x512xi32>
    %184 = arith.addi %34, %183 : vector<1x512xi32>
    %c0_i32_70 = arith.constant 0 : i32
    %185 = vector.broadcast %c0_i32_70 : i32 to vector<1x512xi32>
    %186 = arith.cmpi sge, %184, %185 : vector<1x512xi32>
    %c1_i32_71 = arith.constant 1 : i32
    %187 = vector.broadcast %c1_i32_71 : i32 to vector<1x512xi32>
    %188 = arith.addi %34, %187 : vector<1x512xi32>
    %c16_i32_72 = arith.constant 16 : i32
    %189 = vector.broadcast %c16_i32_72 : i32 to vector<1x512xi32>
    %190 = arith.cmpi slt, %188, %189 : vector<1x512xi32>
    %191 = arith.andi %186, %190 : vector<1x512xi1>
    %c1_i32_73 = arith.constant 1 : i32
    %192 = vector.broadcast %c1_i32_73 : i32 to vector<1x512xi32>
    %193 = arith.addi %35, %192 : vector<1x512xi32>
    %c0_i32_74 = arith.constant 0 : i32
    %194 = vector.broadcast %c0_i32_74 : i32 to vector<1x512xi32>
    %195 = arith.cmpi sge, %193, %194 : vector<1x512xi32>
    %196 = arith.andi %191, %195 : vector<1x512xi1>
    %c1_i32_75 = arith.constant 1 : i32
    %197 = vector.broadcast %c1_i32_75 : i32 to vector<1x512xi32>
    %198 = arith.addi %35, %197 : vector<1x512xi32>
    %c16_i32_76 = arith.constant 16 : i32
    %199 = vector.broadcast %c16_i32_76 : i32 to vector<1x512xi32>
    %200 = arith.cmpi slt, %198, %199 : vector<1x512xi32>
    %201 = arith.andi %196, %200 : vector<1x512xi1>
    %202 = arith.extui %201 : vector<1x512xi1> to vector<1x512xi32>
    %203 = arith.sitofp %202 : vector<1x512xi32> to vector<1x512xf32>
    %cst = arith.constant dense<0.000000e+00> : vector<512xf32>
    %204 = vector.multi_reduction <add>, %1, %cst [0] : vector<8x512xf32> to vector<512xf32>
    %205 = vector.shape_cast %204 : vector<512xf32> to vector<1x512xf32>
    %cst_77 = arith.constant 8.000000e+00 : f32
    %206 = vector.broadcast %cst_77 : f32 to vector<1x512xf32>
    %207 = arith.divf %205, %206 : vector<1x512xf32>
    %208 = vector.broadcast %207 : vector<1x512xf32> to vector<8x512xf32>
    %209 = arith.subf %1, %208 : vector<8x512xf32>
    %210 = arith.mulf %209, %209 : vector<8x512xf32>
    %cst_78 = arith.constant dense<0.000000e+00> : vector<512xf32>
    %211 = vector.multi_reduction <add>, %210, %cst_78 [0] : vector<8x512xf32> to vector<512xf32>
    %212 = vector.shape_cast %211 : vector<512xf32> to vector<1x512xf32>
    %cst_79 = arith.constant 8.000000e+00 : f32
    %213 = vector.broadcast %cst_79 : f32 to vector<1x512xf32>
    %214 = arith.divf %212, %213 : vector<1x512xf32>
    %cst_80 = arith.constant 9.99999974E-6 : f32
    %215 = vector.broadcast %cst_80 : f32 to vector<1x512xf32>
    %216 = arith.addf %214, %215 : vector<1x512xf32>
    %217 = math.rsqrt %216 : vector<1x512xf32>
    %218 = vector.broadcast %217 : vector<1x512xf32> to vector<8x512xf32>
    %219 = arith.mulf %209, %218 : vector<8x512xf32>
    %220 = vector.broadcast %10 : vector<8x1xf32> to vector<8x512xf32>
    %221 = arith.mulf %219, %220 : vector<8x512xf32>
    %222 = vector.broadcast %11 : vector<8x1xf32> to vector<8x512xf32>
    %223 = arith.addf %221, %222 : vector<8x512xf32>
    %cst_81 = arith.constant dense<0.000000e+00> : vector<512xf32>
    %224 = vector.multi_reduction <add>, %2, %cst_81 [0] : vector<8x512xf32> to vector<512xf32>
    %225 = vector.shape_cast %224 : vector<512xf32> to vector<1x512xf32>
    %cst_82 = arith.constant 8.000000e+00 : f32
    %226 = vector.broadcast %cst_82 : f32 to vector<1x512xf32>
    %227 = arith.divf %225, %226 : vector<1x512xf32>
    %228 = vector.broadcast %227 : vector<1x512xf32> to vector<8x512xf32>
    %229 = arith.subf %2, %228 : vector<8x512xf32>
    %230 = arith.mulf %229, %229 : vector<8x512xf32>
    %cst_83 = arith.constant dense<0.000000e+00> : vector<512xf32>
    %231 = vector.multi_reduction <add>, %230, %cst_83 [0] : vector<8x512xf32> to vector<512xf32>
    %232 = vector.shape_cast %231 : vector<512xf32> to vector<1x512xf32>
    %cst_84 = arith.constant 8.000000e+00 : f32
    %233 = vector.broadcast %cst_84 : f32 to vector<1x512xf32>
    %234 = arith.divf %232, %233 : vector<1x512xf32>
    %cst_85 = arith.constant 9.99999974E-6 : f32
    %235 = vector.broadcast %cst_85 : f32 to vector<1x512xf32>
    %236 = arith.addf %234, %235 : vector<1x512xf32>
    %237 = math.rsqrt %236 : vector<1x512xf32>
    %238 = vector.broadcast %237 : vector<1x512xf32> to vector<8x512xf32>
    %239 = arith.mulf %229, %238 : vector<8x512xf32>
    %240 = vector.broadcast %12 : vector<8x1xf32> to vector<8x512xf32>
    %241 = arith.mulf %239, %240 : vector<8x512xf32>
    %242 = vector.broadcast %13 : vector<8x1xf32> to vector<8x512xf32>
    %243 = arith.addf %241, %242 : vector<8x512xf32>
    %244 = arith.truncf %28 : vector<8x8xf32> to vector<8x8xbf16>
    %245 = arith.truncf %223 : vector<8x512xf32> to vector<8x512xbf16>
    %cst_86 = arith.constant dense<0.000000e+00> : vector<8x512xf32>
    %246 = tpu.matmul %244, %245, %cst_86 {dimension_numbers = #tpu.dot_dimension_numbers<[1], [0], [0], [1], [0, 0, 1, 1], [], []>} : vector<8x8xbf16>, vector<8x512xbf16>, vector<8x512xf32> -> vector<8x512xf32>
    %247 = vector.broadcast %16 : vector<8x1xf32> to vector<8x512xf32>
    %248 = arith.addf %246, %247 : vector<8x512xf32>
    %249 = vector.extract_strided_slice %25 {offsets = [0, 4], sizes = [8, 1], strides = [1, 1]} : vector<8x9xf32> to vector<8x1xf32>
    %250 = vector.broadcast %249 : vector<8x1xf32> to vector<8x512xf32>
    %251 = arith.mulf %248, %250 : vector<8x512xf32>
    %c17_i32 = arith.constant 17 : i32
    %252 = tpu.dynamic_rotate %248 by %c17_i32 dim 1 : vector<8x512xf32>, i32 -> vector<8x512xf32>
    %253 = vector.broadcast %56 : vector<1x512xf32> to vector<8x512xf32>
    %254 = arith.mulf %252, %253 : vector<8x512xf32>
    %255 = vector.extract_strided_slice %25 {offsets = [0, 0], sizes = [8, 1], strides = [1, 1]} : vector<8x9xf32> to vector<8x1xf32>
    %256 = vector.broadcast %255 : vector<8x1xf32> to vector<8x512xf32>
    %257 = arith.mulf %254, %256 : vector<8x512xf32>
    %258 = arith.addf %251, %257 : vector<8x512xf32>
    %c16_i32_87 = arith.constant 16 : i32
    %259 = tpu.dynamic_rotate %248 by %c16_i32_87 dim 1 : vector<8x512xf32>, i32 -> vector<8x512xf32>
    %260 = vector.broadcast %77 : vector<1x512xf32> to vector<8x512xf32>
    %261 = arith.mulf %259, %260 : vector<8x512xf32>
    %262 = vector.extract_strided_slice %25 {offsets = [0, 1], sizes = [8, 1], strides = [1, 1]} : vector<8x9xf32> to vector<8x1xf32>
    %263 = vector.broadcast %262 : vector<8x1xf32> to vector<8x512xf32>
    %264 = arith.mulf %261, %263 : vector<8x512xf32>
    %265 = arith.addf %258, %264 : vector<8x512xf32>
    %c15_i32 = arith.constant 15 : i32
    %266 = tpu.dynamic_rotate %248 by %c15_i32 dim 1 : vector<8x512xf32>, i32 -> vector<8x512xf32>
    %267 = vector.broadcast %98 : vector<1x512xf32> to vector<8x512xf32>
    %268 = arith.mulf %266, %267 : vector<8x512xf32>
    %269 = vector.extract_strided_slice %25 {offsets = [0, 2], sizes = [8, 1], strides = [1, 1]} : vector<8x9xf32> to vector<8x1xf32>
    %270 = vector.broadcast %269 : vector<8x1xf32> to vector<8x512xf32>
    %271 = arith.mulf %268, %270 : vector<8x512xf32>
    %272 = arith.addf %265, %271 : vector<8x512xf32>
    %c1_i32_88 = arith.constant 1 : i32
    %273 = tpu.dynamic_rotate %248 by %c1_i32_88 dim 1 : vector<8x512xf32>, i32 -> vector<8x512xf32>
    %274 = vector.broadcast %119 : vector<1x512xf32> to vector<8x512xf32>
    %275 = arith.mulf %273, %274 : vector<8x512xf32>
    %276 = vector.extract_strided_slice %25 {offsets = [0, 3], sizes = [8, 1], strides = [1, 1]} : vector<8x9xf32> to vector<8x1xf32>
    %277 = vector.broadcast %276 : vector<8x1xf32> to vector<8x512xf32>
    %278 = arith.mulf %275, %277 : vector<8x512xf32>
    %279 = arith.addf %272, %278 : vector<8x512xf32>
    %c511_i32 = arith.constant 511 : i32
    %280 = tpu.dynamic_rotate %248 by %c511_i32 dim 1 : vector<8x512xf32>, i32 -> vector<8x512xf32>
    %281 = vector.broadcast %140 : vector<1x512xf32> to vector<8x512xf32>
    %282 = arith.mulf %280, %281 : vector<8x512xf32>
    %283 = vector.extract_strided_slice %25 {offsets = [0, 5], sizes = [8, 1], strides = [1, 1]} : vector<8x9xf32> to vector<8x1xf32>
    %284 = vector.broadcast %283 : vector<8x1xf32> to vector<8x512xf32>
    %285 = arith.mulf %282, %284 : vector<8x512xf32>
    %286 = arith.addf %279, %285 : vector<8x512xf32>
    %c497_i32 = arith.constant 497 : i32
    %287 = tpu.dynamic_rotate %248 by %c497_i32 dim 1 : vector<8x512xf32>, i32 -> vector<8x512xf32>
    %288 = vector.broadcast %161 : vector<1x512xf32> to vector<8x512xf32>
    %289 = arith.mulf %287, %288 : vector<8x512xf32>
    %290 = vector.extract_strided_slice %25 {offsets = [0, 6], sizes = [8, 1], strides = [1, 1]} : vector<8x9xf32> to vector<8x1xf32>
    %291 = vector.broadcast %290 : vector<8x1xf32> to vector<8x512xf32>
    %292 = arith.mulf %289, %291 : vector<8x512xf32>
    %293 = arith.addf %286, %292 : vector<8x512xf32>
    %c496_i32 = arith.constant 496 : i32
    %294 = tpu.dynamic_rotate %248 by %c496_i32 dim 1 : vector<8x512xf32>, i32 -> vector<8x512xf32>
    %295 = vector.broadcast %182 : vector<1x512xf32> to vector<8x512xf32>
    %296 = arith.mulf %294, %295 : vector<8x512xf32>
    %297 = vector.extract_strided_slice %25 {offsets = [0, 7], sizes = [8, 1], strides = [1, 1]} : vector<8x9xf32> to vector<8x1xf32>
    %298 = vector.broadcast %297 : vector<8x1xf32> to vector<8x512xf32>
    %299 = arith.mulf %296, %298 : vector<8x512xf32>
    %300 = arith.addf %293, %299 : vector<8x512xf32>
    %c495_i32 = arith.constant 495 : i32
    %301 = tpu.dynamic_rotate %248 by %c495_i32 dim 1 : vector<8x512xf32>, i32 -> vector<8x512xf32>
    %302 = vector.broadcast %203 : vector<1x512xf32> to vector<8x512xf32>
    %303 = arith.mulf %301, %302 : vector<8x512xf32>
    %304 = vector.extract_strided_slice %25 {offsets = [0, 8], sizes = [8, 1], strides = [1, 1]} : vector<8x9xf32> to vector<8x1xf32>
    %305 = vector.broadcast %304 : vector<8x1xf32> to vector<8x512xf32>
    %306 = arith.mulf %303, %305 : vector<8x512xf32>
    %307 = arith.addf %300, %306 : vector<8x512xf32>
    %308 = vector.broadcast %17 : vector<8x1xf32> to vector<8x512xf32>
    %309 = arith.addf %307, %308 : vector<8x512xf32>
    %310 = arith.truncf %29 : vector<16x8xf32> to vector<16x8xbf16>
    %311 = arith.truncf %243 : vector<8x512xf32> to vector<8x512xbf16>
    %cst_89 = arith.constant dense<0.000000e+00> : vector<16x512xf32>
    %312 = tpu.matmul %310, %311, %cst_89 {dimension_numbers = #tpu.dot_dimension_numbers<[1], [0], [0], [1], [0, 0, 1, 1], [], []>} : vector<16x8xbf16>, vector<8x512xbf16>, vector<16x512xf32> -> vector<16x512xf32>
    %313 = vector.broadcast %18 : vector<16x1xf32> to vector<16x512xf32>
    %314 = arith.addf %312, %313 : vector<16x512xf32>
    %315 = vector.extract_strided_slice %26 {offsets = [0, 4], sizes = [16, 1], strides = [1, 1]} : vector<16x9xf32> to vector<16x1xf32>
    %316 = vector.broadcast %315 : vector<16x1xf32> to vector<16x512xf32>
    %317 = arith.mulf %314, %316 : vector<16x512xf32>
    %c17_i32_90 = arith.constant 17 : i32
    %318 = tpu.dynamic_rotate %314 by %c17_i32_90 dim 1 : vector<16x512xf32>, i32 -> vector<16x512xf32>
    %319 = vector.broadcast %56 : vector<1x512xf32> to vector<16x512xf32>
    %320 = arith.mulf %318, %319 : vector<16x512xf32>
    %321 = vector.extract_strided_slice %26 {offsets = [0, 0], sizes = [16, 1], strides = [1, 1]} : vector<16x9xf32> to vector<16x1xf32>
    %322 = vector.broadcast %321 : vector<16x1xf32> to vector<16x512xf32>
    %323 = arith.mulf %320, %322 : vector<16x512xf32>
    %324 = arith.addf %317, %323 : vector<16x512xf32>
    %c16_i32_91 = arith.constant 16 : i32
    %325 = tpu.dynamic_rotate %314 by %c16_i32_91 dim 1 : vector<16x512xf32>, i32 -> vector<16x512xf32>
    %326 = vector.broadcast %77 : vector<1x512xf32> to vector<16x512xf32>
    %327 = arith.mulf %325, %326 : vector<16x512xf32>
    %328 = vector.extract_strided_slice %26 {offsets = [0, 1], sizes = [16, 1], strides = [1, 1]} : vector<16x9xf32> to vector<16x1xf32>
    %329 = vector.broadcast %328 : vector<16x1xf32> to vector<16x512xf32>
    %330 = arith.mulf %327, %329 : vector<16x512xf32>
    %331 = arith.addf %324, %330 : vector<16x512xf32>
    %c15_i32_92 = arith.constant 15 : i32
    %332 = tpu.dynamic_rotate %314 by %c15_i32_92 dim 1 : vector<16x512xf32>, i32 -> vector<16x512xf32>
    %333 = vector.broadcast %98 : vector<1x512xf32> to vector<16x512xf32>
    %334 = arith.mulf %332, %333 : vector<16x512xf32>
    %335 = vector.extract_strided_slice %26 {offsets = [0, 2], sizes = [16, 1], strides = [1, 1]} : vector<16x9xf32> to vector<16x1xf32>
    %336 = vector.broadcast %335 : vector<16x1xf32> to vector<16x512xf32>
    %337 = arith.mulf %334, %336 : vector<16x512xf32>
    %338 = arith.addf %331, %337 : vector<16x512xf32>
    %c1_i32_93 = arith.constant 1 : i32
    %339 = tpu.dynamic_rotate %314 by %c1_i32_93 dim 1 : vector<16x512xf32>, i32 -> vector<16x512xf32>
    %340 = vector.broadcast %119 : vector<1x512xf32> to vector<16x512xf32>
    %341 = arith.mulf %339, %340 : vector<16x512xf32>
    %342 = vector.extract_strided_slice %26 {offsets = [0, 3], sizes = [16, 1], strides = [1, 1]} : vector<16x9xf32> to vector<16x1xf32>
    %343 = vector.broadcast %342 : vector<16x1xf32> to vector<16x512xf32>
    %344 = arith.mulf %341, %343 : vector<16x512xf32>
    %345 = arith.addf %338, %344 : vector<16x512xf32>
    %c511_i32_94 = arith.constant 511 : i32
    %346 = tpu.dynamic_rotate %314 by %c511_i32_94 dim 1 : vector<16x512xf32>, i32 -> vector<16x512xf32>
    %347 = vector.broadcast %140 : vector<1x512xf32> to vector<16x512xf32>
    %348 = arith.mulf %346, %347 : vector<16x512xf32>
    %349 = vector.extract_strided_slice %26 {offsets = [0, 5], sizes = [16, 1], strides = [1, 1]} : vector<16x9xf32> to vector<16x1xf32>
    %350 = vector.broadcast %349 : vector<16x1xf32> to vector<16x512xf32>
    %351 = arith.mulf %348, %350 : vector<16x512xf32>
    %352 = arith.addf %345, %351 : vector<16x512xf32>
    %c497_i32_95 = arith.constant 497 : i32
    %353 = tpu.dynamic_rotate %314 by %c497_i32_95 dim 1 : vector<16x512xf32>, i32 -> vector<16x512xf32>
    %354 = vector.broadcast %161 : vector<1x512xf32> to vector<16x512xf32>
    %355 = arith.mulf %353, %354 : vector<16x512xf32>
    %356 = vector.extract_strided_slice %26 {offsets = [0, 6], sizes = [16, 1], strides = [1, 1]} : vector<16x9xf32> to vector<16x1xf32>
    %357 = vector.broadcast %356 : vector<16x1xf32> to vector<16x512xf32>
    %358 = arith.mulf %355, %357 : vector<16x512xf32>
    %359 = arith.addf %352, %358 : vector<16x512xf32>
    %c496_i32_96 = arith.constant 496 : i32
    %360 = tpu.dynamic_rotate %314 by %c496_i32_96 dim 1 : vector<16x512xf32>, i32 -> vector<16x512xf32>
    %361 = vector.broadcast %182 : vector<1x512xf32> to vector<16x512xf32>
    %362 = arith.mulf %360, %361 : vector<16x512xf32>
    %363 = vector.extract_strided_slice %26 {offsets = [0, 7], sizes = [16, 1], strides = [1, 1]} : vector<16x9xf32> to vector<16x1xf32>
    %364 = vector.broadcast %363 : vector<16x1xf32> to vector<16x512xf32>
    %365 = arith.mulf %362, %364 : vector<16x512xf32>
    %366 = arith.addf %359, %365 : vector<16x512xf32>
    %c495_i32_97 = arith.constant 495 : i32
    %367 = tpu.dynamic_rotate %314 by %c495_i32_97 dim 1 : vector<16x512xf32>, i32 -> vector<16x512xf32>
    %368 = vector.broadcast %203 : vector<1x512xf32> to vector<16x512xf32>
    %369 = arith.mulf %367, %368 : vector<16x512xf32>
    %370 = vector.extract_strided_slice %26 {offsets = [0, 8], sizes = [16, 1], strides = [1, 1]} : vector<16x9xf32> to vector<16x1xf32>
    %371 = vector.broadcast %370 : vector<16x1xf32> to vector<16x512xf32>
    %372 = arith.mulf %369, %371 : vector<16x512xf32>
    %373 = arith.addf %366, %372 : vector<16x512xf32>
    %374 = vector.broadcast %19 : vector<16x1xf32> to vector<16x512xf32>
    %375 = arith.addf %373, %374 : vector<16x512xf32>
    %376 = vector.extract_strided_slice %375 {offsets = [0, 0], sizes = [8, 512], strides = [1, 1]} : vector<16x512xf32> to vector<8x512xf32>
    %377 = vector.extract_strided_slice %375 {offsets = [8, 0], sizes = [8, 512], strides = [1, 1]} : vector<16x512xf32> to vector<8x512xf32>
    %378 = vector.extract_strided_slice %309 {offsets = [0, 0], sizes = [8, 256], strides = [1, 1]} : vector<8x512xf32> to vector<8x256xf32>
    %379 = vector.extract_strided_slice %376 {offsets = [0, 0], sizes = [8, 256], strides = [1, 1]} : vector<8x512xf32> to vector<8x256xf32>
    %380 = vector.extract_strided_slice %377 {offsets = [0, 0], sizes = [8, 256], strides = [1, 1]} : vector<8x512xf32> to vector<8x256xf32>
    %381 = arith.mulf %378, %378 : vector<8x256xf32>
    %cst_98 = arith.constant dense<0.000000e+00> : vector<8xf32>
    %382 = vector.multi_reduction <add>, %381, %cst_98 [1] : vector<8x256xf32> to vector<8xf32>
    %383 = vector.shape_cast %382 : vector<8xf32> to vector<8x1xf32>
    %384 = math.sqrt %383 : vector<8x1xf32>
    %cst_99 = arith.constant 9.99999996E-13 : f32
    %385 = vector.broadcast %cst_99 : f32 to vector<8x1xf32>
    %386 = arith.maximumf %384, %385 : vector<8x1xf32>
    %387 = vector.broadcast %386 : vector<8x1xf32> to vector<8x256xf32>
    %388 = arith.divf %378, %387 : vector<8x256xf32>
    %389 = arith.truncf %388 : vector<8x256xf32> to vector<8x256xbf16>
    %390 = arith.mulf %379, %379 : vector<8x256xf32>
    %cst_100 = arith.constant dense<0.000000e+00> : vector<8xf32>
    %391 = vector.multi_reduction <add>, %390, %cst_100 [1] : vector<8x256xf32> to vector<8xf32>
    %392 = vector.shape_cast %391 : vector<8xf32> to vector<8x1xf32>
    %393 = math.sqrt %392 : vector<8x1xf32>
    %cst_101 = arith.constant 9.99999996E-13 : f32
    %394 = vector.broadcast %cst_101 : f32 to vector<8x1xf32>
    %395 = arith.maximumf %393, %394 : vector<8x1xf32>
    %396 = vector.broadcast %395 : vector<8x1xf32> to vector<8x256xf32>
    %397 = arith.divf %379, %396 : vector<8x256xf32>
    %398 = arith.truncf %397 : vector<8x256xf32> to vector<8x256xbf16>
    %cst_102 = arith.constant dense<0.000000e+00> : vector<8x8xf32>
    %399 = tpu.matmul %389, %398, %cst_102 {dimension_numbers = #tpu.dot_dimension_numbers<[1], [1], [0], [0], [0, 0, 1, 0], [], []>} : vector<8x256xbf16>, vector<8x256xbf16>, vector<8x8xf32> -> vector<8x8xf32>
    %400 = vector.broadcast %21 : vector<8x1xf32> to vector<8x8xf32>
    %401 = arith.mulf %399, %400 : vector<8x8xf32>
    %402 = arith.addf %401, %9 : vector<8x8xf32>
    %cst_103 = arith.constant dense<0xFF800000> : vector<8xf32>
    %403 = vector.multi_reduction <maximumf>, %402, %cst_103 [1] : vector<8x8xf32> to vector<8xf32>
    %404 = vector.shape_cast %403 : vector<8xf32> to vector<8x1xf32>
    %405 = vector.broadcast %404 : vector<8x1xf32> to vector<8x8xf32>
    %406 = arith.subf %402, %405 : vector<8x8xf32>
    %407 = math.exp %406 : vector<8x8xf32>
    %cst_104 = arith.constant dense<0.000000e+00> : vector<8xf32>
    %408 = vector.multi_reduction <add>, %407, %cst_104 [1] : vector<8x8xf32> to vector<8xf32>
    %409 = vector.shape_cast %408 : vector<8xf32> to vector<8x1xf32>
    %410 = vector.broadcast %409 : vector<8x1xf32> to vector<8x8xf32>
    %411 = arith.divf %407, %410 : vector<8x8xf32>
    %412 = arith.truncf %411 : vector<8x8xf32> to vector<8x8xbf16>
    %413 = arith.truncf %380 : vector<8x256xf32> to vector<8x256xbf16>
    %cst_105 = arith.constant dense<0.000000e+00> : vector<8x256xf32>
    %414 = tpu.matmul %412, %413, %cst_105 {dimension_numbers = #tpu.dot_dimension_numbers<[1], [0], [0], [1], [0, 0, 1, 1], [], []>} : vector<8x8xbf16>, vector<8x256xbf16>, vector<8x256xf32> -> vector<8x256xf32>
    %415 = vector.extract_strided_slice %309 {offsets = [0, 256], sizes = [8, 256], strides = [1, 1]} : vector<8x512xf32> to vector<8x256xf32>
    %416 = vector.extract_strided_slice %376 {offsets = [0, 256], sizes = [8, 256], strides = [1, 1]} : vector<8x512xf32> to vector<8x256xf32>
    %417 = vector.extract_strided_slice %377 {offsets = [0, 256], sizes = [8, 256], strides = [1, 1]} : vector<8x512xf32> to vector<8x256xf32>
    %418 = arith.mulf %415, %415 : vector<8x256xf32>
    %cst_106 = arith.constant dense<0.000000e+00> : vector<8xf32>
    %419 = vector.multi_reduction <add>, %418, %cst_106 [1] : vector<8x256xf32> to vector<8xf32>
    %420 = vector.shape_cast %419 : vector<8xf32> to vector<8x1xf32>
    %421 = math.sqrt %420 : vector<8x1xf32>
    %cst_107 = arith.constant 9.99999996E-13 : f32
    %422 = vector.broadcast %cst_107 : f32 to vector<8x1xf32>
    %423 = arith.maximumf %421, %422 : vector<8x1xf32>
    %424 = vector.broadcast %423 : vector<8x1xf32> to vector<8x256xf32>
    %425 = arith.divf %415, %424 : vector<8x256xf32>
    %426 = arith.truncf %425 : vector<8x256xf32> to vector<8x256xbf16>
    %427 = arith.mulf %416, %416 : vector<8x256xf32>
    %cst_108 = arith.constant dense<0.000000e+00> : vector<8xf32>
    %428 = vector.multi_reduction <add>, %427, %cst_108 [1] : vector<8x256xf32> to vector<8xf32>
    %429 = vector.shape_cast %428 : vector<8xf32> to vector<8x1xf32>
    %430 = math.sqrt %429 : vector<8x1xf32>
    %cst_109 = arith.constant 9.99999996E-13 : f32
    %431 = vector.broadcast %cst_109 : f32 to vector<8x1xf32>
    %432 = arith.maximumf %430, %431 : vector<8x1xf32>
    %433 = vector.broadcast %432 : vector<8x1xf32> to vector<8x256xf32>
    %434 = arith.divf %416, %433 : vector<8x256xf32>
    %435 = arith.truncf %434 : vector<8x256xf32> to vector<8x256xbf16>
    %cst_110 = arith.constant dense<0.000000e+00> : vector<8x8xf32>
    %436 = tpu.matmul %426, %435, %cst_110 {dimension_numbers = #tpu.dot_dimension_numbers<[1], [1], [0], [0], [0, 0, 1, 0], [], []>} : vector<8x256xbf16>, vector<8x256xbf16>, vector<8x8xf32> -> vector<8x8xf32>
    %437 = vector.broadcast %21 : vector<8x1xf32> to vector<8x8xf32>
    %438 = arith.mulf %436, %437 : vector<8x8xf32>
    %439 = arith.addf %438, %9 : vector<8x8xf32>
    %cst_111 = arith.constant dense<0xFF800000> : vector<8xf32>
    %440 = vector.multi_reduction <maximumf>, %439, %cst_111 [1] : vector<8x8xf32> to vector<8xf32>
    %441 = vector.shape_cast %440 : vector<8xf32> to vector<8x1xf32>
    %442 = vector.broadcast %441 : vector<8x1xf32> to vector<8x8xf32>
    %443 = arith.subf %439, %442 : vector<8x8xf32>
    %444 = math.exp %443 : vector<8x8xf32>
    %cst_112 = arith.constant dense<0.000000e+00> : vector<8xf32>
    %445 = vector.multi_reduction <add>, %444, %cst_112 [1] : vector<8x8xf32> to vector<8xf32>
    %446 = vector.shape_cast %445 : vector<8xf32> to vector<8x1xf32>
    %447 = vector.broadcast %446 : vector<8x1xf32> to vector<8x8xf32>
    %448 = arith.divf %444, %447 : vector<8x8xf32>
    %449 = arith.truncf %448 : vector<8x8xf32> to vector<8x8xbf16>
    %450 = arith.truncf %417 : vector<8x256xf32> to vector<8x256xbf16>
    %cst_113 = arith.constant dense<0.000000e+00> : vector<8x256xf32>
    %451 = tpu.matmul %449, %450, %cst_113 {dimension_numbers = #tpu.dot_dimension_numbers<[1], [0], [0], [1], [0, 0, 1, 1], [], []>} : vector<8x8xbf16>, vector<8x256xbf16>, vector<8x256xf32> -> vector<8x256xf32>
    %452 = tpu.concatenate %414, %451 in 1 : vector<8x256xf32>, vector<8x256xf32> -> vector<8x512xf32>
    %453 = arith.truncf %30 : vector<8x8xf32> to vector<8x8xbf16>
    %454 = arith.truncf %452 : vector<8x512xf32> to vector<8x512xbf16>
    %cst_114 = arith.constant dense<0.000000e+00> : vector<8x512xf32>
    %455 = tpu.matmul %453, %454, %cst_114 {dimension_numbers = #tpu.dot_dimension_numbers<[1], [0], [0], [1], [0, 0, 1, 1], [], []>} : vector<8x8xbf16>, vector<8x512xbf16>, vector<8x512xf32> -> vector<8x512xf32>
    %456 = arith.addf %1, %455 : vector<8x512xf32>
    %457 = vector.broadcast %20 : vector<8x1xf32> to vector<8x512xf32>
    %458 = arith.addf %456, %457 : vector<8x512xf32>
    %cst_115 = arith.constant dense<0.000000e+00> : vector<512xf32>
    %459 = vector.multi_reduction <add>, %458, %cst_115 [0] : vector<8x512xf32> to vector<512xf32>
    %460 = vector.shape_cast %459 : vector<512xf32> to vector<1x512xf32>
    %cst_116 = arith.constant 8.000000e+00 : f32
    %461 = vector.broadcast %cst_116 : f32 to vector<1x512xf32>
    %462 = arith.divf %460, %461 : vector<1x512xf32>
    %463 = vector.broadcast %462 : vector<1x512xf32> to vector<8x512xf32>
    %464 = arith.subf %458, %463 : vector<8x512xf32>
    %465 = arith.mulf %464, %464 : vector<8x512xf32>
    %cst_117 = arith.constant dense<0.000000e+00> : vector<512xf32>
    %466 = vector.multi_reduction <add>, %465, %cst_117 [0] : vector<8x512xf32> to vector<512xf32>
    %467 = vector.shape_cast %466 : vector<512xf32> to vector<1x512xf32>
    %cst_118 = arith.constant 8.000000e+00 : f32
    %468 = vector.broadcast %cst_118 : f32 to vector<1x512xf32>
    %469 = arith.divf %467, %468 : vector<1x512xf32>
    %cst_119 = arith.constant 9.99999974E-6 : f32
    %470 = vector.broadcast %cst_119 : f32 to vector<1x512xf32>
    %471 = arith.addf %469, %470 : vector<1x512xf32>
    %472 = math.rsqrt %471 : vector<1x512xf32>
    %473 = vector.broadcast %472 : vector<1x512xf32> to vector<8x512xf32>
    %474 = arith.mulf %464, %473 : vector<8x512xf32>
    %475 = vector.broadcast %14 : vector<8x1xf32> to vector<8x512xf32>
    %476 = arith.mulf %474, %475 : vector<8x512xf32>
    %477 = vector.broadcast %15 : vector<8x1xf32> to vector<8x512xf32>
    %478 = arith.addf %476, %477 : vector<8x512xf32>
    %479 = arith.truncf %31 : vector<32x8xf32> to vector<32x8xbf16>
    %480 = arith.truncf %478 : vector<8x512xf32> to vector<8x512xbf16>
    %cst_120 = arith.constant dense<0.000000e+00> : vector<32x512xf32>
    %481 = tpu.matmul %479, %480, %cst_120 {dimension_numbers = #tpu.dot_dimension_numbers<[1], [0], [0], [1], [0, 0, 1, 1], [], []>} : vector<32x8xbf16>, vector<8x512xbf16>, vector<32x512xf32> -> vector<32x512xf32>
    %482 = vector.broadcast %22 : vector<32x1xf32> to vector<32x512xf32>
    %483 = arith.addf %481, %482 : vector<32x512xf32>
    %484 = vector.extract_strided_slice %27 {offsets = [0, 4], sizes = [32, 1], strides = [1, 1]} : vector<32x9xf32> to vector<32x1xf32>
    %485 = vector.broadcast %484 : vector<32x1xf32> to vector<32x512xf32>
    %486 = arith.mulf %483, %485 : vector<32x512xf32>
    %c17_i32_121 = arith.constant 17 : i32
    %487 = tpu.dynamic_rotate %483 by %c17_i32_121 dim 1 : vector<32x512xf32>, i32 -> vector<32x512xf32>
    %488 = vector.broadcast %56 : vector<1x512xf32> to vector<32x512xf32>
    %489 = arith.mulf %487, %488 : vector<32x512xf32>
    %490 = vector.extract_strided_slice %27 {offsets = [0, 0], sizes = [32, 1], strides = [1, 1]} : vector<32x9xf32> to vector<32x1xf32>
    %491 = vector.broadcast %490 : vector<32x1xf32> to vector<32x512xf32>
    %492 = arith.mulf %489, %491 : vector<32x512xf32>
    %493 = arith.addf %486, %492 : vector<32x512xf32>
    %c16_i32_122 = arith.constant 16 : i32
    %494 = tpu.dynamic_rotate %483 by %c16_i32_122 dim 1 : vector<32x512xf32>, i32 -> vector<32x512xf32>
    %495 = vector.broadcast %77 : vector<1x512xf32> to vector<32x512xf32>
    %496 = arith.mulf %494, %495 : vector<32x512xf32>
    %497 = vector.extract_strided_slice %27 {offsets = [0, 1], sizes = [32, 1], strides = [1, 1]} : vector<32x9xf32> to vector<32x1xf32>
    %498 = vector.broadcast %497 : vector<32x1xf32> to vector<32x512xf32>
    %499 = arith.mulf %496, %498 : vector<32x512xf32>
    %500 = arith.addf %493, %499 : vector<32x512xf32>
    %c15_i32_123 = arith.constant 15 : i32
    %501 = tpu.dynamic_rotate %483 by %c15_i32_123 dim 1 : vector<32x512xf32>, i32 -> vector<32x512xf32>
    %502 = vector.broadcast %98 : vector<1x512xf32> to vector<32x512xf32>
    %503 = arith.mulf %501, %502 : vector<32x512xf32>
    %504 = vector.extract_strided_slice %27 {offsets = [0, 2], sizes = [32, 1], strides = [1, 1]} : vector<32x9xf32> to vector<32x1xf32>
    %505 = vector.broadcast %504 : vector<32x1xf32> to vector<32x512xf32>
    %506 = arith.mulf %503, %505 : vector<32x512xf32>
    %507 = arith.addf %500, %506 : vector<32x512xf32>
    %c1_i32_124 = arith.constant 1 : i32
    %508 = tpu.dynamic_rotate %483 by %c1_i32_124 dim 1 : vector<32x512xf32>, i32 -> vector<32x512xf32>
    %509 = vector.broadcast %119 : vector<1x512xf32> to vector<32x512xf32>
    %510 = arith.mulf %508, %509 : vector<32x512xf32>
    %511 = vector.extract_strided_slice %27 {offsets = [0, 3], sizes = [32, 1], strides = [1, 1]} : vector<32x9xf32> to vector<32x1xf32>
    %512 = vector.broadcast %511 : vector<32x1xf32> to vector<32x512xf32>
    %513 = arith.mulf %510, %512 : vector<32x512xf32>
    %514 = arith.addf %507, %513 : vector<32x512xf32>
    %c511_i32_125 = arith.constant 511 : i32
    %515 = tpu.dynamic_rotate %483 by %c511_i32_125 dim 1 : vector<32x512xf32>, i32 -> vector<32x512xf32>
    %516 = vector.broadcast %140 : vector<1x512xf32> to vector<32x512xf32>
    %517 = arith.mulf %515, %516 : vector<32x512xf32>
    %518 = vector.extract_strided_slice %27 {offsets = [0, 5], sizes = [32, 1], strides = [1, 1]} : vector<32x9xf32> to vector<32x1xf32>
    %519 = vector.broadcast %518 : vector<32x1xf32> to vector<32x512xf32>
    %520 = arith.mulf %517, %519 : vector<32x512xf32>
    %521 = arith.addf %514, %520 : vector<32x512xf32>
    %c497_i32_126 = arith.constant 497 : i32
    %522 = tpu.dynamic_rotate %483 by %c497_i32_126 dim 1 : vector<32x512xf32>, i32 -> vector<32x512xf32>
    %523 = vector.broadcast %161 : vector<1x512xf32> to vector<32x512xf32>
    %524 = arith.mulf %522, %523 : vector<32x512xf32>
    %525 = vector.extract_strided_slice %27 {offsets = [0, 6], sizes = [32, 1], strides = [1, 1]} : vector<32x9xf32> to vector<32x1xf32>
    %526 = vector.broadcast %525 : vector<32x1xf32> to vector<32x512xf32>
    %527 = arith.mulf %524, %526 : vector<32x512xf32>
    %528 = arith.addf %521, %527 : vector<32x512xf32>
    %c496_i32_127 = arith.constant 496 : i32
    %529 = tpu.dynamic_rotate %483 by %c496_i32_127 dim 1 : vector<32x512xf32>, i32 -> vector<32x512xf32>
    %530 = vector.broadcast %182 : vector<1x512xf32> to vector<32x512xf32>
    %531 = arith.mulf %529, %530 : vector<32x512xf32>
    %532 = vector.extract_strided_slice %27 {offsets = [0, 7], sizes = [32, 1], strides = [1, 1]} : vector<32x9xf32> to vector<32x1xf32>
    %533 = vector.broadcast %532 : vector<32x1xf32> to vector<32x512xf32>
    %534 = arith.mulf %531, %533 : vector<32x512xf32>
    %535 = arith.addf %528, %534 : vector<32x512xf32>
    %c495_i32_128 = arith.constant 495 : i32
    %536 = tpu.dynamic_rotate %483 by %c495_i32_128 dim 1 : vector<32x512xf32>, i32 -> vector<32x512xf32>
    %537 = vector.broadcast %203 : vector<1x512xf32> to vector<32x512xf32>
    %538 = arith.mulf %536, %537 : vector<32x512xf32>
    %539 = vector.extract_strided_slice %27 {offsets = [0, 8], sizes = [32, 1], strides = [1, 1]} : vector<32x9xf32> to vector<32x1xf32>
    %540 = vector.broadcast %539 : vector<32x1xf32> to vector<32x512xf32>
    %541 = arith.mulf %538, %540 : vector<32x512xf32>
    %542 = arith.addf %535, %541 : vector<32x512xf32>
    %543 = vector.broadcast %23 : vector<32x1xf32> to vector<32x512xf32>
    %544 = arith.addf %542, %543 : vector<32x512xf32>
    %545 = vector.extract_strided_slice %544 {offsets = [0, 0], sizes = [16, 512], strides = [1, 1]} : vector<32x512xf32> to vector<16x512xf32>
    %cst_129 = arith.constant 5.000000e-01 : f32
    %546 = vector.broadcast %cst_129 : f32 to vector<16x512xf32>
    %547 = arith.mulf %546, %545 : vector<16x512xf32>
    %cst_130 = arith.constant 4.471500e-02 : f32
    %548 = vector.broadcast %cst_130 : f32 to vector<16x512xf32>
    %549 = arith.mulf %548, %545 : vector<16x512xf32>
    %550 = arith.mulf %549, %545 : vector<16x512xf32>
    %551 = arith.mulf %550, %545 : vector<16x512xf32>
    %552 = arith.addf %545, %551 : vector<16x512xf32>
    %cst_131 = arith.constant 0.797884583 : f32
    %553 = vector.broadcast %cst_131 : f32 to vector<16x512xf32>
    %554 = arith.mulf %553, %552 : vector<16x512xf32>
    %555 = math.tanh %554 : vector<16x512xf32>
    %cst_132 = arith.constant 1.000000e+00 : f32
    %556 = vector.broadcast %cst_132 : f32 to vector<16x512xf32>
    %557 = arith.addf %556, %555 : vector<16x512xf32>
    %558 = arith.mulf %547, %557 : vector<16x512xf32>
    %559 = vector.extract_strided_slice %544 {offsets = [16, 0], sizes = [16, 512], strides = [1, 1]} : vector<32x512xf32> to vector<16x512xf32>
    %560 = arith.mulf %558, %559 : vector<16x512xf32>
    %561 = arith.truncf %32 : vector<8x16xf32> to vector<8x16xbf16>
    %562 = arith.truncf %560 : vector<16x512xf32> to vector<16x512xbf16>
    %cst_133 = arith.constant dense<0.000000e+00> : vector<8x512xf32>
    %563 = tpu.matmul %561, %562, %cst_133 {dimension_numbers = #tpu.dot_dimension_numbers<[1], [0], [0], [1], [0, 0, 1, 1], [], []>} : vector<8x16xbf16>, vector<16x512xbf16>, vector<8x512xf32> -> vector<8x512xf32>
    %564 = arith.addf %458, %563 : vector<8x512xf32>
    %565 = vector.broadcast %24 : vector<8x1xf32> to vector<8x512xf32>
    %566 = arith.addf %564, %565 : vector<8x512xf32>
    %c0_134 = arith.constant 0 : index
    %c0_135 = arith.constant 0 : index
    %c0_136 = arith.constant 0 : index
    %567 = vector.load %arg8[%c0_134, %c0_135, %c0_136] : memref<1x8x512xf32, #tpu.memory_space<vmem>>, vector<1x8x512xf32>
    %568 = vector.shape_cast %567 : vector<1x8x512xf32> to vector<8x512xf32>
    %569 = vector.shape_cast %566 : vector<8x512xf32> to vector<1x8x512xf32>
    tpu.vector_store %arg8[%c0_134, %c0_135, %c0_136], %569 {strides = array<i32>} : memref<1x8x512xf32, #tpu.memory_space<vmem>>, vector<1x8x512xf32>,
    return
  }
  func.func @transform_0(%arg0: i32) -> (i32, i32, i32) {
    %c0_i32 = arith.constant 0 : i32
    %c0_i32_0 = arith.constant 0 : i32
    %c0_i32_1 = arith.constant 0 : i32
    return %arg0, %c0_i32, %c0_i32_0 : i32, i32, i32
  }
  func.func @transform_1(%arg0: i32) -> (i32, i32) {
    %c0_i32 = arith.constant 0 : i32
    %c0_i32_0 = arith.constant 0 : i32
    %c0_i32_1 = arith.constant 0 : i32
    return %c0_i32, %c0_i32_0 : i32, i32
  }
  func.func @transform_2(%arg0: i32) -> (i32, i32) {
    %c0_i32 = arith.constant 0 : i32
    %c0_i32_0 = arith.constant 0 : i32
    %c0_i32_1 = arith.constant 0 : i32
    return %c0_i32, %c0_i32_0 : i32, i32
  }
  func.func @transform_3(%arg0: i32) -> (i32, i32) {
    %c0_i32 = arith.constant 0 : i32
    %c0_i32_0 = arith.constant 0 : i32
    %c0_i32_1 = arith.constant 0 : i32
    return %c0_i32, %c0_i32_0 : i32, i32
  }
  func.func @transform_4(%arg0: i32) -> (i32, i32, i32) {
    %c0_i32 = arith.constant 0 : i32
    %c0_i32_0 = arith.constant 0 : i32
    %c0_i32_1 = arith.constant 0 : i32
    return %arg0, %c0_i32, %c0_i32_0 : i32, i32, i32
  }
  func.func @transform_5(%arg0: i32) -> (i32, i32, i32) {
    %c0_i32 = arith.constant 0 : i32
    %c0_i32_0 = arith.constant 0 : i32
    %c0_i32_1 = arith.constant 0 : i32
    return %arg0, %c0_i32, %c0_i32_0 : i32, i32, i32
  }
  func.func @transform_6(%arg0: i32) -> (i32, i32, i32) {
    %c0_i32 = arith.constant 0 : i32
    %c0_i32_0 = arith.constant 0 : i32
    %c0_i32_1 = arith.constant 0 : i32
    return %arg0, %c0_i32, %c0_i32_0 : i32, i32, i32
  }
  func.func @transform_7(%arg0: i32) -> (i32, i32, i32) {
    %c0_i32 = arith.constant 0 : i32
    %c0_i32_0 = arith.constant 0 : i32
    %c0_i32_1 = arith.constant 0 : i32
    return %arg0, %c0_i32, %c0_i32_0 : i32, i32, i32
  }
}

</mosaic_0001>

<llo_original>
// kernel: tile.17
$region0: #{tile.17}
  %s0 = inlined_call_operand.vmem [shape: s32[32,16], index: 0, kind: input, shape index: {}]
  %s1 = inlined_call_operand.vmem [shape: s32[1,512], index: 1, kind: output, shape index: {}]
  $region1: #{tile.17} parent=0
    #allocation0 [shape = 'u8[16384]{0}', space=vmem, size = 0x4000, scoped, tag = 'scoped mem for output reshape']
    %v2 = vld [vmem:[%s0] ss:$8 sm:$0xf]
    %vm3 = vcmask 130048
    %4 = vst.msk [vmem:[#allocation0] ss:$8 sm:$0xf] %vm3, %v2
    %s5 = scalar_lea.vmem %s0, 7
    %v6 = vld [vmem:[%s5] ss:$8 sm:$0xf]
    %7 = vrot.lane.b32.xlu0 %v6, 112
    %v8 = vpop.permute.xlu0 %7
    %vm9 = vcmask 1048448
    %10 = vst.msk [vmem:[#allocation0] ss:$8 sm:$0xf] %vm9, %v8
    %s11 = scalar_lea.vmem %s0, 6
    %v12 = vld [vmem:[%s11] ss:$8 sm:$0xf]
    %13 = vrot.lane.b32.xlu0 %v12, 96
    %v14 = vpop.permute.xlu0 %13
    %vm15 = vcmask 917248
    %16 = vst.msk [vmem:[#allocation0] ss:$8 sm:$0xf] %vm15, %v14
    %s17 = scalar_lea.vmem %s0, 5
    %v18 = vld [vmem:[%s17] ss:$8 sm:$0xf]
    %19 = vrot.lane.b32.xlu0 %v18, 80
    %v20 = vpop.permute.xlu0 %19
    %vm21 = vcmask 786048
    %22 = vst.msk [vmem:[#allocation0] ss:$8 sm:$0xf] %vm21, %v20
    %s23 = scalar_lea.vmem %s0, 4
    %v24 = vld [vmem:[%s23] ss:$8 sm:$0xf]
    %25 = vrot.lane.b32.xlu0 %v24, 64
    %v26 = vpop.permute.xlu0 %25
    %vm27 = vcmask 654848
    %28 = vst.msk [vmem:[#allocation0] ss:$8 sm:$0xf] %vm27, %v26
    %s29 = scalar_lea.vmem %s0, 3
    %v30 = vld [vmem:[%s29] ss:$8 sm:$0xf]
    %31 = vrot.lane.b32.xlu0 %v30, 48
    %v32 = vpop.permute.xlu0 %31
    %vm33 = vcmask 523648
    %34 = vst.msk [vmem:[#allocation0] ss:$8 sm:$0xf] %vm33, %v32
    %s35 = scalar_lea.vmem %s0, 2
    %v36 = vld [vmem:[%s35] ss:$8 sm:$0xf]
    %37 = vrot.lane.b32.xlu0 %v36, 32
    %v38 = vpop.permute.xlu0 %37
    %vm39 = vcmask 392448
    %40 = vst.msk [vmem:[#allocation0] ss:$8 sm:$0xf] %vm39, %v38
    %s41 = scalar_lea.vmem %s0, 1
    %v42 = vld [vmem:[%s41] ss:$8 sm:$0xf]
    %43 = vrot.lane.b32.xlu0 %v42, 16
    %v44 = vpop.permute.xlu0 %43
    %vm45 = vcmask 261248
    %46 = vst.msk [vmem:[#allocation0] ss:$8 sm:$0xf] %vm45, %v44
    %s48 = sshll.u32 1, 1
    %s49 = ssub.s32 %s48, 1
    %v51 = vld [vmem:[#allocation0] sm:%s49]
    %s52 = sshll.u32 1, 1
    %s53 = ssub.s32 %s52, 1
    %54 = vst [vmem:[%s1] sm:%s53] %v51
    %s55 = scalar_lea.vmem [#allocation0], 8
    %v56 = vld [vmem:[%s55] sm:%s49]
    %s57 = sshll.u32 1, 1
    %s58 = ssub.s32 %s57, 1
    %s59 = scalar_lea.vmem %s1, 1
    %60 = vst [vmem:[%s59] sm:%s58] %v56
    %s61 = scalar_lea.vmem [#allocation0], 16
    %v62 = vld [vmem:[%s61] sm:%s49]
    %s63 = sshll.u32 1, 1
    %s64 = ssub.s32 %s63, 1
    %s65 = smul.addr 1, 2
    %s66 = scalar_lea.vmem %s1, %s65
    %67 = vst [vmem:[%s66] sm:%s64] %v62
    %s68 = scalar_lea.vmem [#allocation0], 24
    %v69 = vld [vmem:[%s68] sm:%s49]
    %s70 = sshll.u32 1, 1
    %s71 = ssub.s32 %s70, 1
    %s72 = smul.addr 1, 3
    %s73 = scalar_lea.vmem %s1, %s72
    %74 = vst [vmem:[%s73] sm:%s71] %v69

// kernel: tile.10
$region0: #{tile.10}
  %s0 = inlined_call_operand.vmem [shape: s32[16,16], index: 0, kind: input, shape index: {}]
  %s1 = inlined_call_operand.vmem [shape: s32[256], index: 1, kind: output, shape index: {}]
  $region1: #{tile.10} parent=0
    #allocation0 [shape = 'u8[4096]{0}', space=vmem, size = 0x1000, scoped, tag = 'scoped mem for output reshape']
    %s2 = smov 3
    %v3 = vld [vmem:[%s0] ss:$8 sm:%s2]
    %vm4 = vcmask 130048
    %5 = vst.msk [vmem:[#allocation0] sm:$0x3] %vm4, %v3
    %s6 = scalar_lea.vmem %s0, 7
    %s7 = smov 3
    %v8 = vld [vmem:[%s6] ss:$8 sm:%s7]
    %9 = vrot.lane.b32.xlu0 %v8, 112
    %v10 = vpop.permute.xlu0 %9
    %vm11 = vcmask 1048448
    %12 = vst.msk [vmem:[#allocation0] sm:$0x3] %vm11, %v10
    %s13 = scalar_lea.vmem %s0, 6
    %s14 = smov 3
    %v15 = vld [vmem:[%s13] ss:$8 sm:%s14]
    %16 = vrot.lane.b32.xlu0 %v15, 96
    %v17 = vpop.permute.xlu0 %16
    %vm18 = vcmask 917248
    %19 = vst.msk [vmem:[#allocation0] sm:$0x3] %vm18, %v17
    %s20 = scalar_lea.vmem %s0, 5
    %s21 = smov 3
    %v22 = vld [vmem:[%s20] ss:$8 sm:%s21]
    %23 = vrot.lane.b32.xlu0 %v22, 80
    %v24 = vpop.permute.xlu0 %23
    %vm25 = vcmask 786048
    %26 = vst.msk [vmem:[#allocation0] sm:$0x3] %vm25, %v24
    %s27 = scalar_lea.vmem %s0, 4
    %s28 = smov 3
    %v29 = vld [vmem:[%s27] ss:$8 sm:%s28]
    %30 = vrot.lane.b32.xlu0 %v29, 64
    %v31 = vpop.permute.xlu0 %30
    %vm32 = vcmask 654848
    %33 = vst.msk [vmem:[#allocation0] sm:$0x3] %vm32, %v31
    %s34 = scalar_lea.vmem %s0, 3
    %s35 = smov 3
    %v36 = vld [vmem:[%s34] ss:$8 sm:%s35]
    %37 = vrot.lane.b32.xlu0 %v36, 48
    %v38 = vpop.permute.xlu0 %37
    %vm39 = vcmask 523648
    %40 = vst.msk [vmem:[#allocation0] sm:$0x3] %vm39, %v38
    %s41 = scalar_lea.vmem %s0, 2
    %s42 = smov 3
    %v43 = vld [vmem:[%s41] ss:$8 sm:%s42]
    %44 = vrot.lane.b32.xlu0 %v43, 32
    %v45 = vpop.permute.xlu0 %44
    %vm46 = vcmask 392448
    %47 = vst.msk [vmem:[#allocation0] sm:$0x3] %vm46, %v45
    %s48 = scalar_lea.vmem %s0, 1
    %s49 = smov 3
    %v50 = vld [vmem:[%s48] ss:$8 sm:%s49]
    %51 = vrot.lane.b32.xlu0 %v50, 16
    %v52 = vpop.permute.xlu0 %51
    %vm53 = vcmask 261248
    %54 = vst.msk [vmem:[#allocation0] sm:$0x3] %vm53, %v52
    %s56 = sshll.u32 1, 2
    %s57 = ssub.s32 %s56, 1
    %v59 = vld [vmem:[#allocation0] sm:%s57]
    %s60 = sshll.u32 1, 2
    %s61 = ssub.s32 %s60, 1
    %62 = vst [vmem:[%s1] sm:%s61] %v59

// kernel: eq.8
$region0: #{eq.8}
  %s0 = inlined_call_operand.vmem [shape: s32[2,4], index: 0, kind: input, shape index: {}]
  %s1 = inlined_call_operand.vmem [shape: s32[8], index: 1, kind: output, shape index: {}]
  $region1: #{eq.8} parent=0
    #allocation0 [shape = 'u8[4096]{0}', space=vmem, size = 0x1000, scoped, tag = 'scoped mem for output reshape']
    #allocation1 [shape = 'u8[4096]{0}', space=vmem, size = 0x1000, scoped, tag = 'scoped mem for input reshape']
    %s3 = sshll.u32 1, 2
    %s4 = ssub.s32 %s3, 1
    %v5 = vld [vmem:[%s0] sm:%s4]
    %6 = vst [vmem:[#allocation1] sm:%s4] %v5
    %v7 = vld [vmem:[#allocation1] sm:$0x1]
    %vm8 = vcmask 31744
    %9 = vst.msk [vmem:[#allocation0] sm:$0x1] %vm8, %v7
    %s10 = scalar_lea.vmem [#allocation1], 1
    %v11 = vld [vmem:[%s10] sm:$0x1]
    %12 = vrot.lane.b32.xlu0 %v11, 4
    %v13 = vpop.permute.xlu0 %12
    %vm14 = vcmask 64544
    %15 = vst.msk [vmem:[#allocation0] sm:$0x1] %vm14, %v13
    %s17 = sshll.u32 1, 1
    %s18 = ssub.s32 %s17, 1
    %v20 = vld [vmem:[#allocation0] sm:%s18]
    %s21 = sshll.u32 1, 1
    %s22 = ssub.s32 %s21, 1
    %23 = vst [vmem:[%s1] sm:%s22] %v20

// kernel: squeeze.3
$region0: #{squeeze.3}
  %s0 = inlined_call_operand.vmem [shape: f32[1,8,512], index: 0, kind: input, shape index: {}]
  %s1 = inlined_call_operand.vmem [shape: f32[8,2,16,16], index: 1, kind: output, shape index: {}]
  %v2 = vld [vmem:[%s0] sm:$0xff]
  %vm3 = vcmask 130048
  %4 = vst.msk [vmem:[%s1] sm:$0x1] %vm3, %v2
  %s5 = scalar_lea.vmem %s1, 31
  %6 = vst.msk [vmem:[%s5] sm:$0x2] %vm3, %v2
  %s7 = scalar_lea.vmem %s1, 62
  %8 = vst.msk [vmem:[%s7] sm:$0x4] %vm3, %v2
  %s9 = scalar_lea.vmem %s1, 93
  %10 = vst.msk [vmem:[%s9] sm:$0x8] %vm3, %v2
  %s11 = scalar_lea.vmem %s1, 124
  %12 = vst.msk [vmem:[%s11] sm:$0x10] %vm3, %v2
  %s13 = scalar_lea.vmem %s1, 155
  %14 = vst.msk [vmem:[%s13] sm:$0x20] %vm3, %v2
  %s15 = scalar_lea.vmem %s1, 186
  %16 = vst.msk [vmem:[%s15] sm:$0x40] %vm3, %v2
  %s17 = scalar_lea.vmem %s1, 217
  %18 = vst.msk [vmem:[%s17] sm:$0x80] %vm3, %v2
  %s19 = scalar_lea.vmem %s0, 8
  %v20 = vld [vmem:[%s19] sm:$0xff]
  %vm21 = vcmask 130048
  %s22 = scalar_lea.vmem %s1, 8
  %23 = vst.msk [vmem:[%s22] sm:$0x1] %vm21, %v20
  %s24 = scalar_lea.vmem %s1, 39
  %25 = vst.msk [vmem:[%s24] sm:$0x2] %vm21, %v20
  %s26 = scalar_lea.vmem %s1, 70
  %27 = vst.msk [vmem:[%s26] sm:$0x4] %vm21, %v20
  %s28 = scalar_lea.vmem %s1, 101
  %29 = vst.msk [vmem:[%s28] sm:$0x8] %vm21, %v20
  %s30 = scalar_lea.vmem %s1, 132
  %31 = vst.msk [vmem:[%s30] sm:$0x10] %vm21, %v20
  %s32 = scalar_lea.vmem %s1, 163
  %33 = vst.msk [vmem:[%s32] sm:$0x20] %vm21, %v20
  %s34 = scalar_lea.vmem %s1, 194
  %35 = vst.msk [vmem:[%s34] sm:$0x40] %vm21, %v20
  %s36 = scalar_lea.vmem %s1, 225
  %37 = vst.msk [vmem:[%s36] sm:$0x80] %vm21, %v20
  %s38 = scalar_lea.vmem %s0, 16
  %v39 = vld [vmem:[%s38] sm:$0xff]
  %vm40 = vcmask 130048
  %s41 = scalar_lea.vmem %s1, 16
  %42 = vst.msk [vmem:[%s41] sm:$0x1] %vm40, %v39
  %s43 = scalar_lea.vmem %s1, 47
  %44 = vst.msk [vmem:[%s43] sm:$0x2] %vm40, %v39
  %s45 = scalar_lea.vmem %s1, 78
  %46 = vst.msk [vmem:[%s45] sm:$0x4] %vm40, %v39
  %s47 = scalar_lea.vmem %s1, 109
  %48 = vst.msk [vmem:[%s47] sm:$0x8] %vm40, %v39
  %s49 = scalar_lea.vmem %s1, 140
  %50 = vst.msk [vmem:[%s49] sm:$0x10] %vm40, %v39
  %s51 = scalar_lea.vmem %s1, 171
  %52 = vst.msk [vmem:[%s51] sm:$0x20] %vm40, %v39
  %s53 = scalar_lea.vmem %s1, 202
  %54 = vst.msk [vmem:[%s53] sm:$0x40] %vm40, %v39
  %s55 = scalar_lea.vmem %s1, 233
  %56 = vst.msk [vmem:[%s55] sm:$0x80] %vm40, %v39
  %s57 = scalar_lea.vmem %s0, 24
  %v58 = vld [vmem:[%s57] sm:$0xff]
  %vm59 = vcmask 130048
  %s60 = scalar_lea.vmem %s1, 24
  %61 = vst.msk [vmem:[%s60] sm:$0x1] %vm59, %v58
  %s62 = scalar_lea.vmem %s1, 55
  %63 = vst.msk [vmem:[%s62] sm:$0x2] %vm59, %v58
  %s64 = scalar_lea.vmem %s1, 86
  %65 = vst.msk [vmem:[%s64] sm:$0x4] %vm59, %v58
  %s66 = scalar_lea.vmem %s1, 117
  %67 = vst.msk [vmem:[%s66] sm:$0x8] %vm59, %v58
  %s68 = scalar_lea.vmem %s1, 148
  %69 = vst.msk [vmem:[%s68] sm:$0x10] %vm59, %v58
  %s70 = scalar_lea.vmem %s1, 179
  %71 = vst.msk [vmem:[%s70] sm:$0x20] %vm59, %v58
  %s72 = scalar_lea.vmem %s1, 210
  %73 = vst.msk [vmem:[%s72] sm:$0x40] %vm59, %v58
  %s74 = scalar_lea.vmem %s1, 241
  %75 = vst.msk [vmem:[%s74] sm:$0x80] %vm59, %v58
  %v76 = vld [vmem:[%s0] ss:$8 sm:$0xf]
  %s77 = scalar_lea.vmem %s0, 4294967265
  %v78 = vld [vmem:[%s77] ss:$8 sm:$0xf0]
  %vm79 = vcmask 1047556
  %v80 = vsel %vm79, %v78, %v76
  %81 = vrot.lane.b32.xlu0 %v80, 112
  %v82 = vpop.permute.xlu0 %81
  %vm83 = vcmask 130048
  %s84 = scalar_lea.vmem %s1, 1
  %85 = vst.msk [vmem:[%s84] ss:$8 sm:$0xf] %vm83, %v82
  %s86 = scalar_lea.vmem %s1, 1
  %87 = vst.msk [vmem:[%s86] ss:$8 sm:$0xf0] %vm83, %v82
  %s88 = scalar_lea.vmem %s0, 2
  %v89 = vld [vmem:[%s88] ss:$8 sm:$0xf]
  %s90 = scalar_lea.vmem %s0, 4294967267
  %v91 = vld [vmem:[%s90] ss:$8 sm:$0xf0]
  %vm92 = vcmask 1047556
  %v93 = vsel %vm92, %v91, %v89
  %94 = vrot.lane.b32.xlu0 %v93, 112
  %v95 = vpop.permute.xlu0 %94
  %vm96 = vcmask 130048
  %s97 = scalar_lea.vmem %s1, 65
  %98 = vst.msk [vmem:[%s97] ss:$8 sm:$0xf] %vm96, %v95
  %s99 = scalar_lea.vmem %s1, 65
  %100 = vst.msk [vmem:[%s99] ss:$8 sm:$0xf0] %vm96, %v95
  %s101 = scalar_lea.vmem %s0, 4
  %v102 = vld [vmem:[%s101] ss:$8 sm:$0xf]
  %s103 = scalar_lea.vmem %s0, 4294967269
  %v104 = vld [vmem:[%s103] ss:$8 sm:$0xf0]
  %vm105 = vcmask 1047556
  %v106 = vsel %vm105, %v104, %v102
  %107 = vrot.lane.b32.xlu0 %v106, 112
  %v108 = vpop.permute.xlu0 %107
  %vm109 = vcmask 130048
  %s110 = scalar_lea.vmem %s1, 129
  %111 = vst.msk [vmem:[%s110] ss:$8 sm:$0xf] %vm109, %v108
  %s112 = scalar_lea.vmem %s1, 129
  %113 = vst.msk [vmem:[%s112] ss:$8 sm:$0xf0] %vm109, %v108
  %s114 = scalar_lea.vmem %s0, 6
  %v115 = vld [vmem:[%s114] ss:$8 sm:$0xf]
  %s116 = scalar_lea.vmem %s0, 4294967271
  %v117 = vld [vmem:[%s116] ss:$8 sm:$0xf0]
  %vm118 = vcmask 1047556
  %v119 = vsel %vm118, %v117, %v115
  %120 = vrot.lane.b32.xlu0 %v119, 112
  %v121 = vpop.permute.xlu0 %120
  %vm122 = vcmask 130048
  %s123 = scalar_lea.vmem %s1, 193
  %124 = vst.msk [vmem:[%s123] ss:$8 sm:$0xf] %vm122, %v121
  %s125 = scalar_lea.vmem %s1, 193
  %126 = vst.msk [vmem:[%s125] ss:$8 sm:$0xf0] %vm122, %v121
  %v127 = vld [vmem:[%s0] ss:$8 sm:$0xf]
  %s128 = scalar_lea.vmem %s0, 4294967265
  %v129 = vld [vmem:[%s128] ss:$8 sm:$0xf0]
  %vm130 = vcmask 1047556
  %v131 = vsel %vm130, %v129, %v127
  %132 = vrot.lane.b32.xlu0 %v131, 96
  %v133 = vpop.permute.xlu0 %132
  %vm134 = vcmask 130048
  %s135 = scalar_lea.vmem %s1, 2
  %136 = vst.msk [vmem:[%s135] ss:$8 sm:$0xf] %vm134, %v133
  %s137 = scalar_lea.vmem %s1, 2
  %138 = vst.msk [vmem:[%s137] ss:$8 sm:$0xf0] %vm134, %v133
  %s139 = scalar_lea.vmem %s0, 2
  %v140 = vld [vmem:[%s139] ss:$8 sm:$0xf]
  %s141 = scalar_lea.vmem %s0, 4294967267
  %v142 = vld [vmem:[%s141] ss:$8 sm:$0xf0]
  %vm143 = vcmask 1047556
  %v144 = vsel %vm143, %v142, %v140
  %145 = vrot.lane.b32.xlu0 %v144, 96
  %v146 = vpop.permute.xlu0 %145
  %vm147 = vcmask 130048
  %s148 = scalar_lea.vmem %s1, 66
  %149 = vst.msk [vmem:[%s148] ss:$8 sm:$0xf] %vm147, %v146
  %s150 = scalar_lea.vmem %s1, 66
  %151 = vst.msk [vmem:[%s150] ss:$8 sm:$0xf0] %vm147, %v146
  %s152 = scalar_lea.vmem %s0, 4
  %v153 = vld [vmem:[%s152] ss:$8 sm:$0xf]
  %s154 = scalar_lea.vmem %s0, 4294967269
  %v155 = vld [vmem:[%s154] ss:$8 sm:$0xf0]
  %vm156 = vcmask 1047556
  %v157 = vsel %vm156, %v155, %v153
  %158 = vrot.lane.b32.xlu0 %v157, 96
  %v159 = vpop.permute.xlu0 %158
  %vm160 = vcmask 130048
  %s161 = scalar_lea.vmem %s1, 130
  %162 = vst.msk [vmem:[%s161] ss:$8 sm:$0xf] %vm160, %v159
  %s163 = scalar_lea.vmem %s1, 130
  %164 = vst.msk [vmem:[%s163] ss:$8 sm:$0xf0] %vm160, %v159
  %s165 = scalar_lea.vmem %s0, 6
  %v166 = vld [vmem:[%s165] ss:$8 sm:$0xf]
  %s167 = scalar_lea.vmem %s0, 4294967271
  %v168 = vld [vmem:[%s167] ss:$8 sm:$0xf0]
  %vm169 = vcmask 1047556
  %v170 = vsel %vm169, %v168, %v166
  %171 = vrot.lane.b32.xlu0 %v170, 96
  %v172 = vpop.permute.xlu0 %171
  %vm173 = vcmask 130048
  %s174 = scalar_lea.vmem %s1, 194
  %175 = vst.msk [vmem:[%s174] ss:$8 sm:$0xf] %vm173, %v172
  %s176 = scalar_lea.vmem %s1, 194
  %177 = vst.msk [vmem:[%s176] ss:$8 sm:$0xf0] %vm173, %v172
  %v178 = vld [vmem:[%s0] ss:$8 sm:$0xf]
  %s179 = scalar_lea.vmem %s0, 4294967265
  %v180 = vld [vmem:[%s179] ss:$8 sm:$0xf0]
  %vm181 = vcmask 1047556
  %v182 = vsel %vm181, %v180, %v178
  %183 = vrot.lane.b32.xlu0 %v182, 80
  %v184 = vpop.permute.xlu0 %183
  %vm185 = vcmask 130048
  %s186 = scalar_lea.vmem %s1, 3
  %187 = vst.msk [vmem:[%s186] ss:$8 sm:$0xf] %vm185, %v184
  %s188 = scalar_lea.vmem %s1, 3
  %189 = vst.msk [vmem:[%s188] ss:$8 sm:$0xf0] %vm185, %v184
  %s190 = scalar_lea.vmem %s0, 2
  %v191 = vld [vmem:[%s190] ss:$8 sm:$0xf]
  %s192 = scalar_lea.vmem %s0, 4294967267
  %v193 = vld [vmem:[%s192] ss:$8 sm:$0xf0]
  %vm194 = vcmask 1047556
  %v195 = vsel %vm194, %v193, %v191
  %196 = vrot.lane.b32.xlu0 %v195, 80
  %v197 = vpop.permute.xlu0 %196
  %vm198 = vcmask 130048
  %s199 = scalar_lea.vmem %s1, 67
  %200 = vst.msk [vmem:[%s199] ss:$8 sm:$0xf] %vm198, %v197
  %s201 = scalar_lea.vmem %s1, 67
  %202 = vst.msk [vmem:[%s201] ss:$8 sm:$0xf0] %vm198, %v197
  %s203 = scalar_lea.vmem %s0, 4
  %v204 = vld [vmem:[%s203] ss:$8 sm:$0xf]
  %s205 = scalar_lea.vmem %s0, 4294967269
  %v206 = vld [vmem:[%s205] ss:$8 sm:$0xf0]
  %vm207 = vcmask 1047556
  %v208 = vsel %vm207, %v206, %v204
  %209 = vrot.lane.b32.xlu0 %v208, 80
  %v210 = vpop.permute.xlu0 %209
  %vm211 = vcmask 130048
  %s212 = scalar_lea.vmem %s1, 131
  %213 = vst.msk [vmem:[%s212] ss:$8 sm:$0xf] %vm211, %v210
  %s214 = scalar_lea.vmem %s1, 131
  %215 = vst.msk [vmem:[%s214] ss:$8 sm:$0xf0] %vm211, %v210
  %s216 = scalar_lea.vmem %s0, 6
  %v217 = vld [vmem:[%s216] ss:$8 sm:$0xf]
  %s218 = scalar_lea.vmem %s0, 4294967271
  %v219 = vld [vmem:[%s218] ss:$8 sm:$0xf0]
  %vm220 = vcmask 1047556
  %v221 = vsel %vm220, %v219, %v217
  %222 = vrot.lane.b32.xlu0 %v221, 80
  %v223 = vpop.permute.xlu0 %222
  %vm224 = vcmask 130048
  %s225 = scalar_lea.vmem %s1, 195
  %226 = vst.msk [vmem:[%s225] ss:$8 sm:$0xf] %vm224, %v223
  %s227 = scalar_lea.vmem %s1, 195
  %228 = vst.msk [vmem:[%s227] ss:$8 sm:$0xf0] %vm224, %v223
  %v229 = vld [vmem:[%s0] ss:$8 sm:$0xf]
  %s230 = scalar_lea.vmem %s0, 4294967265
  %v231 = vld [vmem:[%s230] ss:$8 sm:$0xf0]
  %vm232 = vcmask 1047556
  %v233 = vsel %vm232, %v231, %v229
  %234 = vrot.lane.b32.xlu0 %v233, 64
  %v235 = vpop.permute.xlu0 %234
  %vm236 = vcmask 130048
  %s237 = scalar_lea.vmem %s1, 4
  %238 = vst.msk [vmem:[%s237] ss:$8 sm:$0xf] %vm236, %v235
  %s239 = scalar_lea.vmem %s1, 4
  %240 = vst.msk [vmem:[%s239] ss:$8 sm:$0xf0] %vm236, %v235
  %s241 = scalar_lea.vmem %s0, 2
  %v242 = vld [vmem:[%s241] ss:$8 sm:$0xf]
  %s243 = scalar_lea.vmem %s0, 4294967267
  %v244 = vld [vmem:[%s243] ss:$8 sm:$0xf0]
  %vm245 = vcmask 1047556
  %v246 = vsel %vm245, %v244, %v242
  %247 = vrot.lane.b32.xlu0 %v246, 64
  %v248 = vpop.permute.xlu0 %247
  %vm249 = vcmask 130048
  %s250 = scalar_lea.vmem %s1, 68
  %251 = vst.msk [vmem:[%s250] ss:$8 sm:$0xf] %vm249, %v248
  %s252 = scalar_lea.vmem %s1, 68
  %253 = vst.msk [vmem:[%s252] ss:$8 sm:$0xf0] %vm249, %v248
  %s254 = scalar_lea.vmem %s0, 4
  %v255 = vld [vmem:[%s254] ss:$8 sm:$0xf]
  %s256 = scalar_lea.vmem %s0, 4294967269
  %v257 = vld [vmem:[%s256] ss:$8 sm:$0xf0]
  %vm258 = vcmask 1047556
  %v259 = vsel %vm258, %v257, %v255
  %260 = vrot.lane.b32.xlu0 %v259, 64
  %v261 = vpop.permute.xlu0 %260
  %vm262 = vcmask 130048
  %s263 = scalar_lea.vmem %s1, 132
  %264 = vst.msk [vmem:[%s263] ss:$8 sm:$0xf] %vm262, %v261
  %s265 = scalar_lea.vmem %s1, 132
  %266 = vst.msk [vmem:[%s265] ss:$8 sm:$0xf0] %vm262, %v261
  %s267 = scalar_lea.vmem %s0, 6
  %v268 = vld [vmem:[%s267] ss:$8 sm:$0xf]
  %s269 = scalar_lea.vmem %s0, 4294967271
  %v270 = vld [vmem:[%s269] ss:$8 sm:$0xf0]
  %vm271 = vcmask 1047556
  %v272 = vsel %vm271, %v270, %v268
  %273 = vrot.lane.b32.xlu0 %v272, 64
  %v274 = vpop.permute.xlu0 %273
  %vm275 = vcmask 130048
  %s276 = scalar_lea.vmem %s1, 196
  %277 = vst.msk [vmem:[%s276] ss:$8 sm:$0xf] %vm275, %v274
  %s278 = scalar_lea.vmem %s1, 196
  %279 = vst.msk [vmem:[%s278] ss:$8 sm:$0xf0] %vm275, %v274
  %v280 = vld [vmem:[%s0] ss:$8 sm:$0xf]
  %s281 = scalar_lea.vmem %s0, 4294967265
  %v282 = vld [vmem:[%s281] ss:$8 sm:$0xf0]
  %vm283 = vcmask 1047556
  %v284 = vsel %vm283, %v282, %v280
  %285 = vrot.lane.b32.xlu0 %v284, 48
  %v286 = vpop.permute.xlu0 %285
  %vm287 = vcmask 130048
  %s288 = scalar_lea.vmem %s1, 5
  %289 = vst.msk [vmem:[%s288] ss:$8 sm:$0xf] %vm287, %v286
  %s290 = scalar_lea.vmem %s1, 5
  %291 = vst.msk [vmem:[%s290] ss:$8 sm:$0xf0] %vm287, %v286
  %s292 = scalar_lea.vmem %s0, 2
  %v293 = vld [vmem:[%s292] ss:$8 sm:$0xf]
  %s294 = scalar_lea.vmem %s0, 4294967267
  %v295 = vld [vmem:[%s294] ss:$8 sm:$0xf0]
  %vm296 = vcmask 1047556
  %v297 = vsel %vm296, %v295, %v293
  %298 = vrot.lane.b32.xlu0 %v297, 48
  %v299 = vpop.permute.xlu0 %298
  %vm300 = vcmask 130048
  %s301 = scalar_lea.vmem %s1, 69
  %302 = vst.msk [vmem:[%s301] ss:$8 sm:$0xf] %vm300, %v299
  %s303 = scalar_lea.vmem %s1, 69
  %304 = vst.msk [vmem:[%s303] ss:$8 sm:$0xf0] %vm300, %v299
  %s305 = scalar_lea.vmem %s0, 4
  %v306 = vld [vmem:[%s305] ss:$8 sm:$0xf]
  %s307 = scalar_lea.vmem %s0, 4294967269
  %v308 = vld [vmem:[%s307] ss:$8 sm:$0xf0]
  %vm309 = vcmask 1047556
  %v310 = vsel %vm309, %v308, %v306
  %311 = vrot.lane.b32.xlu0 %v310, 48
  %v312 = vpop.permute.xlu0 %311
  %vm313 = vcmask 130048
  %s314 = scalar_lea.vmem %s1, 133
  %315 = vst.msk [vmem:[%s314] ss:$8 sm:$0xf] %vm313, %v312
  %s316 = scalar_lea.vmem %s1, 133
  %317 = vst.msk [vmem:[%s316] ss:$8 sm:$0xf0] %vm313, %v312
  %s318 = scalar_lea.vmem %s0, 6
  %v319 = vld [vmem:[%s318] ss:$8 sm:$0xf]
  %s320 = scalar_lea.vmem %s0, 4294967271
  %v321 = vld [vmem:[%s320] ss:$8 sm:$0xf0]
  %vm322 = vcmask 1047556
  %v323 = vsel %vm322, %v321, %v319
  %324 = vrot.lane.b32.xlu0 %v323, 48
  %v325 = vpop.permute.xlu0 %324
  %vm326 = vcmask 130048
  %s327 = scalar_lea.vmem %s1, 197
  %328 = vst.msk [vmem:[%s327] ss:$8 sm:$0xf] %vm326, %v325
  %s329 = scalar_lea.vmem %s1, 197
  %330 = vst.msk [vmem:[%s329] ss:$8 sm:$0xf0] %vm326, %v325
  %v331 = vld [vmem:[%s0] ss:$8 sm:$0xf]
  %s332 = scalar_lea.vmem %s0, 4294967265
  %v333 = vld [vmem:[%s332] ss:$8 sm:$0xf0]
  %vm334 = vcmask 1047556
  %v335 = vsel %vm334, %v333, %v331
  %336 = vrot.lane.b32.xlu0 %v335, 32
  %v337 = vpop.permute.xlu0 %336
  %vm338 = vcmask 130048
  %s339 = scalar_lea.vmem %s1, 6
  %340 = vst.msk [vmem:[%s339] ss:$8 sm:$0xf] %vm338, %v337
  %s341 = scalar_lea.vmem %s1, 6
  %342 = vst.msk [vmem:[%s341] ss:$8 sm:$0xf0] %vm338, %v337
  %s343 = scalar_lea.vmem %s0, 2
  %v344 = vld [vmem:[%s343] ss:$8 sm:$0xf]
  %s345 = scalar_lea.vmem %s0, 4294967267
  %v346 = vld [vmem:[%s345] ss:$8 sm:$0xf0]
  %vm347 = vcmask 1047556
  %v348 = vsel %vm347, %v346, %v344
  %349 = vrot.lane.b32.xlu0 %v348, 32
  %v350 = vpop.permute.xlu0 %349
  %vm351 = vcmask 130048
  %s352 = scalar_lea.vmem %s1, 70
  %353 = vst.msk [vmem:[%s352] ss:$8 sm:$0xf] %vm351, %v350
  %s354 = scalar_lea.vmem %s1, 70
  %355 = vst.msk [vmem:[%s354] ss:$8 sm:$0xf0] %vm351, %v350
  %s356 = scalar_lea.vmem %s0, 4
  %v357 = vld [vmem:[%s356] ss:$8 sm:$0xf]
  %s358 = scalar_lea.vmem %s0, 4294967269
  %v359 = vld [vmem:[%s358] ss:$8 sm:$0xf0]
  %vm360 = vcmask 1047556
  %v361 = vsel %vm360, %v359, %v357
  %362 = vrot.lane.b32.xlu0 %v361, 32
  %v363 = vpop.permute.xlu0 %362
  %vm364 = vcmask 130048
  %s365 = scalar_lea.vmem %s1, 134
  %366 = vst.msk [vmem:[%s365] ss:$8 sm:$0xf] %vm364, %v363
  %s367 = scalar_lea.vmem %s1, 134
  %368 = vst.msk [vmem:[%s367] ss:$8 sm:$0xf0] %vm364, %v363
  %s369 = scalar_lea.vmem %s0, 6
  %v370 = vld [vmem:[%s369] ss:$8 sm:$0xf]
  %s371 = scalar_lea.vmem %s0, 4294967271
  %v372 = vld [vmem:[%s371] ss:$8 sm:$0xf0]
  %vm373 = vcmask 1047556
  %v374 = vsel %vm373, %v372, %v370
  %375 = vrot.lane.b32.xlu0 %v374, 32
  %v376 = vpop.permute.xlu0 %375
  %vm377 = vcmask 130048
  %s378 = scalar_lea.vmem %s1, 198
  %379 = vst.msk [vmem:[%s378] ss:$8 sm:$0xf] %vm377, %v376
  %s380 = scalar_lea.vmem %s1, 198
  %381 = vst.msk [vmem:[%s380] ss:$8 sm:$0xf0] %vm377, %v376
  %v382 = vld [vmem:[%s0] ss:$8 sm:$0xf]
  %s383 = scalar_lea.vmem %s0, 4294967265
  %v384 = vld [vmem:[%s383] ss:$8 sm:$0xf0]
  %vm385 = vcmask 1047556
  %v386 = vsel %vm385, %v384, %v382
  %387 = vrot.lane.b32.xlu0 %v386, 16
  %v388 = vpop.permute.xlu0 %387
  %vm389 = vcmask 130048
  %s390 = scalar_lea.vmem %s1, 7
  %391 = vst.msk [vmem:[%s390] ss:$8 sm:$0xf] %vm389, %v388
  %s392 = scalar_lea.vmem %s1, 7
  %393 = vst.msk [vmem:[%s392] ss:$8 sm:$0xf0] %vm389, %v388
  %s394 = scalar_lea.vmem %s0, 2
  %v395 = vld [vmem:[%s394] ss:$8 sm:$0xf]
  %s396 = scalar_lea.vmem %s0, 4294967267
  %v397 = vld [vmem:[%s396] ss:$8 sm:$0xf0]
  %vm398 = vcmask 1047556
  %v399 = vsel %vm398, %v397, %v395
  %400 = vrot.lane.b32.xlu0 %v399, 16
  %v401 = vpop.permute.xlu0 %400
  %vm402 = vcmask 130048
  %s403 = scalar_lea.vmem %s1, 71
  %404 = vst.msk [vmem:[%s403] ss:$8 sm:$0xf] %vm402, %v401
  %s405 = scalar_lea.vmem %s1, 71
  %406 = vst.msk [vmem:[%s405] ss:$8 sm:$0xf0] %vm402, %v401
  %s407 = scalar_lea.vmem %s0, 4
  %v408 = vld [vmem:[%s407] ss:$8 sm:$0xf]
  %s409 = scalar_lea.vmem %s0, 4294967269
  %v410 = vld [vmem:[%s409] ss:$8 sm:$0xf0]
  %vm411 = vcmask 1047556
  %v412 = vsel %vm411, %v410, %v408
  %413 = vrot.lane.b32.xlu0 %v412, 16
  %v414 = vpop.permute.xlu0 %413
  %vm415 = vcmask 130048
  %s416 = scalar_lea.vmem %s1, 135
  %417 = vst.msk [vmem:[%s416] ss:$8 sm:$0xf] %vm415, %v414
  %s418 = scalar_lea.vmem %s1, 135
  %419 = vst.msk [vmem:[%s418] ss:$8 sm:$0xf0] %vm415, %v414
  %s420 = scalar_lea.vmem %s0, 6
  %v421 = vld [vmem:[%s420] ss:$8 sm:$0xf]
  %s422 = scalar_lea.vmem %s0, 4294967271
  %v423 = vld [vmem:[%s422] ss:$8 sm:$0xf0]
  %vm424 = vcmask 1047556
  %v425 = vsel %vm424, %v423, %v421
  %426 = vrot.lane.b32.xlu0 %v425, 16
  %v427 = vpop.permute.xlu0 %426
  %vm428 = vcmask 130048
  %s429 = scalar_lea.vmem %s1, 199
  %430 = vst.msk [vmem:[%s429] ss:$8 sm:$0xf] %vm428, %v427
  %s431 = scalar_lea.vmem %s1, 199
  %432 = vst.msk [vmem:[%s431] ss:$8 sm:$0xf0] %vm428, %v427

// kernel: spfi_forward.1
$region0: #{spfi_forward.1}
  #allocation0 [shape = 'u32[]', space=smem, size = 0x4, offset = 0x4, fixed_abs, tag = 'smem constant byte address 0x4 - core index']
  #allocation1 [shape = 'u32[144,128]{1,0:T(1,128)}', space=vmem, size = 0x12000, scoped, tag = 'internal scratch']
  %s0 = inlined_call_operand.vmem [shape: f32[2,8,512], index: 0, kind: input, shape index: {}]
  %s1 = inlined_call_operand.vmem [shape: f32[8,512], index: 1, kind: input, shape index: {}]
  %s2 = inlined_call_operand.vmem [shape: s32[2,512], index: 2, kind: input, shape index: {}]
  %s3 = inlined_call_operand.vmem [shape: f32[8,8], index: 3, kind: input, shape index: {}]
  %s4 = inlined_call_operand.vmem [shape: f32[2,184,1], index: 4, kind: input, shape index: {}]
  %s5 = inlined_call_operand.vmem [shape: f32[2,56,9], index: 5, kind: input, shape index: {}]
  %s6 = inlined_call_operand.vmem [shape: f32[2,72,16], index: 6, kind: input, shape index: {}]
  %s7 = inlined_call_operand.vmem [shape: f32[2,8,512], index: 7, kind: output, shape index: {}]
  %s8 = sld [smem:[#allocation0]]
  $region61: #{spfi_forward.1} parent=0
    _
  %s10 = ssub.s32 1, %s8
  %s11 = scalar_select 0, %s10, %s8
  loop: start=0, step=1, limit=4
  $region2: #{spfi_forward.1} parent=0 // loop_pre_header
    _
  $region3: #{spfi_forward.1} parent=0 // loop_header
    %s13 = sphi 0, %s17
    %p14 = scmp.ge.s32.totalorder %s13, 4
    %s23 = sphi 0, %s25
    %s26 = sphi 0, %s23
    %s27 = sphi 0, %s26
    %s43 = sphi 0, %s27
    %s47 = sphi 0, %s47
    %s49 = sphi 0, %s47
    %s50 = sphi 0, %s49
    %s64 = sphi 0, %s50
    %s68 = sphi 0, %s68
    %s70 = sphi 0, %s68
    %s71 = sphi 0, %s70
    %s85 = sphi 0, %s71
    %s89 = sphi 0, %s89
    %s91 = sphi 0, %s89
    %s92 = sphi 0, %s91
    %s106 = sphi 0, %s92
    %s112 = sphi 0, %s114
    %s115 = sphi 0, %s112
    %s116 = sphi 0, %s115
    %s132 = sphi 0, %s116
    %s138 = sphi 0, %s140
    %s141 = sphi 0, %s138
    %s142 = sphi 0, %s141
    %s158 = sphi 0, %s142
    %s164 = sphi 0, %s166
    %s167 = sphi 0, %s164
    %s168 = sphi 0, %s167
    %s184 = sphi 0, %s168
    %s190 = sphi 0, %s192
    %s193 = sphi 0, %s190
    %s194 = sphi 0, %s193
    %s210 = sphi 0, %s194
  $region4: #{spfi_forward.1} parent=0 // loop_header_branch
    %16 = sbr.rel (%p14) target = $region8
  $region5: #{spfi_forward.1} parent=0 // loop_body
    %s18 = ssub.s32 %s13, 1
    %s19 = ssub.s32 %s13, 2
    %s20 = sadd.s32 %s13, 1
    %s21 = ssub.s32 %s13, %s20
    %p22 = scmp.eq.s32.totalorder %s21, 0
    %s24 = sadd.s32 %s23, 1
    %s25 = scalar_select %p22, %s23, %s24
    %p28 = pneg %p22
    %p29 = scmp.eq.s32.totalorder %s13, 1
    %p30 = por %p28, %p29
    %p31 = scmp.ne.s32.totalorder %s23, %s26
    %p32 = scmp.eq.s32.totalorder %s13, 0
    %p33 = por %p31, %p32
    %p34 = scmp.ne.s32.totalorder %s23, %s26
    %p35 = scmp.eq.s32.totalorder %s18, 1
    %p36 = por %p34, %p35
    %p37 = scmp.ne.s32.totalorder %s26, %s27
    %p38 = scmp.eq.s32.totalorder %s18, 0
    %p39 = por %p37, %p38
    %p40 = scmp.ne.s32.totalorder %s26, %s27
    %p41 = scmp.eq.s32.totalorder %s19, 1
    %p42 = por %p40, %p41
    %p44 = scmp.ne.s32.totalorder %s27, %s43
    %p45 = scmp.eq.s32.totalorder %s19, 0
    %p46 = por %p44, %p45
    %s48 = sadd.s32 %s47, 1
    %p51 = scmp.eq.s32.totalorder %s13, 1
    %p52 = scmp.ne.s32.totalorder %s47, %s49
    %p53 = scmp.eq.s32.totalorder %s13, 0
    %p54 = por %p52, %p53
    %p55 = scmp.ne.s32.totalorder %s47, %s49
    %p56 = scmp.eq.s32.totalorder %s18, 1
    %p57 = por %p55, %p56
    %p58 = scmp.ne.s32.totalorder %s49, %s50
    %p59 = scmp.eq.s32.totalorder %s18, 0
    %p60 = por %p58, %p59
    %p61 = scmp.ne.s32.totalorder %s49, %s50
    %p62 = scmp.eq.s32.totalorder %s19, 1
    %p63 = por %p61, %p62
    %p65 = scmp.ne.s32.totalorder %s50, %s64
    %p66 = scmp.eq.s32.totalorder %s19, 0
    %p67 = por %p65, %p66
    %s69 = sadd.s32 %s68, 1
    %p72 = scmp.eq.s32.totalorder %s13, 1
    %p73 = scmp.ne.s32.totalorder %s68, %s70
    %p74 = scmp.eq.s32.totalorder %s13, 0
    %p75 = por %p73, %p74
    %p76 = scmp.ne.s32.totalorder %s68, %s70
    %p77 = scmp.eq.s32.totalorder %s18, 1
    %p78 = por %p76, %p77
    %p79 = scmp.ne.s32.totalorder %s70, %s71
    %p80 = scmp.eq.s32.totalorder %s18, 0
    %p81 = por %p79, %p80
    %p82 = scmp.ne.s32.totalorder %s70, %s71
    %p83 = scmp.eq.s32.totalorder %s19, 1
    %p84 = por %p82, %p83
    %p86 = scmp.ne.s32.totalorder %s71, %s85
    %p87 = scmp.eq.s32.totalorder %s19, 0
    %p88 = por %p86, %p87
    %s90 = sadd.s32 %s89, 1
    %p93 = scmp.eq.s32.totalorder %s13, 1
    %p94 = scmp.ne.s32.totalorder %s89, %s91
    %p95 = scmp.eq.s32.totalorder %s13, 0
    %p96 = por %p94, %p95
    %p97 = scmp.ne.s32.totalorder %s89, %s91
    %p98 = scmp.eq.s32.totalorder %s18, 1
    %p99 = por %p97, %p98
    %p100 = scmp.ne.s32.totalorder %s91, %s92
    %p101 = scmp.eq.s32.totalorder %s18, 0
    %p102 = por %p100, %p101
    %p103 = scmp.ne.s32.totalorder %s91, %s92
    %p104 = scmp.eq.s32.totalorder %s19, 1
    %p105 = por %p103, %p104
    %p107 = scmp.ne.s32.totalorder %s92, %s106
    %p108 = scmp.eq.s32.totalorder %s19, 0
    %p109 = por %p107, %p108
    %s110 = ssub.s32 %s13, %s20
    %p111 = scmp.eq.s32.totalorder %s110, 0
    %s113 = sadd.s32 %s112, 1
    %s114 = scalar_select %p111, %s112, %s113
    %p117 = pneg %p111
    %p118 = scmp.eq.s32.totalorder %s13, 1
    %p119 = por %p117, %p118
    %p120 = scmp.ne.s32.totalorder %s112, %s115
    %p121 = scmp.eq.s32.totalorder %s13, 0
    %p122 = por %p120, %p121
    %p123 = scmp.ne.s32.totalorder %s112, %s115
    %p124 = scmp.eq.s32.totalorder %s18, 1
    %p125 = por %p123, %p124
    %p126 = scmp.ne.s32.totalorder %s115, %s116
    %p127 = scmp.eq.s32.totalorder %s18, 0
    %p128 = por %p126, %p127
    %p129 = scmp.ne.s32.totalorder %s115, %s116
    %p130 = scmp.eq.s32.totalorder %s19, 1
    %p131 = por %p129, %p130
    %p133 = scmp.ne.s32.totalorder %s116, %s132
    %p134 = scmp.eq.s32.totalorder %s19, 0
    %p135 = por %p133, %p134
    %s136 = ssub.s32 %s13, %s20
    %p137 = scmp.eq.s32.totalorder %s136, 0
    %s139 = sadd.s32 %s138, 1
    %s140 = scalar_select %p137, %s138, %s139
    %p143 = pneg %p137
    %p144 = scmp.eq.s32.totalorder %s13, 1
    %p145 = por %p143, %p144
    %p146 = scmp.ne.s32.totalorder %s138, %s141
    %p147 = scmp.eq.s32.totalorder %s13, 0
    %p148 = por %p146, %p147
    %p149 = scmp.ne.s32.totalorder %s138, %s141
    %p150 = scmp.eq.s32.totalorder %s18, 1
    %p151 = por %p149, %p150
    %p152 = scmp.ne.s32.totalorder %s141, %s142
    %p153 = scmp.eq.s32.totalorder %s18, 0
    %p154 = por %p152, %p153
    %p155 = scmp.ne.s32.totalorder %s141, %s142
    %p156 = scmp.eq.s32.totalorder %s19, 1
    %p157 = por %p155, %p156
    %p159 = scmp.ne.s32.totalorder %s142, %s158
    %p160 = scmp.eq.s32.totalorder %s19, 0
    %p161 = por %p159, %p160
    %s162 = ssub.s32 %s13, %s20
    %p163 = scmp.eq.s32.totalorder %s162, 0
    %s165 = sadd.s32 %s164, 1
    %s166 = scalar_select %p163, %s164, %s165
    %p169 = pneg %p163
    %p170 = scmp.eq.s32.totalorder %s13, 1
    %p171 = por %p169, %p170
    %p172 = scmp.ne.s32.totalorder %s164, %s167
    %p173 = scmp.eq.s32.totalorder %s13, 0
    %p174 = por %p172, %p173
    %p175 = scmp.ne.s32.totalorder %s164, %s167
    %p176 = scmp.eq.s32.totalorder %s18, 1
    %p177 = por %p175, %p176
    %p178 = scmp.ne.s32.totalorder %s167, %s168
    %p179 = scmp.eq.s32.totalorder %s18, 0
    %p180 = por %p178, %p179
    %p181 = scmp.ne.s32.totalorder %s167, %s168
    %p182 = scmp.eq.s32.totalorder %s19, 1
    %p183 = por %p181, %p182
    %p185 = scmp.ne.s32.totalorder %s168, %s184
    %p186 = scmp.eq.s32.totalorder %s19, 0
    %p187 = por %p185, %p186
    %s188 = ssub.s32 %s13, %s20
    %p189 = scmp.eq.s32.totalorder %s188, 0
    %s191 = sadd.s32 %s190, 1
    %s192 = scalar_select %p189, %s190, %s191
    %p195 = pneg %p189
    %p196 = scmp.eq.s32.totalorder %s13, 1
    %p197 = por %p195, %p196
    %p198 = scmp.ne.s32.totalorder %s190, %s193
    %p199 = scmp.eq.s32.totalorder %s13, 0
    %p200 = por %p198, %p199
    %p201 = scmp.ne.s32.totalorder %s190, %s193
    %p202 = scmp.eq.s32.totalorder %s18, 1
    %p203 = por %p201, %p202
    %p204 = scmp.ne.s32.totalorder %s193, %s194
    %p205 = scmp.eq.s32.totalorder %s18, 0
    %p206 = por %p204, %p205
    %p207 = scmp.ne.s32.totalorder %s193, %s194
    %p208 = scmp.eq.s32.totalorder %s19, 1
    %p209 = por %p207, %p208
    %p211 = scmp.ne.s32.totalorder %s194, %s210
    %p212 = scmp.eq.s32.totalorder %s19, 0
    %p213 = por %p211, %p212
    %p214 = scmp.le.s32.totalorder 1, %s13
    %p215 = scmp.lt.s32.totalorder %s13, 3
    %p216 = pnand %p214, %p215
    %p217 = pneg %p216
    // Predicated region
    $region9: #{spfi_forward.1} parent=5 // pred_check
      _
    $region10: #{spfi_forward.1} parent=5 // pred_check_branch
      %219 = sbr.rel (%p216) target = $region12
    $region11: #{spfi_forward.1} parent=5 // pred_region
      %s220 = ssub.s32 %s13, 1
      // Predicated region
      $region13: #{spfi_forward.1} parent=11 // pred_check
        %p221 = pneg %p60
      $region14: #{spfi_forward.1} parent=11 // pred_check_branch
        %223 = sbr.rel (%p221) target = $region16
      $region15: #{spfi_forward.1} parent=11 // pred_region
        _
      $region16: #{spfi_forward.1} parent=11 // pred_fallthru
        _
      // Predicated region
      $region17: #{spfi_forward.1} parent=11 // pred_check
        %p224 = pneg %p81
      $region18: #{spfi_forward.1} parent=11 // pred_check_branch
        %226 = sbr.rel (%p224) target = $region20
      $region19: #{spfi_forward.1} parent=11 // pred_region
        _
      $region20: #{spfi_forward.1} parent=11 // pred_fallthru
        _
      // Predicated region
      $region21: #{spfi_forward.1} parent=11 // pred_check
        %p227 = pneg %p102
      $region22: #{spfi_forward.1} parent=11 // pred_check_branch
        %229 = sbr.rel (%p227) target = $region24
      $region23: #{spfi_forward.1} parent=11 // pred_region
        _
      $region24: #{spfi_forward.1} parent=11 // pred_fallthru
        _
    $region12: #{spfi_forward.1} parent=5 // pred_fallthru
      _
    %p230 = scmp.lt.s32.totalorder %s13, 2
    // Predicated region
    $region25: #{spfi_forward.1} parent=5 // pred_check
      %p231 = pneg %p230
    $region26: #{spfi_forward.1} parent=5 // pred_check_branch
      %233 = sbr.rel (%p231) target = $region28
    $region27: #{spfi_forward.1} parent=5 // pred_region
      // Predicated region
      $region29: #{spfi_forward.1} parent=27 // pred_check
        %p234 = pneg %p33
      $region30: #{spfi_forward.1} parent=27 // pred_check_branch
        %236 = sbr.rel (%p234) target = $region32
      $region31: #{spfi_forward.1} parent=27 // pred_region
        %p237 = scmp.lt.s32.totalorder %s13, 1
        %s238 = scalar_select %p237, %s13, 1
        %s239 = smul.addr %s238, 4
        %s240 = smul.addr %s239, 8
        %s241 = scalar_lea.vmem %s0, %s240
      $region32: #{spfi_forward.1} parent=27 // pred_fallthru
        _
      // Predicated region
      $region33: #{spfi_forward.1} parent=27 // pred_check
        %p242 = pneg %p122
      $region34: #{spfi_forward.1} parent=27 // pred_check_branch
        %244 = sbr.rel (%p242) target = $region36
      $region35: #{spfi_forward.1} parent=27 // pred_region
        %p245 = scmp.lt.s32.totalorder %s13, 1
        %s246 = scalar_select %p245, %s13, 1
        %s247 = smul.addr %s246, 23
        %s248 = smul.addr %s247, 8
        %s249 = scalar_lea.vmem %s4, %s248
      $region36: #{spfi_forward.1} parent=27 // pred_fallthru
        _
      // Predicated region
      $region37: #{spfi_forward.1} parent=27 // pred_check
        %p250 = pneg %p148
      $region38: #{spfi_forward.1} parent=27 // pred_check_branch
        %252 = sbr.rel (%p250) target = $region40
      $region39: #{spfi_forward.1} parent=27 // pred_region
        %p253 = scmp.lt.s32.totalorder %s13, 1
        %s254 = scalar_select %p253, %s13, 1
        %s255 = smul.addr %s254, 7
        %s256 = smul.addr %s255, 8
        %s257 = scalar_lea.vmem %s5, %s256
      $region40: #{spfi_forward.1} parent=27 // pred_fallthru
        _
      // Predicated region
      $region41: #{spfi_forward.1} parent=27 // pred_check
        %p258 = pneg %p174
      $region42: #{spfi_forward.1} parent=27 // pred_check_branch
        %260 = sbr.rel (%p258) target = $region44
      $region43: #{spfi_forward.1} parent=27 // pred_region
        %p261 = scmp.lt.s32.totalorder %s13, 1
        %s262 = scalar_select %p261, %s13, 1
        %s263 = smul.addr %s262, 9
        %s264 = smul.addr %s263, 8
        %s265 = scalar_lea.vmem %s6, %s264
      $region44: #{spfi_forward.1} parent=27 // pred_fallthru
        _
    $region28: #{spfi_forward.1} parent=5 // pred_fallthru
      _
    %p266 = scmp.le.s32.totalorder 1, %s13
    %p267 = scmp.lt.s32.totalorder %s13, 3
    %p268 = pnand %p266, %p267
    %p269 = pneg %p268
    // Predicated region
    $region45: #{spfi_forward.1} parent=5 // pred_check
      _
    $region46: #{spfi_forward.1} parent=5 // pred_check_branch
      %271 = sbr.rel (%p268) target = $region48
    $region47: #{spfi_forward.1} parent=5 // pred_region
      %s272 = ssub.s32 %s13, 1
      %p273 = scmp.lt.s32.totalorder %s18, 1
      %s274 = scalar_select %p273, %s18, 1
      %s275 = smul.addr %s274, 4
      %s276 = smul.addr %s275, 8
      %s277 = scalar_lea.vmem %s0, %s276
      %p278 = pneg %p39
      %p279 = pneg %p36
      %p280 = pneg %p60
      %p281 = pneg %p57
      %p282 = pneg %p81
      %p283 = pneg %p78
      %p284 = pneg %p102
      %p285 = pneg %p99
      %p286 = scmp.lt.s32.totalorder %s18, 1
      %s287 = scalar_select %p286, %s18, 1
      %s288 = smul.addr %s287, 23
      %s289 = smul.addr %s288, 8
      %s290 = scalar_lea.vmem %s4, %s289
      %p291 = pneg %p128
      %p292 = pneg %p125
      %p293 = scmp.lt.s32.totalorder %s18, 1
      %s294 = scalar_select %p293, %s18, 1
      %s295 = smul.addr %s294, 7
      %s296 = smul.addr %s295, 8
      %s297 = scalar_lea.vmem %s5, %s296
      %p298 = pneg %p154
      %p299 = pneg %p151
      %p300 = scmp.lt.s32.totalorder %s18, 1
      %s301 = scalar_select %p300, %s18, 1
      %s302 = smul.addr %s301, 9
      %s303 = smul.addr %s302, 8
      %s304 = scalar_lea.vmem %s6, %s303
      %p305 = pneg %p180
      %p306 = pneg %p177
      %p307 = pneg %p206
      %p308 = pneg %p203
      %p309 = scmp.lt.s32.totalorder %s18, 1
      %s310 = scalar_select %p309, %s18, 1
      %s311 = smul.addr %s310, 4
      %s312 = smul.addr %s311, 8
      %s313 = scalar_lea.vmem %s7, %s312
      %p314 = scmp.lt.s32.totalorder %s18, 1
      %s315 = scalar_select %p314, %s18, 1
      %s316 = smul.addr %s315, 4
      %s317 = smul.addr %s316, 8
      %s318 = scalar_lea.vmem %s0, %s317
      %p319 = scmp.lt.s32.totalorder %s18, 1
      %s320 = scalar_select %p319, %s18, 1
      %s321 = smul.addr %s320, 23
      %s322 = smul.addr %s321, 8
      %s323 = scalar_lea.vmem %s4, %s322
      %p324 = scmp.lt.s32.totalorder %s18, 1
      %s325 = scalar_select %p324, %s18, 1
      %s326 = smul.addr %s325, 7
      %s327 = smul.addr %s326, 8
      %s328 = scalar_lea.vmem %s5, %s327
      %p329 = scmp.lt.s32.totalorder %s18, 1
      %s330 = scalar_select %p329, %s18, 1
      %s331 = smul.addr %s330, 9
      %s332 = smul.addr %s331, 8
      %s333 = scalar_lea.vmem %s6, %s332
      %p334 = scmp.lt.s32.totalorder %s18, 1
      %s335 = scalar_select %p334, %s18, 1
      %s336 = smul.addr %s335, 4
      %s337 = smul.addr %s336, 8
      %s338 = scalar_lea.vmem %s7, %s337
      %v340 = vld [vmem:[%s318] sm:$0xff]
      %v341 = vld [vmem:[%s318 + $0x8] sm:$0xff]
      %v342 = vld [vmem:[%s318 + $0x10] sm:$0xff]
      %v343 = vld [vmem:[%s318 + $0x18] sm:$0xff]
      %v344 = vld [vmem:[%s1] sm:$0xff]
      %v345 = vld [vmem:[%s1 + $0x8] sm:$0xff]
      %v346 = vld [vmem:[%s1 + $0x10] sm:$0xff]
      %v347 = vld [vmem:[%s1 + $0x18] sm:$0xff]
      %v348 = vld [vmem:[%s323] sm:$0xff]
      %v349 = vld [vmem:[%s323 + $0x8] sm:$0xff]
      %v350 = vld [vmem:[%s323 + $0x10] sm:$0xff]
      %v351 = vld [vmem:[%s323 + $0x18] sm:$0xff]
      %v352 = vld [vmem:[%s323 + $0x20] sm:$0xff]
      %v353 = vld [vmem:[%s323 + $0x28] sm:$0xff]
      %v354 = vld [vmem:[%s323 + $0x30] sm:$0xff]
      %v355 = vld [vmem:[%s323 + $0x38] sm:$0xff]
      %v356 = vld [vmem:[%s323 + $0x40] sm:$0xff]
      %v357 = vld [vmem:[%s323 + $0x48] sm:$0xff]
      %v358 = vld [vmem:[%s323 + $0x50] sm:$0xff]
      %v359 = vld [vmem:[%s323 + $0x58] sm:$0xff]
      %v360 = vld [vmem:[%s323 + $0x60] sm:$0xff]
      %v361 = vld [vmem:[%s323 + $0x68] sm:$0xff]
      %v362 = vld [vmem:[%s323 + $0x70] sm:$0xff]
      %v363 = vld [vmem:[%s323 + $0x78] sm:$0xff]
      %v364 = vld [vmem:[%s323 + $0x80] sm:$0xff]
      %v365 = vld [vmem:[%s323 + $0x88] sm:$0xff]
      %v366 = vld [vmem:[%s323 + $0x90] sm:$0xff]
      %v367 = vld [vmem:[%s323 + $0x98] sm:$0xff]
      %v368 = vld [vmem:[%s323 + $0xa0] sm:$0xff]
      %v369 = vld [vmem:[%s323 + $0xa8] sm:$0xff]
      %v370 = vld [vmem:[%s323 + $0xb0] sm:$0xff]
      %v371 = vld [vmem:[%s328] sm:$0xff]
      %v372 = vld [vmem:[%s328 + $0x8] sm:$0xff]
      %v373 = vld [vmem:[%s328 + $0x10] sm:$0xff]
      %v374 = vld [vmem:[%s328 + $0x18] sm:$0xff]
      %v375 = vld [vmem:[%s328 + $0x20] sm:$0xff]
      %v376 = vld [vmem:[%s328 + $0x28] sm:$0xff]
      %v377 = vld [vmem:[%s328 + $0x30] sm:$0xff]
      %v378 = vld [vmem:[%s333] sm:$0xff]
      %v379 = vld [vmem:[%s333 + $0x8] sm:$0xff]
      %v380 = vld [vmem:[%s333 + $0x10] sm:$0xff]
      %v381 = vld [vmem:[%s333 + $0x18] sm:$0xff]
      %v382 = vld [vmem:[%s333 + $0x20] sm:$0xff]
      %v383 = vld [vmem:[%s333 + $0x28] sm:$0xff]
      %v384 = vld [vmem:[%s333 + $0x30] sm:$0xff]
      %v385 = vld [vmem:[%s333 + $0x38] sm:$0xff]
      %v386 = vld [vmem:[%s333 + $0x40] sm:$0xff]
      %v387 = vld [vmem:[%s3] sm:$0xff]
      %v388 = vld [vmem:[%s2] sm:$0xff]
      %v389 = vadd.s32 %v388, 4294967295
      %vm390 = vcmp.ge.s32.totalorder %v389, 0
      %vm391 = vcmp.lt.s32.totalorder %v389, 16
      %vm392 = vmand %vm390, %vm391
      %v393 = vsel %vm390, 1, 0
      %v394 = vrot.slane %v393, 7
      %v395 = vrot.slane %v394, 2
      %vm396 = vcmp.ne.s32.totalorder %v395, 0
      %vm397 = vmand %vm392, %vm396
      %v398 = vsel %vm391, 1, 0
      %v399 = vrot.slane %v398, 7
      %v400 = vrot.slane %v399, 2
      %vm401 = vcmp.ne.s32.totalorder %v400, 0
      %vm402 = vmand %vm397, %vm401
      %v403 = vsel %vm402, 1, 0
      %v404 = vcvt.s32.f32 %v403
      %vm405 = vcmp.ge.s32.totalorder %v388, 0
      %v406 = vsel %vm405, 1, 0
      %v407 = vrot.slane %v406, 7
      %v408 = vrot.slane %v407, 2
      %vm409 = vcmp.ne.s32.totalorder %v408, 0
      %vm410 = vmand %vm392, %vm409
      %vm411 = vcmp.lt.s32.totalorder %v388, 16
      %v412 = vsel %vm411, 1, 0
      %v413 = vrot.slane %v412, 7
      %v414 = vrot.slane %v413, 2
      %vm415 = vcmp.ne.s32.totalorder %v414, 0
      %vm416 = vmand %vm410, %vm415
      %v417 = vsel %vm416, 1, 0
      %v418 = vcvt.s32.f32 %v417
      %v419 = vadd.s32 %v388, 1
      %vm420 = vcmp.ge.s32.totalorder %v419, 0
      %v421 = vsel %vm420, 1, 0
      %v422 = vrot.slane %v421, 7
      %v423 = vrot.slane %v422, 2
      %vm424 = vcmp.ne.s32.totalorder %v423, 0
      %vm425 = vmand %vm392, %vm424
      %vm426 = vcmp.lt.s32.totalorder %v419, 16
      %v427 = vsel %vm426, 1, 0
      %v428 = vrot.slane %v427, 7
      %v429 = vrot.slane %v428, 2
      %vm430 = vcmp.ne.s32.totalorder %v429, 0
      %vm431 = vmand %vm425, %vm430
      %v432 = vsel %vm431, 1, 0
      %v433 = vcvt.s32.f32 %v432
      %vm434 = vmand %vm405, %vm411
      %vm435 = vmand %vm434, %vm396
      %vm436 = vmand %vm435, %vm401
      %v437 = vsel %vm436, 1, 0
      %v438 = vcvt.s32.f32 %v437
      %vm439 = vmand %vm434, %vm424
      %vm440 = vmand %vm439, %vm430
      %v441 = vsel %vm440, 1, 0
      %v442 = vcvt.s32.f32 %v441
      %vm443 = vmand %vm420, %vm426
      %vm444 = vmand %vm443, %vm396
      %vm445 = vmand %vm444, %vm401
      %v446 = vsel %vm445, 1, 0
      %v447 = vcvt.s32.f32 %v446
      %vm448 = vmand %vm443, %vm409
      %vm449 = vmand %vm448, %vm415
      %v450 = vsel %vm449, 1, 0
      %v451 = vcvt.s32.f32 %v450
      %vm452 = vmand %vm443, %vm424
      %vm453 = vmand %vm452, %vm430
      %v454 = vsel %vm453, 1, 0
      %v455 = vcvt.s32.f32 %v454
      %v456 = vrot.slane %v340, 4
      %v457 = vadd.f32 %v340, %v456
      %v458 = vrot.slane %v457, 2
      %v459 = vadd.f32 %v457, %v458
      %v460 = vrot.slane %v459, 1
      %v461 = vadd.f32 %v459, %v460
      %v462 = vrot.slane %v341, 4
      %v463 = vadd.f32 %v341, %v462
      %v464 = vrot.slane %v463, 2
      %v465 = vadd.f32 %v463, %v464
      %v466 = vrot.slane %v465, 1
      %v467 = vadd.f32 %v465, %v466
      %v468 = vrot.slane %v342, 4
      %v469 = vadd.f32 %v342, %v468
      %v470 = vrot.slane %v469, 2
      %v471 = vadd.f32 %v469, %v470
      %v472 = vrot.slane %v471, 1
      %v473 = vadd.f32 %v471, %v472
      %v474 = vrot.slane %v343, 4
      %v475 = vadd.f32 %v343, %v474
      %v476 = vrot.slane %v475, 2
      %v477 = vadd.f32 %v475, %v476
      %v478 = vrot.slane %v477, 1
      %v479 = vadd.f32 %v477, %v478
      %v480 = vrcp.pop 8.0
      %v481 = vmul.f32 %v461, %v480
      %v482 = vmul.f32 %v467, %v480
      %v483 = vmul.f32 %v473, %v480
      %v484 = vmul.f32 %v479, %v480
      %v485 = vsub.f32 %v340, %v481
      %v486 = vsub.f32 %v341, %v482
      %v487 = vsub.f32 %v342, %v483
      %v488 = vsub.f32 %v343, %v484
      %v489 = vmul.f32 %v485, %v485
      %v490 = vmul.f32 %v486, %v486
      %v491 = vmul.f32 %v487, %v487
      %v492 = vmul.f32 %v488, %v488
      %v493 = vrot.slane %v489, 4
      %v494 = vadd.f32 %v489, %v493
      %v495 = vrot.slane %v494, 2
      %v496 = vadd.f32 %v494, %v495
      %v497 = vrot.slane %v496, 1
      %v498 = vadd.f32 %v496, %v497
      %v499 = vrot.slane %v490, 4
      %v500 = vadd.f32 %v490, %v499
      %v501 = vrot.slane %v500, 2
      %v502 = vadd.f32 %v500, %v501
      %v503 = vrot.slane %v502, 1
      %v504 = vadd.f32 %v502, %v503
      %v505 = vrot.slane %v491, 4
      %v506 = vadd.f32 %v491, %v505
      %v507 = vrot.slane %v506, 2
      %v508 = vadd.f32 %v506, %v507
      %v509 = vrot.slane %v508, 1
      %v510 = vadd.f32 %v508, %v509
      %v511 = vrot.slane %v492, 4
      %v512 = vadd.f32 %v492, %v511
      %v513 = vrot.slane %v512, 2
      %v514 = vadd.f32 %v512, %v513
      %v515 = vrot.slane %v514, 1
      %v516 = vadd.f32 %v514, %v515
      %v517 = vmul.f32 %v498, %v480
      %v518 = vmul.f32 %v504, %v480
      %v519 = vmul.f32 %v510, %v480
      %v520 = vmul.f32 %v516, %v480
      %v521 = vadd.f32 %v517, 1e-05
      %v522 = vadd.f32 %v518, 1e-05
      %v523 = vadd.f32 %v519, 1e-05
      %v524 = vadd.f32 %v520, 1e-05
      %v525 = vrsqrt.pop %v521
      %v526 = vrsqrt.pop %v522
      %v527 = vrsqrt.pop %v523
      %v528 = vrsqrt.pop %v524
      %v529 = vmul.f32 %v485, %v525
      %v530 = vmul.f32 %v486, %v526
      %v531 = vmul.f32 %v487, %v527
      %v532 = vmul.f32 %v488, %v528
      %534 = vset.pattern.permute.xlu0 0
      %535 = vperm.xlu0 %534, %v348
      %v536 = vpop.permute.xlu0 %535
      %v538 = vmul.f32 %v529, %v536
      %v539 = vmul.f32 %v530, %v536
      %v540 = vmul.f32 %v531, %v536
      %v541 = vmul.f32 %v532, %v536
      %543 = vset.pattern.permute.xlu0 0
      %544 = vperm.xlu0 %543, %v349
      %v545 = vpop.permute.xlu0 %544
      %v547 = vadd.f32 %v538, %v545
      %v548 = vadd.f32 %v539, %v545
      %v549 = vadd.f32 %v540, %v545
      %v550 = vadd.f32 %v541, %v545
      %v551 = vrot.slane %v344, 4
      %v552 = vadd.f32 %v344, %v551
      %v553 = vrot.slane %v552, 2
      %v554 = vadd.f32 %v552, %v553
      %v555 = vrot.slane %v554, 1
      %v556 = vadd.f32 %v554, %v555
      %v557 = vrot.slane %v345, 4
      %v558 = vadd.f32 %v345, %v557
      %v559 = vrot.slane %v558, 2
      %v560 = vadd.f32 %v558, %v559
      %v561 = vrot.slane %v560, 1
      %v562 = vadd.f32 %v560, %v561
      %v563 = vrot.slane %v346, 4
      %v564 = vadd.f32 %v346, %v563
      %v565 = vrot.slane %v564, 2
      %v566 = vadd.f32 %v564, %v565
      %v567 = vrot.slane %v566, 1
      %v568 = vadd.f32 %v566, %v567
      %v569 = vrot.slane %v347, 4
      %v570 = vadd.f32 %v347, %v569
      %v571 = vrot.slane %v570, 2
      %v572 = vadd.f32 %v570, %v571
      %v573 = vrot.slane %v572, 1
      %v574 = vadd.f32 %v572, %v573
      %v575 = vmul.f32 %v556, %v480
      %v576 = vmul.f32 %v562, %v480
      %v577 = vmul.f32 %v568, %v480
      %v578 = vmul.f32 %v574, %v480
      %v579 = vsub.f32 %v344, %v575
      %v580 = vsub.f32 %v345, %v576
      %v581 = vsub.f32 %v346, %v577
      %v582 = vsub.f32 %v347, %v578
      %v583 = vmul.f32 %v579, %v579
      %v584 = vmul.f32 %v580, %v580
      %v585 = vmul.f32 %v581, %v581
      %v586 = vmul.f32 %v582, %v582
      %v587 = vrot.slane %v583, 4
      %v588 = vadd.f32 %v583, %v587
      %v589 = vrot.slane %v588, 2
      %v590 = vadd.f32 %v588, %v589
      %v591 = vrot.slane %v590, 1
      %v592 = vadd.f32 %v590, %v591
      %v593 = vrot.slane %v584, 4
      %v594 = vadd.f32 %v584, %v593
      %v595 = vrot.slane %v594, 2
      %v596 = vadd.f32 %v594, %v595
      %v597 = vrot.slane %v596, 1
      %v598 = vadd.f32 %v596, %v597
      %v599 = vrot.slane %v585, 4
      %v600 = vadd.f32 %v585, %v599
      %v601 = vrot.slane %v600, 2
      %v602 = vadd.f32 %v600, %v601
      %v603 = vrot.slane %v602, 1
      %v604 = vadd.f32 %v602, %v603
      %v605 = vrot.slane %v586, 4
      %v606 = vadd.f32 %v586, %v605
      %v607 = vrot.slane %v606, 2
      %v608 = vadd.f32 %v606, %v607
      %v609 = vrot.slane %v608, 1
      %v610 = vadd.f32 %v608, %v609
      %v611 = vmul.f32 %v592, %v480
      %v612 = vmul.f32 %v598, %v480
      %v613 = vmul.f32 %v604, %v480
      %v614 = vmul.f32 %v610, %v480
      %v615 = vadd.f32 %v611, 1e-05
      %v616 = vadd.f32 %v612, 1e-05
      %v617 = vadd.f32 %v613, 1e-05
      %v618 = vadd.f32 %v614, 1e-05
      %v619 = vrsqrt.pop %v615
      %v620 = vrsqrt.pop %v616
      %v621 = vrsqrt.pop %v617
      %v622 = vrsqrt.pop %v618
      %v623 = vmul.f32 %v579, %v619
      %v624 = vmul.f32 %v580, %v620
      %v625 = vmul.f32 %v581, %v621
      %v626 = vmul.f32 %v582, %v622
      %628 = vset.pattern.permute.xlu0 0
      %629 = vperm.xlu0 %628, %v350
      %v630 = vpop.permute.xlu0 %629
      %v632 = vmul.f32 %v623, %v630
      %v633 = vmul.f32 %v624, %v630
      %v634 = vmul.f32 %v625, %v630
      %v635 = vmul.f32 %v626, %v630
      %637 = vset.pattern.permute.xlu0 0
      %638 = vperm.xlu0 %637, %v351
      %v639 = vpop.permute.xlu0 %638
      %v641 = vadd.f32 %v632, %v639
      %v642 = vadd.f32 %v633, %v639
      %v643 = vadd.f32 %v634, %v639
      %v644 = vadd.f32 %v635, %v639
      %v645 = vpack.c.bf16 %v378, %v378
      %v646 = vpack.c.bf16 %v547, %v547
      %v647 = vpack.c.bf16 %v548, %v548
      %v648 = vpack.c.bf16 %v549, %v549
      %v649 = vpack.c.bf16 %v550, %v550
      %651 = vset.pattern.permute.xlu0 0
      %652 = vperm.xlu0 %651, %v354
      %v653 = vpop.permute.xlu0 %652
      %vm655 = vcmask 64512
      %v657 = vsel %vm655, %v645, 0
      %vm659 = vcmask 1043456
      %v661 = vsel %vm659, %v646, 0
      %v664 = vsel %vm659, %v647, 0
      %v667 = vsel %vm659, %v648, 0
      %v670 = vsel %vm659, %v649, 0
      %672 = vmatprep.subr.bf16.mxu0 0
      %673 = vmatpush1.bf16.msra.mxu0 0
      %674 = vmatprep.subr.bf16.mxu0 0
      %675 = vmatpush1.bf16.msra.mxu0 0
      %676 = vmatprep.subr.bf16.mxu0 0
      %677 = vmatpush1.bf16.msra.mxu0 0
      %678 = vmatprep.subr.bf16.mxu0 0
      %679 = vmatpush1.bf16.msra.mxu0 0
      %680 = vmatprep.subr.bf16.mxu0 0
      %681 = vmatpush1.bf16.msra.mxu0 0
      %682 = vmatprep.subr.bf16.mxu0 0
      %683 = vmatpush1.bf16.msra.mxu0 0
      %684 = vmatprep.subr.bf16.mxu0 0
      %685 = vmatpush1.bf16.msra.mxu0 0
      %686 = vmatprep.subr.bf16.mxu0 %v664
      %687 = vmatpush1.bf16.msra.mxu0 %v661
      %688 = vmatprep.subr.bf16.mxu0 0
      %689 = vmatpush2.bf16.msra.mxu0 0
      %690 = vmatprep.subr.bf16.mxu0 0
      %691 = vmatpush2.bf16.msra.mxu0 0
      %692 = vmatprep.subr.bf16.mxu0 0
      %693 = vmatpush2.bf16.msra.mxu0 0
      %694 = vmatprep.subr.bf16.mxu0 0
      %695 = vmatpush2.bf16.msra.mxu0 0
      %696 = vmatprep.subr.bf16.mxu0 0
      %697 = vmatpush2.bf16.msra.mxu0 0
      %698 = vmatprep.subr.bf16.mxu0 0
      %699 = vmatpush2.bf16.msra.mxu0 0
      %700 = vmatprep.subr.bf16.mxu0 0
      %701 = vmatpush2.bf16.msra.mxu0 0
      %702 = vmatprep.subr.bf16.mxu0 0
      %703 = vmatpush2.bf16.msra.mxu0 0
      %704 = vmatprep.mubr.bf16.mxu0 0
      %705 = vmatmul.mubr.bf16.gmra.mxu0 %v657
      %v706 = vpop.f32.mrf.mxu0
      %v707 = vadd.f32 %v653, %v706
      %v708 = vpop.f32.mrf.mxu0
      %v709 = vadd.f32 %v653, %v708
      %v710 = vpop.f32.mrf.mxu0
      %v711 = vpop.f32.mrf.mxu0
      %712 = vdwg.mxu0
      %713 = vmatprep.subr.bf16.mxu0 0
      %714 = vmatpush1.bf16.msra.mxu0 0
      %715 = vmatprep.subr.bf16.mxu0 0
      %716 = vmatpush1.bf16.msra.mxu0 0
      %717 = vmatprep.subr.bf16.mxu0 0
      %718 = vmatpush1.bf16.msra.mxu0 0
      %719 = vmatprep.subr.bf16.mxu0 0
      %720 = vmatpush1.bf16.msra.mxu0 0
      %721 = vmatprep.subr.bf16.mxu0 0
      %722 = vmatpush1.bf16.msra.mxu0 0
      %723 = vmatprep.subr.bf16.mxu0 0
      %724 = vmatpush1.bf16.msra.mxu0 0
      %725 = vmatprep.subr.bf16.mxu0 0
      %726 = vmatpush1.bf16.msra.mxu0 0
      %727 = vmatprep.subr.bf16.mxu0 %v670
      %728 = vmatpush1.bf16.msra.mxu0 %v667
      %729 = vmatprep.subr.bf16.mxu0 0
      %730 = vmatpush2.bf16.msra.mxu0 0
      %731 = vmatprep.subr.bf16.mxu0 0
      %732 = vmatpush2.bf16.msra.mxu0 0
      %733 = vmatprep.subr.bf16.mxu0 0
      %734 = vmatpush2.bf16.msra.mxu0 0
      %735 = vmatprep.subr.bf16.mxu0 0
      %736 = vmatpush2.bf16.msra.mxu0 0
      %737 = vmatprep.subr.bf16.mxu0 0
      %738 = vmatpush2.bf16.msra.mxu0 0
      %739 = vmatprep.subr.bf16.mxu0 0
      %740 = vmatpush2.bf16.msra.mxu0 0
      %741 = vmatprep.subr.bf16.mxu0 0
      %742 = vmatpush2.bf16.msra.mxu0 0
      %743 = vmatprep.subr.bf16.mxu0 0
      %744 = vmatpush2.bf16.msra.mxu0 0
      %745 = vmatprep.mubr.bf16.mxu0 0
      %746 = vmatmul.mubr.bf16.gmra.mxu0 %v657
      %v747 = vpop.f32.mrf.mxu0
      %v748 = vadd.f32 %v653, %v747
      %v749 = vpop.f32.mrf.mxu0
      %v750 = vadd.f32 %v653, %v749
      %v751 = vpop.f32.mrf.mxu0
      %v752 = vpop.f32.mrf.mxu0
      %753 = vdwg.mxu0
      %755 = vset.pattern.permute.xlu0 4
      %756 = vperm.xlu0 %755, %v371
      %v757 = vpop.permute.xlu0 %756
      %v759 = vmul.f32 %v707, %v757
      %v760 = vmul.f32 %v709, %v757
      %v761 = vmul.f32 %v748, %v757
      %v762 = vmul.f32 %v750, %v757
      %763 = vrot.lane.b32.xlu0 %v707, 17
      %v764 = vpop.permute.xlu0 %763
      %765 = vrot.lane.b32.xlu0 %v709, 17
      %v766 = vpop.permute.xlu0 %765
      %767 = vrot.lane.b32.xlu0 %v748, 17
      %v768 = vpop.permute.xlu0 %767
      %769 = vrot.lane.b32.xlu0 %v750, 17
      %v770 = vpop.permute.xlu0 %769
      %v771 = vlaneseq
      %v772 = vand.u32 %v771, 127
      %vm773 = vcmp.lt.s32.totalorder %v772, 17
      %v774 = vsel %vm773, %v768, %v770
      %v775 = vsel %vm773, %v766, %v768
      %v776 = vsel %vm773, %v764, %v766
      %v777 = vsel %vm773, %v770, %v764
      %v779 = vlaneseq
      %v780 = vshrl.u32 %v779, 7
      %v781 = vsub.s32 0, %v780
      %v782 = vrot.slane %v404, %v781
      %v783 = vlaneseq
      %v784 = vshrl.u32 %v783, 7
      %v785 = vsub.s32 2, %v784
      %v786 = vrot.slane %v404, %v785
      %v787 = vlaneseq
      %v788 = vshrl.u32 %v787, 7
      %v789 = vsub.s32 4, %v788
      %v790 = vrot.slane %v404, %v789
      %v791 = vlaneseq
      %v792 = vshrl.u32 %v791, 7
      %v793 = vsub.s32 6, %v792
      %v794 = vrot.slane %v404, %v793
      %v799 = vlaneseq
      %v800 = vshrl.u32 %v799, 7
      %v801 = vsub.s32 0, %v800
      %v802 = vrot.slane %v782, %v801
      %v803 = vlaneseq
      %v804 = vshrl.u32 %v803, 7
      %v805 = vsub.s32 0, %v804
      %v806 = vrot.slane %v786, %v805
      %v807 = vlaneseq
      %v808 = vshrl.u32 %v807, 7
      %v809 = vsub.s32 0, %v808
      %v810 = vrot.slane %v790, %v809
      %v811 = vlaneseq
      %v812 = vshrl.u32 %v811, 7
      %v813 = vsub.s32 0, %v812
      %v814 = vrot.slane %v794, %v813
      %v815 = vmul.f32 %v777, %v802
      %v816 = vmul.f32 %v776, %v806
      %v817 = vmul.f32 %v775, %v810
      %v818 = vmul.f32 %v774, %v814
      %819 = vset.pattern.permute.xlu0 0
      %820 = vperm.xlu0 %819, %v371
      %v821 = vpop.permute.xlu0 %820
      %v823 = vmul.f32 %v815, %v821
      %v824 = vmul.f32 %v816, %v821
      %v825 = vmul.f32 %v817, %v821
      %v826 = vmul.f32 %v818, %v821
      %v827 = vadd.f32 %v759, %v823
      %v828 = vadd.f32 %v760, %v824
      %v829 = vadd.f32 %v761, %v825
      %v830 = vadd.f32 %v762, %v826
      %831 = vrot.lane.b32.xlu0 %v707, 16
      %v832 = vpop.permute.xlu0 %831
      %833 = vrot.lane.b32.xlu0 %v709, 16
      %v834 = vpop.permute.xlu0 %833
      %835 = vrot.lane.b32.xlu0 %v748, 16
      %v836 = vpop.permute.xlu0 %835
      %837 = vrot.lane.b32.xlu0 %v750, 16
      %v838 = vpop.permute.xlu0 %837
      %vm839 = vcmp.lt.s32.totalorder %v772, 16
      %v840 = vsel %vm839, %v836, %v838
      %v841 = vsel %vm839, %v834, %v836
      %v842 = vsel %vm839, %v832, %v834
      %v843 = vsel %vm839, %v838, %v832
      %v845 = vlaneseq
      %v846 = vshrl.u32 %v845, 7
      %v847 = vsub.s32 0, %v846
      %v848 = vrot.slane %v418, %v847
      %v849 = vlaneseq
      %v850 = vshrl.u32 %v849, 7
      %v851 = vsub.s32 2, %v850
      %v852 = vrot.slane %v418, %v851
      %v853 = vlaneseq
      %v854 = vshrl.u32 %v853, 7
      %v855 = vsub.s32 4, %v854
      %v856 = vrot.slane %v418, %v855
      %v857 = vlaneseq
      %v858 = vshrl.u32 %v857, 7
      %v859 = vsub.s32 6, %v858
      %v860 = vrot.slane %v418, %v859
      %v865 = vlaneseq
      %v866 = vshrl.u32 %v865, 7
      %v867 = vsub.s32 0, %v866
      %v868 = vrot.slane %v848, %v867
      %v869 = vlaneseq
      %v870 = vshrl.u32 %v869, 7
      %v871 = vsub.s32 0, %v870
      %v872 = vrot.slane %v852, %v871
      %v873 = vlaneseq
      %v874 = vshrl.u32 %v873, 7
      %v875 = vsub.s32 0, %v874
      %v876 = vrot.slane %v856, %v875
      %v877 = vlaneseq
      %v878 = vshrl.u32 %v877, 7
      %v879 = vsub.s32 0, %v878
      %v880 = vrot.slane %v860, %v879
      %v881 = vmul.f32 %v843, %v868
      %v882 = vmul.f32 %v842, %v872
      %v883 = vmul.f32 %v841, %v876
      %v884 = vmul.f32 %v840, %v880
      %885 = vset.pattern.permute.xlu0 1
      %886 = vperm.xlu0 %885, %v371
      %v887 = vpop.permute.xlu0 %886
      %v889 = vmul.f32 %v881, %v887
      %v890 = vmul.f32 %v882, %v887
      %v891 = vmul.f32 %v883, %v887
      %v892 = vmul.f32 %v884, %v887
      %v893 = vadd.f32 %v827, %v889
      %v894 = vadd.f32 %v828, %v890
      %v895 = vadd.f32 %v829, %v891
      %v896 = vadd.f32 %v830, %v892
      %897 = vrot.lane.b32.xlu0 %v707, 15
      %v898 = vpop.permute.xlu0 %897
      %899 = vrot.lane.b32.xlu0 %v709, 15
      %v900 = vpop.permute.xlu0 %899
      %901 = vrot.lane.b32.xlu0 %v748, 15
      %v902 = vpop.permute.xlu0 %901
      %903 = vrot.lane.b32.xlu0 %v750, 15
      %v904 = vpop.permute.xlu0 %903
      %vm905 = vcmp.lt.s32.totalorder %v772, 15
      %v906 = vsel %vm905, %v902, %v904
      %v907 = vsel %vm905, %v900, %v902
      %v908 = vsel %vm905, %v898, %v900
      %v909 = vsel %vm905, %v904, %v898
      %v911 = vlaneseq
      %v912 = vshrl.u32 %v911, 7
      %v913 = vsub.s32 0, %v912
      %v914 = vrot.slane %v433, %v913
      %v915 = vlaneseq
      %v916 = vshrl.u32 %v915, 7
      %v917 = vsub.s32 2, %v916
      %v918 = vrot.slane %v433, %v917
      %v919 = vlaneseq
      %v920 = vshrl.u32 %v919, 7
      %v921 = vsub.s32 4, %v920
      %v922 = vrot.slane %v433, %v921
      %v923 = vlaneseq
      %v924 = vshrl.u32 %v923, 7
      %v925 = vsub.s32 6, %v924
      %v926 = vrot.slane %v433, %v925
      %v931 = vlaneseq
      %v932 = vshrl.u32 %v931, 7
      %v933 = vsub.s32 0, %v932
      %v934 = vrot.slane %v914, %v933
      %v935 = vlaneseq
      %v936 = vshrl.u32 %v935, 7
      %v937 = vsub.s32 0, %v936
      %v938 = vrot.slane %v918, %v937
      %v939 = vlaneseq
      %v940 = vshrl.u32 %v939, 7
      %v941 = vsub.s32 0, %v940
      %v942 = vrot.slane %v922, %v941
      %v943 = vlaneseq
      %v944 = vshrl.u32 %v943, 7
      %v945 = vsub.s32 0, %v944
      %v946 = vrot.slane %v926, %v945
      %v947 = vmul.f32 %v909, %v934
      %v948 = vmul.f32 %v908, %v938
      %v949 = vmul.f32 %v907, %v942
      %v950 = vmul.f32 %v906, %v946
      %951 = vset.pattern.permute.xlu0 2
      %952 = vperm.xlu0 %951, %v371
      %v953 = vpop.permute.xlu0 %952
      %v955 = vmul.f32 %v947, %v953
      %v956 = vmul.f32 %v948, %v953
      %v957 = vmul.f32 %v949, %v953
      %v958 = vmul.f32 %v950, %v953
      %v959 = vadd.f32 %v893, %v955
      %v960 = vadd.f32 %v894, %v956
      %v961 = vadd.f32 %v895, %v957
      %v962 = vadd.f32 %v896, %v958
      %963 = vrot.lane.b32.xlu0 %v707, 1
      %v964 = vpop.permute.xlu0 %963
      %965 = vrot.lane.b32.xlu0 %v709, 1
      %v966 = vpop.permute.xlu0 %965
      %967 = vrot.lane.b32.xlu0 %v748, 1
      %v968 = vpop.permute.xlu0 %967
      %969 = vrot.lane.b32.xlu0 %v750, 1
      %v970 = vpop.permute.xlu0 %969
      %vm971 = vcmp.lt.s32.totalorder %v772, 1
      %v972 = vsel %vm971, %v968, %v970
      %v973 = vsel %vm971, %v966, %v968
      %v974 = vsel %vm971, %v964, %v966
      %v975 = vsel %vm971, %v970, %v964
      %v977 = vlaneseq
      %v978 = vshrl.u32 %v977, 7
      %v979 = vsub.s32 0, %v978
      %v980 = vrot.slane %v438, %v979
      %v981 = vlaneseq
      %v982 = vshrl.u32 %v981, 7
      %v983 = vsub.s32 2, %v982
      %v984 = vrot.slane %v438, %v983
      %v985 = vlaneseq
      %v986 = vshrl.u32 %v985, 7
      %v987 = vsub.s32 4, %v986
      %v988 = vrot.slane %v438, %v987
      %v989 = vlaneseq
      %v990 = vshrl.u32 %v989, 7
      %v991 = vsub.s32 6, %v990
      %v992 = vrot.slane %v438, %v991
      %v997 = vlaneseq
      %v998 = vshrl.u32 %v997, 7
      %v999 = vsub.s32 0, %v998
      %v1000 = vrot.slane %v980, %v999
      %v1001 = vlaneseq
      %v1002 = vshrl.u32 %v1001, 7
      %v1003 = vsub.s32 0, %v1002
      %v1004 = vrot.slane %v984, %v1003
      %v1005 = vlaneseq
      %v1006 = vshrl.u32 %v1005, 7
      %v1007 = vsub.s32 0, %v1006
      %v1008 = vrot.slane %v988, %v1007
      %v1009 = vlaneseq
      %v1010 = vshrl.u32 %v1009, 7
      %v1011 = vsub.s32 0, %v1010
      %v1012 = vrot.slane %v992, %v1011
      %v1013 = vmul.f32 %v975, %v1000
      %v1014 = vmul.f32 %v974, %v1004
      %v1015 = vmul.f32 %v973, %v1008
      %v1016 = vmul.f32 %v972, %v1012
      %1017 = vset.pattern.permute.xlu0 3
      %1018 = vperm.xlu0 %1017, %v371
      %v1019 = vpop.permute.xlu0 %1018
      %v1021 = vmul.f32 %v1013, %v1019
      %v1022 = vmul.f32 %v1014, %v1019
      %v1023 = vmul.f32 %v1015, %v1019
      %v1024 = vmul.f32 %v1016, %v1019
      %v1025 = vadd.f32 %v959, %v1021
      %v1026 = vadd.f32 %v960, %v1022
      %v1027 = vadd.f32 %v961, %v1023
      %v1028 = vadd.f32 %v962, %v1024
      %1029 = vrot.lane.b32.xlu0 %v707, 127
      %v1030 = vpop.permute.xlu0 %1029
      %1031 = vrot.lane.b32.xlu0 %v709, 127
      %v1032 = vpop.permute.xlu0 %1031
      %1033 = vrot.lane.b32.xlu0 %v748, 127
      %v1034 = vpop.permute.xlu0 %1033
      %1035 = vrot.lane.b32.xlu0 %v750, 127
      %v1036 = vpop.permute.xlu0 %1035
      %vm1037 = vcmp.lt.s32.totalorder %v772, 127
      %v1038 = vsel %vm1037, %v1034, %v1036
      %v1039 = vsel %vm1037, %v1032, %v1034
      %v1040 = vsel %vm1037, %v1030, %v1032
      %v1041 = vsel %vm1037, %v1036, %v1030
      %v1043 = vlaneseq
      %v1044 = vshrl.u32 %v1043, 7
      %v1045 = vsub.s32 0, %v1044
      %v1046 = vrot.slane %v442, %v1045
      %v1047 = vlaneseq
      %v1048 = vshrl.u32 %v1047, 7
      %v1049 = vsub.s32 2, %v1048
      %v1050 = vrot.slane %v442, %v1049
      %v1051 = vlaneseq
      %v1052 = vshrl.u32 %v1051, 7
      %v1053 = vsub.s32 4, %v1052
      %v1054 = vrot.slane %v442, %v1053
      %v1055 = vlaneseq
      %v1056 = vshrl.u32 %v1055, 7
      %v1057 = vsub.s32 6, %v1056
      %v1058 = vrot.slane %v442, %v1057
      %v1063 = vlaneseq
      %v1064 = vshrl.u32 %v1063, 7
      %v1065 = vsub.s32 0, %v1064
      %v1066 = vrot.slane %v1046, %v1065
      %v1067 = vlaneseq
      %v1068 = vshrl.u32 %v1067, 7
      %v1069 = vsub.s32 0, %v1068
      %v1070 = vrot.slane %v1050, %v1069
      %v1071 = vlaneseq
      %v1072 = vshrl.u32 %v1071, 7
      %v1073 = vsub.s32 0, %v1072
      %v1074 = vrot.slane %v1054, %v1073
      %v1075 = vlaneseq
      %v1076 = vshrl.u32 %v1075, 7
      %v1077 = vsub.s32 0, %v1076
      %v1078 = vrot.slane %v1058, %v1077
      %v1079 = vmul.f32 %v1040, %v1066
      %v1080 = vmul.f32 %v1039, %v1070
      %v1081 = vmul.f32 %v1038, %v1074
      %v1082 = vmul.f32 %v1041, %v1078
      %1083 = vset.pattern.permute.xlu0 5
      %1084 = vperm.xlu0 %1083, %v371
      %v1085 = vpop.permute.xlu0 %1084
      %v1087 = vmul.f32 %v1079, %v1085
      %v1088 = vmul.f32 %v1080, %v1085
      %v1089 = vmul.f32 %v1081, %v1085
      %v1090 = vmul.f32 %v1082, %v1085
      %v1091 = vadd.f32 %v1025, %v1087
      %v1092 = vadd.f32 %v1026, %v1088
      %v1093 = vadd.f32 %v1027, %v1089
      %v1094 = vadd.f32 %v1028, %v1090
      %1095 = vrot.lane.b32.xlu0 %v707, 113
      %v1096 = vpop.permute.xlu0 %1095
      %1097 = vrot.lane.b32.xlu0 %v709, 113
      %v1098 = vpop.permute.xlu0 %1097
      %1099 = vrot.lane.b32.xlu0 %v748, 113
      %v1100 = vpop.permute.xlu0 %1099
      %1101 = vrot.lane.b32.xlu0 %v750, 113
      %v1102 = vpop.permute.xlu0 %1101
      %vm1103 = vcmp.lt.s32.totalorder %v772, 113
      %v1104 = vsel %vm1103, %v1100, %v1102
      %v1105 = vsel %vm1103, %v1098, %v1100
      %v1106 = vsel %vm1103, %v1096, %v1098
      %v1107 = vsel %vm1103, %v1102, %v1096
      %v1109 = vlaneseq
      %v1110 = vshrl.u32 %v1109, 7
      %v1111 = vsub.s32 0, %v1110
      %v1112 = vrot.slane %v447, %v1111
      %v1113 = vlaneseq
      %v1114 = vshrl.u32 %v1113, 7
      %v1115 = vsub.s32 2, %v1114
      %v1116 = vrot.slane %v447, %v1115
      %v1117 = vlaneseq
      %v1118 = vshrl.u32 %v1117, 7
      %v1119 = vsub.s32 4, %v1118
      %v1120 = vrot.slane %v447, %v1119
      %v1121 = vlaneseq
      %v1122 = vshrl.u32 %v1121, 7
      %v1123 = vsub.s32 6, %v1122
      %v1124 = vrot.slane %v447, %v1123
      %v1129 = vlaneseq
      %v1130 = vshrl.u32 %v1129, 7
      %v1131 = vsub.s32 0, %v1130
      %v1132 = vrot.slane %v1112, %v1131
      %v1133 = vlaneseq
      %v1134 = vshrl.u32 %v1133, 7
      %v1135 = vsub.s32 0, %v1134
      %v1136 = vrot.slane %v1116, %v1135
      %v1137 = vlaneseq
      %v1138 = vshrl.u32 %v1137, 7
      %v1139 = vsub.s32 0, %v1138
      %v1140 = vrot.slane %v1120, %v1139
      %v1141 = vlaneseq
      %v1142 = vshrl.u32 %v1141, 7
      %v1143 = vsub.s32 0, %v1142
      %v1144 = vrot.slane %v1124, %v1143
      %v1145 = vmul.f32 %v1106, %v1132
      %v1146 = vmul.f32 %v1105, %v1136
      %v1147 = vmul.f32 %v1104, %v1140
      %v1148 = vmul.f32 %v1107, %v1144
      %1149 = vset.pattern.permute.xlu0 6
      %1150 = vperm.xlu0 %1149, %v371
      %v1151 = vpop.permute.xlu0 %1150
      %v1153 = vmul.f32 %v1145, %v1151
      %v1154 = vmul.f32 %v1146, %v1151
      %v1155 = vmul.f32 %v1147, %v1151
      %v1156 = vmul.f32 %v1148, %v1151
      %v1157 = vadd.f32 %v1091, %v1153
      %v1158 = vadd.f32 %v1092, %v1154
      %v1159 = vadd.f32 %v1093, %v1155
      %v1160 = vadd.f32 %v1094, %v1156
      %1161 = vrot.lane.b32.xlu0 %v707, 112
      %v1162 = vpop.permute.xlu0 %1161
      %1163 = vrot.lane.b32.xlu0 %v709, 112
      %v1164 = vpop.permute.xlu0 %1163
      %1165 = vrot.lane.b32.xlu0 %v748, 112
      %v1166 = vpop.permute.xlu0 %1165
      %1167 = vrot.lane.b32.xlu0 %v750, 112
      %v1168 = vpop.permute.xlu0 %1167
      %vm1169 = vcmp.lt.s32.totalorder %v772, 112
      %v1170 = vsel %vm1169, %v1166, %v1168
      %v1171 = vsel %vm1169, %v1164, %v1166
      %v1172 = vsel %vm1169, %v1162, %v1164
      %v1173 = vsel %vm1169, %v1168, %v1162
      %v1175 = vlaneseq
      %v1176 = vshrl.u32 %v1175, 7
      %v1177 = vsub.s32 0, %v1176
      %v1178 = vrot.slane %v451, %v1177
      %v1179 = vlaneseq
      %v1180 = vshrl.u32 %v1179, 7
      %v1181 = vsub.s32 2, %v1180
      %v1182 = vrot.slane %v451, %v1181
      %v1183 = vlaneseq
      %v1184 = vshrl.u32 %v1183, 7
      %v1185 = vsub.s32 4, %v1184
      %v1186 = vrot.slane %v451, %v1185
      %v1187 = vlaneseq
      %v1188 = vshrl.u32 %v1187, 7
      %v1189 = vsub.s32 6, %v1188
      %v1190 = vrot.slane %v451, %v1189
      %v1195 = vlaneseq
      %v1196 = vshrl.u32 %v1195, 7
      %v1197 = vsub.s32 0, %v1196
      %v1198 = vrot.slane %v1178, %v1197
      %v1199 = vlaneseq
      %v1200 = vshrl.u32 %v1199, 7
      %v1201 = vsub.s32 0, %v1200
      %v1202 = vrot.slane %v1182, %v1201
      %v1203 = vlaneseq
      %v1204 = vshrl.u32 %v1203, 7
      %v1205 = vsub.s32 0, %v1204
      %v1206 = vrot.slane %v1186, %v1205
      %v1207 = vlaneseq
      %v1208 = vshrl.u32 %v1207, 7
      %v1209 = vsub.s32 0, %v1208
      %v1210 = vrot.slane %v1190, %v1209
      %v1211 = vmul.f32 %v1172, %v1198
      %v1212 = vmul.f32 %v1171, %v1202
      %v1213 = vmul.f32 %v1170, %v1206
      %v1214 = vmul.f32 %v1173, %v1210
      %1215 = vset.pattern.permute.xlu0 7
      %1216 = vperm.xlu0 %1215, %v371
      %v1217 = vpop.permute.xlu0 %1216
      %v1219 = vmul.f32 %v1211, %v1217
      %v1220 = vmul.f32 %v1212, %v1217
      %v1221 = vmul.f32 %v1213, %v1217
      %v1222 = vmul.f32 %v1214, %v1217
      %v1223 = vadd.f32 %v1157, %v1219
      %v1224 = vadd.f32 %v1158, %v1220
      %v1225 = vadd.f32 %v1159, %v1221
      %v1226 = vadd.f32 %v1160, %v1222
      %1227 = vrot.lane.b32.xlu0 %v707, 111
      %v1228 = vpop.permute.xlu0 %1227
      %1229 = vrot.lane.b32.xlu0 %v709, 111
      %v1230 = vpop.permute.xlu0 %1229
      %1231 = vrot.lane.b32.xlu0 %v748, 111
      %v1232 = vpop.permute.xlu0 %1231
      %1233 = vrot.lane.b32.xlu0 %v750, 111
      %v1234 = vpop.permute.xlu0 %1233
      %vm1235 = vcmp.lt.s32.totalorder %v772, 111
      %v1236 = vsel %vm1235, %v1232, %v1234
      %v1237 = vsel %vm1235, %v1230, %v1232
      %v1238 = vsel %vm1235, %v1228, %v1230
      %v1239 = vsel %vm1235, %v1234, %v1228
      %v1241 = vlaneseq
      %v1242 = vshrl.u32 %v1241, 7
      %v1243 = vsub.s32 0, %v1242
      %v1244 = vrot.slane %v455, %v1243
      %v1245 = vlaneseq
      %v1246 = vshrl.u32 %v1245, 7
      %v1247 = vsub.s32 2, %v1246
      %v1248 = vrot.slane %v455, %v1247
      %v1249 = vlaneseq
      %v1250 = vshrl.u32 %v1249, 7
      %v1251 = vsub.s32 4, %v1250
      %v1252 = vrot.slane %v455, %v1251
      %v1253 = vlaneseq
      %v1254 = vshrl.u32 %v1253, 7
      %v1255 = vsub.s32 6, %v1254
      %v1256 = vrot.slane %v455, %v1255
      %v1261 = vlaneseq
      %v1262 = vshrl.u32 %v1261, 7
      %v1263 = vsub.s32 0, %v1262
      %v1264 = vrot.slane %v1244, %v1263
      %v1265 = vlaneseq
      %v1266 = vshrl.u32 %v1265, 7
      %v1267 = vsub.s32 0, %v1266
      %v1268 = vrot.slane %v1248, %v1267
      %v1269 = vlaneseq
      %v1270 = vshrl.u32 %v1269, 7
      %v1271 = vsub.s32 0, %v1270
      %v1272 = vrot.slane %v1252, %v1271
      %v1273 = vlaneseq
      %v1274 = vshrl.u32 %v1273, 7
      %v1275 = vsub.s32 0, %v1274
      %v1276 = vrot.slane %v1256, %v1275
      %v1277 = vmul.f32 %v1238, %v1264
      %v1278 = vmul.f32 %v1237, %v1268
      %v1279 = vmul.f32 %v1236, %v1272
      %v1280 = vmul.f32 %v1239, %v1276
      %1281 = vset.pattern.permute.xlu0 8
      %1282 = vperm.xlu0 %1281, %v371
      %v1283 = vpop.permute.xlu0 %1282
      %v1285 = vmul.f32 %v1277, %v1283
      %v1286 = vmul.f32 %v1278, %v1283
      %v1287 = vmul.f32 %v1279, %v1283
      %v1288 = vmul.f32 %v1280, %v1283
      %v1289 = vadd.f32 %v1223, %v1285
      %v1290 = vadd.f32 %v1224, %v1286
      %v1291 = vadd.f32 %v1225, %v1287
      %v1292 = vadd.f32 %v1226, %v1288
      %1294 = vset.pattern.permute.xlu0 0
      %1295 = vperm.xlu0 %1294, %v355
      %v1296 = vpop.permute.xlu0 %1295
      %v1298 = vadd.f32 %v1289, %v1296
      %v1299 = vadd.f32 %v1290, %v1296
      %v1300 = vadd.f32 %v1291, %v1296
      %v1301 = vadd.f32 %v1292, %v1296
      %v1302 = vpack.c.bf16 %v380, %v379
      %v1303 = vpack.c.bf16 %v641, %v641
      %v1304 = vpack.c.bf16 %v642, %v642
      %v1305 = vpack.c.bf16 %v643, %v643
      %v1306 = vpack.c.bf16 %v644, %v644
      %1308 = vset.pattern.permute.xlu0 0
      %1309 = vperm.xlu0 %1308, %v356
      %v1310 = vpop.permute.xlu0 %1309
      %1313 = vset.pattern.permute.xlu0 0
      %1314 = vperm.xlu0 %1313, %v357
      %v1315 = vpop.permute.xlu0 %1314
      %v1318 = vsel %vm655, %v1302, 0
      %v1321 = vsel %vm659, %v1303, 0
      %v1324 = vsel %vm659, %v1304, 0
      %v1327 = vsel %vm659, %v1305, 0
      %v1330 = vsel %vm659, %v1306, 0
      %1332 = vmatprep.subr.bf16.mxu0 0
      %1333 = vmatpush1.bf16.msra.mxu0 0
      %1334 = vmatprep.subr.bf16.mxu0 0
      %1335 = vmatpush1.bf16.msra.mxu0 0
      %1336 = vmatprep.subr.bf16.mxu0 0
      %1337 = vmatpush1.bf16.msra.mxu0 0
      %1338 = vmatprep.subr.bf16.mxu0 0
      %1339 = vmatpush1.bf16.msra.mxu0 0
      %1340 = vmatprep.subr.bf16.mxu0 0
      %1341 = vmatpush1.bf16.msra.mxu0 0
      %1342 = vmatprep.subr.bf16.mxu0 0
      %1343 = vmatpush1.bf16.msra.mxu0 0
      %1344 = vmatprep.subr.bf16.mxu0 0
      %1345 = vmatpush1.bf16.msra.mxu0 0
      %1346 = vmatprep.subr.bf16.mxu0 %v1324
      %1347 = vmatpush1.bf16.msra.mxu0 %v1321
      %1348 = vmatprep.subr.bf16.mxu0 0
      %1349 = vmatpush2.bf16.msra.mxu0 0
      %1350 = vmatprep.subr.bf16.mxu0 0
      %1351 = vmatpush2.bf16.msra.mxu0 0
      %1352 = vmatprep.subr.bf16.mxu0 0
      %1353 = vmatpush2.bf16.msra.mxu0 0
      %1354 = vmatprep.subr.bf16.mxu0 0
      %1355 = vmatpush2.bf16.msra.mxu0 0
      %1356 = vmatprep.subr.bf16.mxu0 0
      %1357 = vmatpush2.bf16.msra.mxu0 0
      %1358 = vmatprep.subr.bf16.mxu0 0
      %1359 = vmatpush2.bf16.msra.mxu0 0
      %1360 = vmatprep.subr.bf16.mxu0 0
      %1361 = vmatpush2.bf16.msra.mxu0 0
      %1362 = vmatprep.subr.bf16.mxu0 0
      %1363 = vmatpush2.bf16.msra.mxu0 0
      %1364 = vmatprep.mubr.bf16.mxu0 0
      %1365 = vmatmul.mubr.bf16.gmra.mxu0 %v1318
      %v1366 = vpop.f32.mrf.mxu0
      %v1367 = vadd.f32 %v1310, %v1366
      %v1368 = vpop.f32.mrf.mxu0
      %v1369 = vadd.f32 %v1310, %v1368
      %v1370 = vpop.f32.mrf.mxu0
      %v1371 = vadd.f32 %v1315, %v1370
      %v1372 = vpop.f32.mrf.mxu0
      %v1373 = vadd.f32 %v1315, %v1372
      %1374 = vdwg.mxu0
      %1375 = vmatprep.subr.bf16.mxu0 0
      %1376 = vmatpush1.bf16.msra.mxu0 0
      %1377 = vmatprep.subr.bf16.mxu0 0
      %1378 = vmatpush1.bf16.msra.mxu0 0
      %1379 = vmatprep.subr.bf16.mxu0 0
      %1380 = vmatpush1.bf16.msra.mxu0 0
      %1381 = vmatprep.subr.bf16.mxu0 0
      %1382 = vmatpush1.bf16.msra.mxu0 0
      %1383 = vmatprep.subr.bf16.mxu0 0
      %1384 = vmatpush1.bf16.msra.mxu0 0
      %1385 = vmatprep.subr.bf16.mxu0 0
      %1386 = vmatpush1.bf16.msra.mxu0 0
      %1387 = vmatprep.subr.bf16.mxu0 0
      %1388 = vmatpush1.bf16.msra.mxu0 0
      %1389 = vmatprep.subr.bf16.mxu0 %v1330
      %1390 = vmatpush1.bf16.msra.mxu0 %v1327
      %1391 = vmatprep.subr.bf16.mxu0 0
      %1392 = vmatpush2.bf16.msra.mxu0 0
      %1393 = vmatprep.subr.bf16.mxu0 0
      %1394 = vmatpush2.bf16.msra.mxu0 0
      %1395 = vmatprep.subr.bf16.mxu0 0
      %1396 = vmatpush2.bf16.msra.mxu0 0
      %1397 = vmatprep.subr.bf16.mxu0 0
      %1398 = vmatpush2.bf16.msra.mxu0 0
      %1399 = vmatprep.subr.bf16.mxu0 0
      %1400 = vmatpush2.bf16.msra.mxu0 0
      %1401 = vmatprep.subr.bf16.mxu0 0
      %1402 = vmatpush2.bf16.msra.mxu0 0
      %1403 = vmatprep.subr.bf16.mxu0 0
      %1404 = vmatpush2.bf16.msra.mxu0 0
      %1405 = vmatprep.subr.bf16.mxu0 0
      %1406 = vmatpush2.bf16.msra.mxu0 0
      %1407 = vmatprep.mubr.bf16.mxu0 0
      %1408 = vmatmul.mubr.bf16.gmra.mxu0 %v1318
      %v1409 = vpop.f32.mrf.mxu0
      %v1410 = vadd.f32 %v1310, %v1409
      %v1411 = vpop.f32.mrf.mxu0
      %v1412 = vadd.f32 %v1310, %v1411
      %v1413 = vpop.f32.mrf.mxu0
      %v1414 = vadd.f32 %v1315, %v1413
      %v1415 = vpop.f32.mrf.mxu0
      %v1416 = vadd.f32 %v1315, %v1415
      %1417 = vdwg.mxu0
      %1419 = vset.pattern.permute.xlu0 4
      %1420 = vperm.xlu0 %1419, %v372
      %v1421 = vpop.permute.xlu0 %1420
      %1424 = vset.pattern.permute.xlu0 4
      %1425 = vperm.xlu0 %1424, %v373
      %v1426 = vpop.permute.xlu0 %1425
      %v1428 = vmul.f32 %v1367, %v1421
      %v1429 = vmul.f32 %v1369, %v1421
      %v1430 = vmul.f32 %v1410, %v1421
      %v1431 = vmul.f32 %v1412, %v1421
      %v1432 = vmul.f32 %v1371, %v1426
      %v1433 = vmul.f32 %v1373, %v1426
      %v1434 = vmul.f32 %v1414, %v1426
      %v1435 = vmul.f32 %v1416, %v1426
      %1436 = vrot.lane.b32.xlu0 %v1367, 17
      %v1437 = vpop.permute.xlu0 %1436
      %1438 = vrot.lane.b32.xlu0 %v1371, 17
      %v1439 = vpop.permute.xlu0 %1438
      %1440 = vrot.lane.b32.xlu0 %v1369, 17
      %v1441 = vpop.permute.xlu0 %1440
      %1442 = vrot.lane.b32.xlu0 %v1373, 17
      %v1443 = vpop.permute.xlu0 %1442
      %1444 = vrot.lane.b32.xlu0 %v1410, 17
      %v1445 = vpop.permute.xlu0 %1444
      %1446 = vrot.lane.b32.xlu0 %v1414, 17
      %v1447 = vpop.permute.xlu0 %1446
      %1448 = vrot.lane.b32.xlu0 %v1412, 17
      %v1449 = vpop.permute.xlu0 %1448
      %1450 = vrot.lane.b32.xlu0 %v1416, 17
      %v1451 = vpop.permute.xlu0 %1450
      %v1452 = vsel %vm773, %v1445, %v1449
      %v1453 = vsel %vm773, %v1447, %v1451
      %v1454 = vsel %vm773, %v1441, %v1445
      %v1455 = vsel %vm773, %v1443, %v1447
      %v1456 = vsel %vm773, %v1437, %v1441
      %v1457 = vsel %vm773, %v1439, %v1443
      %v1458 = vsel %vm773, %v1449, %v1437
      %v1459 = vsel %vm773, %v1451, %v1439
      %v1460 = vmul.f32 %v1458, %v802
      %v1461 = vmul.f32 %v1456, %v806
      %v1462 = vmul.f32 %v1454, %v810
      %v1463 = vmul.f32 %v1452, %v814
      %v1464 = vmul.f32 %v1459, %v802
      %v1465 = vmul.f32 %v1457, %v806
      %v1466 = vmul.f32 %v1455, %v810
      %v1467 = vmul.f32 %v1453, %v814
      %1468 = vset.pattern.permute.xlu0 0
      %1469 = vperm.xlu0 %1468, %v372
      %v1470 = vpop.permute.xlu0 %1469
      %1472 = vset.pattern.permute.xlu0 0
      %1473 = vperm.xlu0 %1472, %v373
      %v1474 = vpop.permute.xlu0 %1473
      %v1476 = vmul.f32 %v1460, %v1470
      %v1477 = vmul.f32 %v1461, %v1470
      %v1478 = vmul.f32 %v1462, %v1470
      %v1479 = vmul.f32 %v1463, %v1470
      %v1480 = vmul.f32 %v1464, %v1474
      %v1481 = vmul.f32 %v1465, %v1474
      %v1482 = vmul.f32 %v1466, %v1474
      %v1483 = vmul.f32 %v1467, %v1474
      %v1484 = vadd.f32 %v1428, %v1476
      %v1485 = vadd.f32 %v1429, %v1477
      %v1486 = vadd.f32 %v1430, %v1478
      %v1487 = vadd.f32 %v1431, %v1479
      %v1488 = vadd.f32 %v1432, %v1480
      %v1489 = vadd.f32 %v1433, %v1481
      %v1490 = vadd.f32 %v1434, %v1482
      %v1491 = vadd.f32 %v1435, %v1483
      %1492 = vrot.lane.b32.xlu0 %v1367, 16
      %v1493 = vpop.permute.xlu0 %1492
      %1494 = vrot.lane.b32.xlu0 %v1371, 16
      %v1495 = vpop.permute.xlu0 %1494
      %1496 = vrot.lane.b32.xlu0 %v1369, 16
      %v1497 = vpop.permute.xlu0 %1496
      %1498 = vrot.lane.b32.xlu0 %v1373, 16
      %v1499 = vpop.permute.xlu0 %1498
      %1500 = vrot.lane.b32.xlu0 %v1410, 16
      %v1501 = vpop.permute.xlu0 %1500
      %1502 = vrot.lane.b32.xlu0 %v1414, 16
      %v1503 = vpop.permute.xlu0 %1502
      %1504 = vrot.lane.b32.xlu0 %v1412, 16
      %v1505 = vpop.permute.xlu0 %1504
      %1506 = vrot.lane.b32.xlu0 %v1416, 16
      %v1507 = vpop.permute.xlu0 %1506
      %v1508 = vsel %vm839, %v1501, %v1505
      %v1509 = vsel %vm839, %v1503, %v1507
      %v1510 = vsel %vm839, %v1497, %v1501
      %v1511 = vsel %vm839, %v1499, %v1503
      %v1512 = vsel %vm839, %v1493, %v1497
      %v1513 = vsel %vm839, %v1495, %v1499
      %v1514 = vsel %vm839, %v1505, %v1493
      %v1515 = vsel %vm839, %v1507, %v1495
      %v1516 = vmul.f32 %v1514, %v868
      %v1517 = vmul.f32 %v1512, %v872
      %v1518 = vmul.f32 %v1510, %v876
      %v1519 = vmul.f32 %v1508, %v880
      %v1520 = vmul.f32 %v1515, %v868
      %v1521 = vmul.f32 %v1513, %v872
      %v1522 = vmul.f32 %v1511, %v876
      %v1523 = vmul.f32 %v1509, %v880
      %1524 = vset.pattern.permute.xlu0 1
      %1525 = vperm.xlu0 %1524, %v372
      %v1526 = vpop.permute.xlu0 %1525
      %1528 = vset.pattern.permute.xlu0 1
      %1529 = vperm.xlu0 %1528, %v373
      %v1530 = vpop.permute.xlu0 %1529
      %v1532 = vmul.f32 %v1516, %v1526
      %v1533 = vmul.f32 %v1517, %v1526
      %v1534 = vmul.f32 %v1518, %v1526
      %v1535 = vmul.f32 %v1519, %v1526
      %v1536 = vmul.f32 %v1520, %v1530
      %v1537 = vmul.f32 %v1521, %v1530
      %v1538 = vmul.f32 %v1522, %v1530
      %v1539 = vmul.f32 %v1523, %v1530
      %v1540 = vadd.f32 %v1484, %v1532
      %v1541 = vadd.f32 %v1485, %v1533
      %v1542 = vadd.f32 %v1486, %v1534
      %v1543 = vadd.f32 %v1487, %v1535
      %v1544 = vadd.f32 %v1488, %v1536
      %v1545 = vadd.f32 %v1489, %v1537
      %v1546 = vadd.f32 %v1490, %v1538
      %v1547 = vadd.f32 %v1491, %v1539
      %1548 = vrot.lane.b32.xlu0 %v1367, 15
      %v1549 = vpop.permute.xlu0 %1548
      %1550 = vrot.lane.b32.xlu0 %v1371, 15
      %v1551 = vpop.permute.xlu0 %1550
      %1552 = vrot.lane.b32.xlu0 %v1369, 15
      %v1553 = vpop.permute.xlu0 %1552
      %1554 = vrot.lane.b32.xlu0 %v1373, 15
      %v1555 = vpop.permute.xlu0 %1554
      %1556 = vrot.lane.b32.xlu0 %v1410, 15
      %v1557 = vpop.permute.xlu0 %1556
      %1558 = vrot.lane.b32.xlu0 %v1414, 15
      %v1559 = vpop.permute.xlu0 %1558
      %1560 = vrot.lane.b32.xlu0 %v1412, 15
      %v1561 = vpop.permute.xlu0 %1560
      %1562 = vrot.lane.b32.xlu0 %v1416, 15
      %v1563 = vpop.permute.xlu0 %1562
      %v1564 = vsel %vm905, %v1557, %v1561
      %v1565 = vsel %vm905, %v1559, %v1563
      %v1566 = vsel %vm905, %v1553, %v1557
      %v1567 = vsel %vm905, %v1555, %v1559
      %v1568 = vsel %vm905, %v1549, %v1553
      %v1569 = vsel %vm905, %v1551, %v1555
      %v1570 = vsel %vm905, %v1561, %v1549
      %v1571 = vsel %vm905, %v1563, %v1551
      %v1572 = vmul.f32 %v1570, %v934
      %v1573 = vmul.f32 %v1568, %v938
      %v1574 = vmul.f32 %v1566, %v942
      %v1575 = vmul.f32 %v1564, %v946
      %v1576 = vmul.f32 %v1571, %v934
      %v1577 = vmul.f32 %v1569, %v938
      %v1578 = vmul.f32 %v1567, %v942
      %v1579 = vmul.f32 %v1565, %v946
      %1580 = vset.pattern.permute.xlu0 2
      %1581 = vperm.xlu0 %1580, %v372
      %v1582 = vpop.permute.xlu0 %1581
      %1584 = vset.pattern.permute.xlu0 2
      %1585 = vperm.xlu0 %1584, %v373
      %v1586 = vpop.permute.xlu0 %1585
      %v1588 = vmul.f32 %v1572, %v1582
      %v1589 = vmul.f32 %v1573, %v1582
      %v1590 = vmul.f32 %v1574, %v1582
      %v1591 = vmul.f32 %v1575, %v1582
      %v1592 = vmul.f32 %v1576, %v1586
      %v1593 = vmul.f32 %v1577, %v1586
      %v1594 = vmul.f32 %v1578, %v1586
      %v1595 = vmul.f32 %v1579, %v1586
      %v1596 = vadd.f32 %v1540, %v1588
      %v1597 = vadd.f32 %v1541, %v1589
      %v1598 = vadd.f32 %v1542, %v1590
      %v1599 = vadd.f32 %v1543, %v1591
      %v1600 = vadd.f32 %v1544, %v1592
      %v1601 = vadd.f32 %v1545, %v1593
      %v1602 = vadd.f32 %v1546, %v1594
      %v1603 = vadd.f32 %v1547, %v1595
      %1604 = vrot.lane.b32.xlu0 %v1367, 1
      %v1605 = vpop.permute.xlu0 %1604
      %1606 = vrot.lane.b32.xlu0 %v1371, 1
      %v1607 = vpop.permute.xlu0 %1606
      %1608 = vrot.lane.b32.xlu0 %v1369, 1
      %v1609 = vpop.permute.xlu0 %1608
      %1610 = vrot.lane.b32.xlu0 %v1373, 1
      %v1611 = vpop.permute.xlu0 %1610
      %1612 = vrot.lane.b32.xlu0 %v1410, 1
      %v1613 = vpop.permute.xlu0 %1612
      %1614 = vrot.lane.b32.xlu0 %v1414, 1
      %v1615 = vpop.permute.xlu0 %1614
      %1616 = vrot.lane.b32.xlu0 %v1412, 1
      %v1617 = vpop.permute.xlu0 %1616
      %1618 = vrot.lane.b32.xlu0 %v1416, 1
      %v1619 = vpop.permute.xlu0 %1618
      %v1620 = vsel %vm971, %v1613, %v1617
      %v1621 = vsel %vm971, %v1615, %v1619
      %v1622 = vsel %vm971, %v1609, %v1613
      %v1623 = vsel %vm971, %v1611, %v1615
      %v1624 = vsel %vm971, %v1605, %v1609
      %v1625 = vsel %vm971, %v1607, %v1611
      %v1626 = vsel %vm971, %v1617, %v1605
      %v1627 = vsel %vm971, %v1619, %v1607
      %v1628 = vmul.f32 %v1626, %v1000
      %v1629 = vmul.f32 %v1624, %v1004
      %v1630 = vmul.f32 %v1622, %v1008
      %v1631 = vmul.f32 %v1620, %v1012
      %v1632 = vmul.f32 %v1627, %v1000
      %v1633 = vmul.f32 %v1625, %v1004
      %v1634 = vmul.f32 %v1623, %v1008
      %v1635 = vmul.f32 %v1621, %v1012
      %1636 = vset.pattern.permute.xlu0 3
      %1637 = vperm.xlu0 %1636, %v372
      %v1638 = vpop.permute.xlu0 %1637
      %1640 = vset.pattern.permute.xlu0 3
      %1641 = vperm.xlu0 %1640, %v373
      %v1642 = vpop.permute.xlu0 %1641
      %v1644 = vmul.f32 %v1628, %v1638
      %v1645 = vmul.f32 %v1629, %v1638
      %v1646 = vmul.f32 %v1630, %v1638
      %v1647 = vmul.f32 %v1631, %v1638
      %v1648 = vmul.f32 %v1632, %v1642
      %v1649 = vmul.f32 %v1633, %v1642
      %v1650 = vmul.f32 %v1634, %v1642
      %v1651 = vmul.f32 %v1635, %v1642
      %v1652 = vadd.f32 %v1596, %v1644
      %v1653 = vadd.f32 %v1597, %v1645
      %v1654 = vadd.f32 %v1598, %v1646
      %v1655 = vadd.f32 %v1599, %v1647
      %v1656 = vadd.f32 %v1600, %v1648
      %v1657 = vadd.f32 %v1601, %v1649
      %v1658 = vadd.f32 %v1602, %v1650
      %v1659 = vadd.f32 %v1603, %v1651
      %1660 = vrot.lane.b32.xlu0 %v1367, 127
      %v1661 = vpop.permute.xlu0 %1660
      %1662 = vrot.lane.b32.xlu0 %v1371, 127
      %v1663 = vpop.permute.xlu0 %1662
      %1664 = vrot.lane.b32.xlu0 %v1369, 127
      %v1665 = vpop.permute.xlu0 %1664
      %1666 = vrot.lane.b32.xlu0 %v1373, 127
      %v1667 = vpop.permute.xlu0 %1666
      %1668 = vrot.lane.b32.xlu0 %v1410, 127
      %v1669 = vpop.permute.xlu0 %1668
      %1670 = vrot.lane.b32.xlu0 %v1414, 127
      %v1671 = vpop.permute.xlu0 %1670
      %1672 = vrot.lane.b32.xlu0 %v1412, 127
      %v1673 = vpop.permute.xlu0 %1672
      %1674 = vrot.lane.b32.xlu0 %v1416, 127
      %v1675 = vpop.permute.xlu0 %1674
      %v1676 = vsel %vm1037, %v1669, %v1673
      %v1677 = vsel %vm1037, %v1671, %v1675
      %v1678 = vsel %vm1037, %v1665, %v1669
      %v1679 = vsel %vm1037, %v1667, %v1671
      %v1680 = vsel %vm1037, %v1661, %v1665
      %v1681 = vsel %vm1037, %v1663, %v1667
      %v1682 = vsel %vm1037, %v1673, %v1661
      %v1683 = vsel %vm1037, %v1675, %v1663
      %v1684 = vmul.f32 %v1680, %v1066
      %v1685 = vmul.f32 %v1678, %v1070
      %v1686 = vmul.f32 %v1676, %v1074
      %v1687 = vmul.f32 %v1682, %v1078
      %v1688 = vmul.f32 %v1681, %v1066
      %v1689 = vmul.f32 %v1679, %v1070
      %v1690 = vmul.f32 %v1677, %v1074
      %v1691 = vmul.f32 %v1683, %v1078
      %1692 = vset.pattern.permute.xlu0 5
      %1693 = vperm.xlu0 %1692, %v372
      %v1694 = vpop.permute.xlu0 %1693
      %1696 = vset.pattern.permute.xlu0 5
      %1697 = vperm.xlu0 %1696, %v373
      %v1698 = vpop.permute.xlu0 %1697
      %v1700 = vmul.f32 %v1684, %v1694
      %v1701 = vmul.f32 %v1685, %v1694
      %v1702 = vmul.f32 %v1686, %v1694
      %v1703 = vmul.f32 %v1687, %v1694
      %v1704 = vmul.f32 %v1688, %v1698
      %v1705 = vmul.f32 %v1689, %v1698
      %v1706 = vmul.f32 %v1690, %v1698
      %v1707 = vmul.f32 %v1691, %v1698
      %v1708 = vadd.f32 %v1652, %v1700
      %v1709 = vadd.f32 %v1653, %v1701
      %v1710 = vadd.f32 %v1654, %v1702
      %v1711 = vadd.f32 %v1655, %v1703
      %v1712 = vadd.f32 %v1656, %v1704
      %v1713 = vadd.f32 %v1657, %v1705
      %v1714 = vadd.f32 %v1658, %v1706
      %v1715 = vadd.f32 %v1659, %v1707
      %1716 = vrot.lane.b32.xlu0 %v1367, 113
      %v1717 = vpop.permute.xlu0 %1716
      %1718 = vrot.lane.b32.xlu0 %v1371, 113
      %v1719 = vpop.permute.xlu0 %1718
      %1720 = vrot.lane.b32.xlu0 %v1369, 113
      %v1721 = vpop.permute.xlu0 %1720
      %1722 = vrot.lane.b32.xlu0 %v1373, 113
      %v1723 = vpop.permute.xlu0 %1722
      %1724 = vrot.lane.b32.xlu0 %v1410, 113
      %v1725 = vpop.permute.xlu0 %1724
      %1726 = vrot.lane.b32.xlu0 %v1414, 113
      %v1727 = vpop.permute.xlu0 %1726
      %1728 = vrot.lane.b32.xlu0 %v1412, 113
      %v1729 = vpop.permute.xlu0 %1728
      %1730 = vrot.lane.b32.xlu0 %v1416, 113
      %v1731 = vpop.permute.xlu0 %1730
      %v1732 = vsel %vm1103, %v1725, %v1729
      %v1733 = vsel %vm1103, %v1727, %v1731
      %v1734 = vsel %vm1103, %v1721, %v1725
      %v1735 = vsel %vm1103, %v1723, %v1727
      %v1736 = vsel %vm1103, %v1717, %v1721
      %v1737 = vsel %vm1103, %v1719, %v1723
      %v1738 = vsel %vm1103, %v1729, %v1717
      %v1739 = vsel %vm1103, %v1731, %v1719
      %v1740 = vmul.f32 %v1736, %v1132
      %v1741 = vmul.f32 %v1734, %v1136
      %v1742 = vmul.f32 %v1732, %v1140
      %v1743 = vmul.f32 %v1738, %v1144
      %v1744 = vmul.f32 %v1737, %v1132
      %v1745 = vmul.f32 %v1735, %v1136
      %v1746 = vmul.f32 %v1733, %v1140
      %v1747 = vmul.f32 %v1739, %v1144
      %1748 = vset.pattern.permute.xlu0 6
      %1749 = vperm.xlu0 %1748, %v372
      %v1750 = vpop.permute.xlu0 %1749
      %1752 = vset.pattern.permute.xlu0 6
      %1753 = vperm.xlu0 %1752, %v373
      %v1754 = vpop.permute.xlu0 %1753
      %v1756 = vmul.f32 %v1740, %v1750
      %v1757 = vmul.f32 %v1741, %v1750
      %v1758 = vmul.f32 %v1742, %v1750
      %v1759 = vmul.f32 %v1743, %v1750
      %v1760 = vmul.f32 %v1744, %v1754
      %v1761 = vmul.f32 %v1745, %v1754
      %v1762 = vmul.f32 %v1746, %v1754
      %v1763 = vmul.f32 %v1747, %v1754
      %v1764 = vadd.f32 %v1708, %v1756
      %v1765 = vadd.f32 %v1709, %v1757
      %v1766 = vadd.f32 %v1710, %v1758
      %v1767 = vadd.f32 %v1711, %v1759
      %v1768 = vadd.f32 %v1712, %v1760
      %v1769 = vadd.f32 %v1713, %v1761
      %v1770 = vadd.f32 %v1714, %v1762
      %v1771 = vadd.f32 %v1715, %v1763
      %1772 = vrot.lane.b32.xlu0 %v1367, 112
      %v1773 = vpop.permute.xlu0 %1772
      %1774 = vrot.lane.b32.xlu0 %v1371, 112
      %v1775 = vpop.permute.xlu0 %1774
      %1776 = vrot.lane.b32.xlu0 %v1369, 112
      %v1777 = vpop.permute.xlu0 %1776
      %1778 = vrot.lane.b32.xlu0 %v1373, 112
      %v1779 = vpop.permute.xlu0 %1778
      %1780 = vrot.lane.b32.xlu0 %v1410, 112
      %v1781 = vpop.permute.xlu0 %1780
      %1782 = vrot.lane.b32.xlu0 %v1414, 112
      %v1783 = vpop.permute.xlu0 %1782
      %1784 = vrot.lane.b32.xlu0 %v1412, 112
      %v1785 = vpop.permute.xlu0 %1784
      %1786 = vrot.lane.b32.xlu0 %v1416, 112
      %v1787 = vpop.permute.xlu0 %1786
      %v1788 = vsel %vm1169, %v1781, %v1785
      %v1789 = vsel %vm1169, %v1783, %v1787
      %v1790 = vsel %vm1169, %v1777, %v1781
      %v1791 = vsel %vm1169, %v1779, %v1783
      %v1792 = vsel %vm1169, %v1773, %v1777
      %v1793 = vsel %vm1169, %v1775, %v1779
      %v1794 = vsel %vm1169, %v1785, %v1773
      %v1795 = vsel %vm1169, %v1787, %v1775
      %v1796 = vmul.f32 %v1792, %v1198
      %v1797 = vmul.f32 %v1790, %v1202
      %v1798 = vmul.f32 %v1788, %v1206
      %v1799 = vmul.f32 %v1794, %v1210
      %v1800 = vmul.f32 %v1793, %v1198
      %v1801 = vmul.f32 %v1791, %v1202
      %v1802 = vmul.f32 %v1789, %v1206
      %v1803 = vmul.f32 %v1795, %v1210
      %1804 = vset.pattern.permute.xlu0 7
      %1805 = vperm.xlu0 %1804, %v372
      %v1806 = vpop.permute.xlu0 %1805
      %1808 = vset.pattern.permute.xlu0 7
      %1809 = vperm.xlu0 %1808, %v373
      %v1810 = vpop.permute.xlu0 %1809
      %v1812 = vmul.f32 %v1796, %v1806
      %v1813 = vmul.f32 %v1797, %v1806
      %v1814 = vmul.f32 %v1798, %v1806
      %v1815 = vmul.f32 %v1799, %v1806
      %v1816 = vmul.f32 %v1800, %v1810
      %v1817 = vmul.f32 %v1801, %v1810
      %v1818 = vmul.f32 %v1802, %v1810
      %v1819 = vmul.f32 %v1803, %v1810
      %v1820 = vadd.f32 %v1764, %v1812
      %v1821 = vadd.f32 %v1765, %v1813
      %v1822 = vadd.f32 %v1766, %v1814
      %v1823 = vadd.f32 %v1767, %v1815
      %v1824 = vadd.f32 %v1768, %v1816
      %v1825 = vadd.f32 %v1769, %v1817
      %v1826 = vadd.f32 %v1770, %v1818
      %v1827 = vadd.f32 %v1771, %v1819
      %1828 = vrot.lane.b32.xlu0 %v1367, 111
      %v1829 = vpop.permute.xlu0 %1828
      %1830 = vrot.lane.b32.xlu0 %v1371, 111
      %v1831 = vpop.permute.xlu0 %1830
      %1832 = vrot.lane.b32.xlu0 %v1369, 111
      %v1833 = vpop.permute.xlu0 %1832
      %1834 = vrot.lane.b32.xlu0 %v1373, 111
      %v1835 = vpop.permute.xlu0 %1834
      %1836 = vrot.lane.b32.xlu0 %v1410, 111
      %v1837 = vpop.permute.xlu0 %1836
      %1838 = vrot.lane.b32.xlu0 %v1414, 111
      %v1839 = vpop.permute.xlu0 %1838
      %1840 = vrot.lane.b32.xlu0 %v1412, 111
      %v1841 = vpop.permute.xlu0 %1840
      %1842 = vrot.lane.b32.xlu0 %v1416, 111
      %v1843 = vpop.permute.xlu0 %1842
      %v1844 = vsel %vm1235, %v1837, %v1841
      %v1845 = vsel %vm1235, %v1839, %v1843
      %v1846 = vsel %vm1235, %v1833, %v1837
      %v1847 = vsel %vm1235, %v1835, %v1839
      %v1848 = vsel %vm1235, %v1829, %v1833
      %v1849 = vsel %vm1235, %v1831, %v1835
      %v1850 = vsel %vm1235, %v1841, %v1829
      %v1851 = vsel %vm1235, %v1843, %v1831
      %v1852 = vmul.f32 %v1848, %v1264
      %v1853 = vmul.f32 %v1846, %v1268
      %v1854 = vmul.f32 %v1844, %v1272
      %v1855 = vmul.f32 %v1850, %v1276
      %v1856 = vmul.f32 %v1849, %v1264
      %v1857 = vmul.f32 %v1847, %v1268
      %v1858 = vmul.f32 %v1845, %v1272
      %v1859 = vmul.f32 %v1851, %v1276
      %1860 = vset.pattern.permute.xlu0 8
      %1861 = vperm.xlu0 %1860, %v372
      %v1862 = vpop.permute.xlu0 %1861
      %1864 = vset.pattern.permute.xlu0 8
      %1865 = vperm.xlu0 %1864, %v373
      %v1866 = vpop.permute.xlu0 %1865
      %v1868 = vmul.f32 %v1852, %v1862
      %v1869 = vmul.f32 %v1853, %v1862
      %v1870 = vmul.f32 %v1854, %v1862
      %v1871 = vmul.f32 %v1855, %v1862
      %v1872 = vmul.f32 %v1856, %v1866
      %v1873 = vmul.f32 %v1857, %v1866
      %v1874 = vmul.f32 %v1858, %v1866
      %v1875 = vmul.f32 %v1859, %v1866
      %v1876 = vadd.f32 %v1820, %v1868
      %v1877 = vadd.f32 %v1821, %v1869
      %v1878 = vadd.f32 %v1822, %v1870
      %v1879 = vadd.f32 %v1823, %v1871
      %v1880 = vadd.f32 %v1824, %v1872
      %v1881 = vadd.f32 %v1825, %v1873
      %v1882 = vadd.f32 %v1826, %v1874
      %v1883 = vadd.f32 %v1827, %v1875
      %1885 = vset.pattern.permute.xlu0 0
      %1886 = vperm.xlu0 %1885, %v358
      %v1887 = vpop.permute.xlu0 %1886
      %1890 = vset.pattern.permute.xlu0 0
      %1891 = vperm.xlu0 %1890, %v359
      %v1892 = vpop.permute.xlu0 %1891
      %v1894 = vadd.f32 %v1876, %v1887
      %v1895 = vadd.f32 %v1877, %v1887
      %v1896 = vadd.f32 %v1878, %v1887
      %v1897 = vadd.f32 %v1879, %v1887
      %v1898 = vadd.f32 %v1880, %v1892
      %v1899 = vadd.f32 %v1881, %v1892
      %v1900 = vadd.f32 %v1882, %v1892
      %v1901 = vadd.f32 %v1883, %v1892
      %v1902 = vmul.f32 %v1298, %v1298
      %v1903 = vmul.f32 %v1299, %v1299
      %v1904 = vadd.f32 %v1902, %v1903
      %1905 = vadd.xlane.f32.xlu0 %v1904
      %v1906 = vpop.xlane.xlu0 %1905
      %v1907 = vrsqrt.pop %v1906
      %v1908 = vmul.f32 %v1906, %v1907
      %vm1909 = vcmp.eq.f32.partialorder %v1906, inf
      %v1910 = vsel %vm1909, %v1906, %v1908
      %vm1911 = vcmp.eq.f32.partialorder %v1906, 0.0
      %v1912 = vand.u32 %v1906, 2147483648
      %v1913 = vsel %vm1911, %v1912, %v1910
      %v1914 = vmax.f32 %v1913, 1e-12
      %v1915 = vrcp.pop %v1914
      %v1916 = vmul.f32 %v1298, %v1915
      %v1917 = vmul.f32 %v1299, %v1915
      %v1918 = vpack.c.bf16 %v1916, %v1916
      %v1919 = vpack.c.bf16 %v1917, %v1917
      %v1920 = vmul.f32 %v1894, %v1894
      %v1921 = vmul.f32 %v1895, %v1895
      %v1922 = vadd.f32 %v1920, %v1921
      %1923 = vadd.xlane.f32.xlu0 %v1922
      %v1924 = vpop.xlane.xlu0 %1923
      %v1925 = vrsqrt.pop %v1924
      %v1926 = vmul.f32 %v1924, %v1925
      %vm1927 = vcmp.eq.f32.partialorder %v1924, inf
      %v1928 = vsel %vm1927, %v1924, %v1926
      %vm1929 = vcmp.eq.f32.partialorder %v1924, 0.0
      %v1930 = vand.u32 %v1924, 2147483648
      %v1931 = vsel %vm1929, %v1930, %v1928
      %v1932 = vmax.f32 %v1931, 1e-12
      %v1933 = vrcp.pop %v1932
      %v1934 = vmul.f32 %v1894, %v1933
      %v1935 = vmul.f32 %v1895, %v1933
      %v1936 = vpack.c.bf16 %v1934, %v1934
      %v1937 = vpack.c.bf16 %v1935, %v1935
      %1938 = vmatprep.subr.bf16.mxu0 0
      %1939 = vmatpush1.bf16.xpose.msra.mxu0 0
      %1940 = vmatprep.subr.bf16.mxu0 0
      %1941 = vmatpush1.bf16.xpose.msra.mxu0 0
      %1942 = vmatprep.subr.bf16.mxu0 0
      %1943 = vmatpush1.bf16.xpose.msra.mxu0 0
      %1944 = vmatprep.subr.bf16.mxu0 0
      %1945 = vmatpush1.bf16.xpose.msra.mxu0 0
      %1946 = vmatprep.subr.bf16.mxu0 0
      %1947 = vmatpush1.bf16.xpose.msra.mxu0 0
      %1948 = vmatprep.subr.bf16.mxu0 0
      %1949 = vmatpush1.bf16.xpose.msra.mxu0 0
      %1950 = vmatprep.subr.bf16.mxu0 0
      %1951 = vmatpush1.bf16.xpose.msra.mxu0 0
      %1952 = vmatprep.subr.bf16.mxu0 %v1937
      %1953 = vmatpush1.bf16.xpose.msra.mxu0 %v1936
      %1954 = vmatprep.subr.bf16.mxu0 0
      %1955 = vmatpush2.bf16.xpose.msra.mxu0 0
      %1956 = vmatprep.subr.bf16.mxu0 0
      %1957 = vmatpush2.bf16.xpose.msra.mxu0 0
      %1958 = vmatprep.subr.bf16.mxu0 0
      %1959 = vmatpush2.bf16.xpose.msra.mxu0 0
      %1960 = vmatprep.subr.bf16.mxu0 0
      %1961 = vmatpush2.bf16.xpose.msra.mxu0 0
      %1962 = vmatprep.subr.bf16.mxu0 0
      %1963 = vmatpush2.bf16.xpose.msra.mxu0 0
      %1964 = vmatprep.subr.bf16.mxu0 0
      %1965 = vmatpush2.bf16.xpose.msra.mxu0 0
      %1966 = vmatprep.subr.bf16.mxu0 0
      %1967 = vmatpush2.bf16.xpose.msra.mxu0 0
      %1968 = vmatprep.subr.bf16.mxu0 0
      %1969 = vmatpush2.bf16.xpose.msra.mxu0 0
      %1970 = vmatprep.mubr.bf16.mxu0 %v1919
      %1971 = vmatmul.mubr.bf16.gmra.mxu0 %v1918
      %v1972 = vpop.f32.mrf.mxu0
      %v1973 = vadd.f32 0.0, %v1972
      %v1974 = vpop.f32.mrf.mxu0
      %v1975 = vpop.f32.mrf.mxu0
      %v1976 = vpop.f32.mrf.mxu0
      %1977 = vdwg.mxu0
      %1979 = vset.pattern.permute.xlu0 0
      %1980 = vperm.xlu0 %1979, %v361
      %v1981 = vpop.permute.xlu0 %1980
      %v1983 = vmul.f32 %v1973, %v1981
      %v1984 = vadd.f32 %v1983, %v387
      %v1985 = vsel %vm655, %v1984, -inf
      %1986 = vmax.xlane.f32.xlu0 %v1985
      %v1987 = vpop.xlane.xlu0 %1986
      %v1988 = vsub.f32 %v1984, %v1987
      %v1989 = vmul.f32 %v1988, 1.442695
      %v1990 = vpow.pop %v1989
      %v1991 = vsel %vm655, %v1990, 0.0
      %1992 = vadd.xlane.f32.xlu0 %v1991
      %v1993 = vpop.xlane.xlu0 %1992
      %v1994 = vrcp.pop %v1993
      %v1995 = vmul.f32 %v1990, %v1994
      %v1996 = vpack.c.bf16 %v1995, %v1995
      %v1997 = vpack.c.bf16 %v1898, %v1898
      %v1998 = vpack.c.bf16 %v1899, %v1899
      %v2000 = vsel %vm655, %v1996, 0
      %v2003 = vsel %vm659, %v1997, 0
      %v2006 = vsel %vm659, %v1998, 0
      %2008 = vmatprep.subr.bf16.mxu0 0
      %2009 = vmatpush1.bf16.msra.mxu0 0
      %2010 = vmatprep.subr.bf16.mxu0 0
      %2011 = vmatpush1.bf16.msra.mxu0 0
      %2012 = vmatprep.subr.bf16.mxu0 0
      %2013 = vmatpush1.bf16.msra.mxu0 0
      %2014 = vmatprep.subr.bf16.mxu0 0
      %2015 = vmatpush1.bf16.msra.mxu0 0
      %2016 = vmatprep.subr.bf16.mxu0 0
      %2017 = vmatpush1.bf16.msra.mxu0 0
      %2018 = vmatprep.subr.bf16.mxu0 0
      %2019 = vmatpush1.bf16.msra.mxu0 0
      %2020 = vmatprep.subr.bf16.mxu0 0
      %2021 = vmatpush1.bf16.msra.mxu0 0
      %2022 = vmatprep.subr.bf16.mxu0 %v2006
      %2023 = vmatpush1.bf16.msra.mxu0 %v2003
      %2024 = vmatprep.subr.bf16.mxu0 0
      %2025 = vmatpush2.bf16.msra.mxu0 0
      %2026 = vmatprep.subr.bf16.mxu0 0
      %2027 = vmatpush2.bf16.msra.mxu0 0
      %2028 = vmatprep.subr.bf16.mxu0 0
      %2029 = vmatpush2.bf16.msra.mxu0 0
      %2030 = vmatprep.subr.bf16.mxu0 0
      %2031 = vmatpush2.bf16.msra.mxu0 0
      %2032 = vmatprep.subr.bf16.mxu0 0
      %2033 = vmatpush2.bf16.msra.mxu0 0
      %2034 = vmatprep.subr.bf16.mxu0 0
      %2035 = vmatpush2.bf16.msra.mxu0 0
      %2036 = vmatprep.subr.bf16.mxu0 0
      %2037 = vmatpush2.bf16.msra.mxu0 0
      %2038 = vmatprep.subr.bf16.mxu0 0
      %2039 = vmatpush2.bf16.msra.mxu0 0
      %2040 = vmatprep.mubr.bf16.mxu0 0
      %2041 = vmatmul.mubr.bf16.gmra.mxu0 %v2000
      %v2042 = vpop.f32.mrf.mxu0
      %v2043 = vadd.f32 0.0, %v2042
      %v2044 = vpop.f32.mrf.mxu0
      %v2045 = vadd.f32 0.0, %v2044
      %v2046 = vpop.f32.mrf.mxu0
      %v2047 = vpop.f32.mrf.mxu0
      %2048 = vdwg.mxu0
      %v2049 = vmul.f32 %v1300, %v1300
      %v2050 = vmul.f32 %v1301, %v1301
      %v2051 = vadd.f32 %v2049, %v2050
      %2052 = vadd.xlane.f32.xlu0 %v2051
      %v2053 = vpop.xlane.xlu0 %2052
      %v2054 = vrsqrt.pop %v2053
      %v2055 = vmul.f32 %v2053, %v2054
      %vm2056 = vcmp.eq.f32.partialorder %v2053, inf
      %v2057 = vsel %vm2056, %v2053, %v2055
      %vm2058 = vcmp.eq.f32.partialorder %v2053, 0.0
      %v2059 = vand.u32 %v2053, 2147483648
      %v2060 = vsel %vm2058, %v2059, %v2057
      %v2061 = vmax.f32 %v2060, 1e-12
      %v2062 = vrcp.pop %v2061
      %v2063 = vmul.f32 %v1300, %v2062
      %v2064 = vmul.f32 %v1301, %v2062
      %v2065 = vpack.c.bf16 %v2063, %v2063
      %v2066 = vpack.c.bf16 %v2064, %v2064
      %v2067 = vmul.f32 %v1896, %v1896
      %v2068 = vmul.f32 %v1897, %v1897
      %v2069 = vadd.f32 %v2067, %v2068
      %2070 = vadd.xlane.f32.xlu0 %v2069
      %v2071 = vpop.xlane.xlu0 %2070
      %v2072 = vrsqrt.pop %v2071
      %v2073 = vmul.f32 %v2071, %v2072
      %vm2074 = vcmp.eq.f32.partialorder %v2071, inf
      %v2075 = vsel %vm2074, %v2071, %v2073
      %vm2076 = vcmp.eq.f32.partialorder %v2071, 0.0
      %v2077 = vand.u32 %v2071, 2147483648
      %v2078 = vsel %vm2076, %v2077, %v2075
      %v2079 = vmax.f32 %v2078, 1e-12
      %v2080 = vrcp.pop %v2079
      %v2081 = vmul.f32 %v1896, %v2080
      %v2082 = vmul.f32 %v1897, %v2080
      %v2083 = vpack.c.bf16 %v2081, %v2081
      %v2084 = vpack.c.bf16 %v2082, %v2082
      %2085 = vmatprep.subr.bf16.mxu0 0
      %2086 = vmatpush1.bf16.xpose.msra.mxu0 0
      %2087 = vmatprep.subr.bf16.mxu0 0
      %2088 = vmatpush1.bf16.xpose.msra.mxu0 0
      %2089 = vmatprep.subr.bf16.mxu0 0
      %2090 = vmatpush1.bf16.xpose.msra.mxu0 0
      %2091 = vmatprep.subr.bf16.mxu0 0
      %2092 = vmatpush1.bf16.xpose.msra.mxu0 0
      %2093 = vmatprep.subr.bf16.mxu0 0
      %2094 = vmatpush1.bf16.xpose.msra.mxu0 0
      %2095 = vmatprep.subr.bf16.mxu0 0
      %2096 = vmatpush1.bf16.xpose.msra.mxu0 0
      %2097 = vmatprep.subr.bf16.mxu0 0
      %2098 = vmatpush1.bf16.xpose.msra.mxu0 0
      %2099 = vmatprep.subr.bf16.mxu0 %v2084
      %2100 = vmatpush1.bf16.xpose.msra.mxu0 %v2083
      %2101 = vmatprep.subr.bf16.mxu0 0
      %2102 = vmatpush2.bf16.xpose.msra.mxu0 0
      %2103 = vmatprep.subr.bf16.mxu0 0
      %2104 = vmatpush2.bf16.xpose.msra.mxu0 0
      %2105 = vmatprep.subr.bf16.mxu0 0
      %2106 = vmatpush2.bf16.xpose.msra.mxu0 0
      %2107 = vmatprep.subr.bf16.mxu0 0
      %2108 = vmatpush2.bf16.xpose.msra.mxu0 0
      %2109 = vmatprep.subr.bf16.mxu0 0
      %2110 = vmatpush2.bf16.xpose.msra.mxu0 0
      %2111 = vmatprep.subr.bf16.mxu0 0
      %2112 = vmatpush2.bf16.xpose.msra.mxu0 0
      %2113 = vmatprep.subr.bf16.mxu0 0
      %2114 = vmatpush2.bf16.xpose.msra.mxu0 0
      %2115 = vmatprep.subr.bf16.mxu0 0
      %2116 = vmatpush2.bf16.xpose.msra.mxu0 0
      %2117 = vmatprep.mubr.bf16.mxu0 %v2066
      %2118 = vmatmul.mubr.bf16.gmra.mxu0 %v2065
      %v2119 = vpop.f32.mrf.mxu0
      %v2120 = vadd.f32 0.0, %v2119
      %v2121 = vpop.f32.mrf.mxu0
      %v2122 = vpop.f32.mrf.mxu0
      %v2123 = vpop.f32.mrf.mxu0
      %2124 = vdwg.mxu0
      %v2125 = vmul.f32 %v2120, %v1981
      %v2126 = vadd.f32 %v2125, %v387
      %v2127 = vsel %vm655, %v2126, -inf
      %2128 = vmax.xlane.f32.xlu0 %v2127
      %v2129 = vpop.xlane.xlu0 %2128
      %v2130 = vsub.f32 %v2126, %v2129
      %v2131 = vmul.f32 %v2130, 1.442695
      %v2132 = vpow.pop %v2131
      %v2133 = vsel %vm655, %v2132, 0.0
      %2134 = vadd.xlane.f32.xlu0 %v2133
      %v2135 = vpop.xlane.xlu0 %2134
      %v2136 = vrcp.pop %v2135
      %v2137 = vmul.f32 %v2132, %v2136
      %v2138 = vpack.c.bf16 %v2137, %v2137
      %v2139 = vpack.c.bf16 %v1900, %v1900
      %v2140 = vpack.c.bf16 %v1901, %v1901
      %v2142 = vsel %vm655, %v2138, 0
      %v2145 = vsel %vm659, %v2139, 0
      %v2148 = vsel %vm659, %v2140, 0
      %2150 = vmatprep.subr.bf16.mxu0 0
      %2151 = vmatpush1.bf16.msra.mxu0 0
      %2152 = vmatprep.subr.bf16.mxu0 0
      %2153 = vmatpush1.bf16.msra.mxu0 0
      %2154 = vmatprep.subr.bf16.mxu0 0
      %2155 = vmatpush1.bf16.msra.mxu0 0
      %2156 = vmatprep.subr.bf16.mxu0 0
      %2157 = vmatpush1.bf16.msra.mxu0 0
      %2158 = vmatprep.subr.bf16.mxu0 0
      %2159 = vmatpush1.bf16.msra.mxu0 0
      %2160 = vmatprep.subr.bf16.mxu0 0
      %2161 = vmatpush1.bf16.msra.mxu0 0
      %2162 = vmatprep.subr.bf16.mxu0 0
      %2163 = vmatpush1.bf16.msra.mxu0 0
      %2164 = vmatprep.subr.bf16.mxu0 %v2148
      %2165 = vmatpush1.bf16.msra.mxu0 %v2145
      %2166 = vmatprep.subr.bf16.mxu0 0
      %2167 = vmatpush2.bf16.msra.mxu0 0
      %2168 = vmatprep.subr.bf16.mxu0 0
      %2169 = vmatpush2.bf16.msra.mxu0 0
      %2170 = vmatprep.subr.bf16.mxu0 0
      %2171 = vmatpush2.bf16.msra.mxu0 0
      %2172 = vmatprep.subr.bf16.mxu0 0
      %2173 = vmatpush2.bf16.msra.mxu0 0
      %2174 = vmatprep.subr.bf16.mxu0 0
      %2175 = vmatpush2.bf16.msra.mxu0 0
      %2176 = vmatprep.subr.bf16.mxu0 0
      %2177 = vmatpush2.bf16.msra.mxu0 0
      %2178 = vmatprep.subr.bf16.mxu0 0
      %2179 = vmatpush2.bf16.msra.mxu0 0
      %2180 = vmatprep.subr.bf16.mxu0 0
      %2181 = vmatpush2.bf16.msra.mxu0 0
      %2182 = vmatprep.mubr.bf16.mxu0 0
      %2183 = vmatmul.mubr.bf16.gmra.mxu0 %v2142
      %v2184 = vpop.f32.mrf.mxu0
      %v2185 = vadd.f32 0.0, %v2184
      %v2186 = vpop.f32.mrf.mxu0
      %v2187 = vadd.f32 0.0, %v2186
      %v2188 = vpop.f32.mrf.mxu0
      %v2189 = vpop.f32.mrf.mxu0
      %2190 = vdwg.mxu0
      %v2191 = vpack.c.bf16 %v381, %v381
      %v2192 = vpack.c.bf16 %v2043, %v2043
      %v2193 = vpack.c.bf16 %v2045, %v2045
      %v2194 = vpack.c.bf16 %v2185, %v2185
      %v2195 = vpack.c.bf16 %v2187, %v2187
      %v2197 = vsel %vm655, %v2191, 0
      %v2200 = vsel %vm659, %v2192, 0
      %v2203 = vsel %vm659, %v2193, 0
      %v2206 = vsel %vm659, %v2194, 0
      %v2209 = vsel %vm659, %v2195, 0
      %2211 = vmatprep.subr.bf16.mxu0 0
      %2212 = vmatpush1.bf16.msra.mxu0 0
      %2213 = vmatprep.subr.bf16.mxu0 0
      %2214 = vmatpush1.bf16.msra.mxu0 0
      %2215 = vmatprep.subr.bf16.mxu0 0
      %2216 = vmatpush1.bf16.msra.mxu0 0
      %2217 = vmatprep.subr.bf16.mxu0 0
      %2218 = vmatpush1.bf16.msra.mxu0 0
      %2219 = vmatprep.subr.bf16.mxu0 0
      %2220 = vmatpush1.bf16.msra.mxu0 0
      %2221 = vmatprep.subr.bf16.mxu0 0
      %2222 = vmatpush1.bf16.msra.mxu0 0
      %2223 = vmatprep.subr.bf16.mxu0 0
      %2224 = vmatpush1.bf16.msra.mxu0 0
      %2225 = vmatprep.subr.bf16.mxu0 %v2203
      %2226 = vmatpush1.bf16.msra.mxu0 %v2200
      %2227 = vmatprep.subr.bf16.mxu0 0
      %2228 = vmatpush2.bf16.msra.mxu0 0
      %2229 = vmatprep.subr.bf16.mxu0 0
      %2230 = vmatpush2.bf16.msra.mxu0 0
      %2231 = vmatprep.subr.bf16.mxu0 0
      %2232 = vmatpush2.bf16.msra.mxu0 0
      %2233 = vmatprep.subr.bf16.mxu0 0
      %2234 = vmatpush2.bf16.msra.mxu0 0
      %2235 = vmatprep.subr.bf16.mxu0 0
      %2236 = vmatpush2.bf16.msra.mxu0 0
      %2237 = vmatprep.subr.bf16.mxu0 0
      %2238 = vmatpush2.bf16.msra.mxu0 0
      %2239 = vmatprep.subr.bf16.mxu0 0
      %2240 = vmatpush2.bf16.msra.mxu0 0
      %2241 = vmatprep.subr.bf16.mxu0 0
      %2242 = vmatpush2.bf16.msra.mxu0 0
      %2243 = vmatprep.mubr.bf16.mxu0 0
      %2244 = vmatmul.mubr.bf16.gmra.mxu0 %v2197
      %v2245 = vpop.f32.mrf.mxu0
      %v2246 = vadd.f32 0.0, %v2245
      %v2247 = vpop.f32.mrf.mxu0
      %v2248 = vadd.f32 0.0, %v2247
      %v2249 = vpop.f32.mrf.mxu0
      %v2250 = vpop.f32.mrf.mxu0
      %2251 = vdwg.mxu0
      %2252 = vmatprep.subr.bf16.mxu0 0
      %2253 = vmatpush1.bf16.msra.mxu0 0
      %2254 = vmatprep.subr.bf16.mxu0 0
      %2255 = vmatpush1.bf16.msra.mxu0 0
      %2256 = vmatprep.subr.bf16.mxu0 0
      %2257 = vmatpush1.bf16.msra.mxu0 0
      %2258 = vmatprep.subr.bf16.mxu0 0
      %2259 = vmatpush1.bf16.msra.mxu0 0
      %2260 = vmatprep.subr.bf16.mxu0 0
      %2261 = vmatpush1.bf16.msra.mxu0 0
      %2262 = vmatprep.subr.bf16.mxu0 0
      %2263 = vmatpush1.bf16.msra.mxu0 0
      %2264 = vmatprep.subr.bf16.mxu0 0
      %2265 = vmatpush1.bf16.msra.mxu0 0
      %2266 = vmatprep.subr.bf16.mxu0 %v2209
      %2267 = vmatpush1.bf16.msra.mxu0 %v2206
      %2268 = vmatprep.subr.bf16.mxu0 0
      %2269 = vmatpush2.bf16.msra.mxu0 0
      %2270 = vmatprep.subr.bf16.mxu0 0
      %2271 = vmatpush2.bf16.msra.mxu0 0
      %2272 = vmatprep.subr.bf16.mxu0 0
      %2273 = vmatpush2.bf16.msra.mxu0 0
      %2274 = vmatprep.subr.bf16.mxu0 0
      %2275 = vmatpush2.bf16.msra.mxu0 0
      %2276 = vmatprep.subr.bf16.mxu0 0
      %2277 = vmatpush2.bf16.msra.mxu0 0
      %2278 = vmatprep.subr.bf16.mxu0 0
      %2279 = vmatpush2.bf16.msra.mxu0 0
      %2280 = vmatprep.subr.bf16.mxu0 0
      %2281 = vmatpush2.bf16.msra.mxu0 0
      %2282 = vmatprep.subr.bf16.mxu0 0
      %2283 = vmatpush2.bf16.msra.mxu0 0
      %2284 = vmatprep.mubr.bf16.mxu0 0
      %2285 = vmatmul.mubr.bf16.gmra.mxu0 %v2197
      %v2286 = vpop.f32.mrf.mxu0
      %v2287 = vadd.f32 0.0, %v2286
      %v2288 = vpop.f32.mrf.mxu0
      %v2289 = vadd.f32 0.0, %v2288
      %v2290 = vpop.f32.mrf.mxu0
      %v2291 = vpop.f32.mrf.mxu0
      %2292 = vdwg.mxu0
      %v2293 = vadd.f32 %v340, %v2246
      %v2294 = vadd.f32 %v341, %v2248
      %v2295 = vadd.f32 %v342, %v2287
      %v2296 = vadd.f32 %v343, %v2289
      %2298 = vset.pattern.permute.xlu0 0
      %2299 = vperm.xlu0 %2298, %v360
      %v2300 = vpop.permute.xlu0 %2299
      %v2302 = vadd.f32 %v2293, %v2300
      %v2303 = vadd.f32 %v2294, %v2300
      %v2304 = vadd.f32 %v2295, %v2300
      %v2305 = vadd.f32 %v2296, %v2300
      %v2306 = vrot.slane %v2302, 4
      %v2307 = vadd.f32 %v2302, %v2306
      %v2308 = vrot.slane %v2307, 2
      %v2309 = vadd.f32 %v2307, %v2308
      %v2310 = vrot.slane %v2309, 1
      %v2311 = vadd.f32 %v2309, %v2310
      %v2312 = vrot.slane %v2303, 4
      %v2313 = vadd.f32 %v2303, %v2312
      %v2314 = vrot.slane %v2313, 2
      %v2315 = vadd.f32 %v2313, %v2314
      %v2316 = vrot.slane %v2315, 1
      %v2317 = vadd.f32 %v2315, %v2316
      %v2318 = vrot.slane %v2304, 4
      %v2319 = vadd.f32 %v2304, %v2318
      %v2320 = vrot.slane %v2319, 2
      %v2321 = vadd.f32 %v2319, %v2320
      %v2322 = vrot.slane %v2321, 1
      %v2323 = vadd.f32 %v2321, %v2322
      %v2324 = vrot.slane %v2305, 4
      %v2325 = vadd.f32 %v2305, %v2324
      %v2326 = vrot.slane %v2325, 2
      %v2327 = vadd.f32 %v2325, %v2326
      %v2328 = vrot.slane %v2327, 1
      %v2329 = vadd.f32 %v2327, %v2328
      %v2330 = vmul.f32 %v2311, %v480
      %v2331 = vmul.f32 %v2317, %v480
      %v2332 = vmul.f32 %v2323, %v480
      %v2333 = vmul.f32 %v2329, %v480
      %v2334 = vsub.f32 %v2302, %v2330
      %v2335 = vsub.f32 %v2303, %v2331
      %v2336 = vsub.f32 %v2304, %v2332
      %v2337 = vsub.f32 %v2305, %v2333
      %v2338 = vmul.f32 %v2334, %v2334
      %v2339 = vmul.f32 %v2335, %v2335
      %v2340 = vmul.f32 %v2336, %v2336
      %v2341 = vmul.f32 %v2337, %v2337
      %v2342 = vrot.slane %v2338, 4
      %v2343 = vadd.f32 %v2338, %v2342
      %v2344 = vrot.slane %v2343, 2
      %v2345 = vadd.f32 %v2343, %v2344
      %v2346 = vrot.slane %v2345, 1
      %v2347 = vadd.f32 %v2345, %v2346
      %v2348 = vrot.slane %v2339, 4
      %v2349 = vadd.f32 %v2339, %v2348
      %v2350 = vrot.slane %v2349, 2
      %v2351 = vadd.f32 %v2349, %v2350
      %v2352 = vrot.slane %v2351, 1
      %v2353 = vadd.f32 %v2351, %v2352
      %v2354 = vrot.slane %v2340, 4
      %v2355 = vadd.f32 %v2340, %v2354
      %v2356 = vrot.slane %v2355, 2
      %v2357 = vadd.f32 %v2355, %v2356
      %v2358 = vrot.slane %v2357, 1
      %v2359 = vadd.f32 %v2357, %v2358
      %v2360 = vrot.slane %v2341, 4
      %v2361 = vadd.f32 %v2341, %v2360
      %v2362 = vrot.slane %v2361, 2
      %v2363 = vadd.f32 %v2361, %v2362
      %v2364 = vrot.slane %v2363, 1
      %v2365 = vadd.f32 %v2363, %v2364
      %v2366 = vmul.f32 %v2347, %v480
      %v2367 = vmul.f32 %v2353, %v480
      %v2368 = vmul.f32 %v2359, %v480
      %v2369 = vmul.f32 %v2365, %v480
      %v2370 = vadd.f32 %v2366, 1e-05
      %v2371 = vadd.f32 %v2367, 1e-05
      %v2372 = vadd.f32 %v2368, 1e-05
      %v2373 = vadd.f32 %v2369, 1e-05
      %v2374 = vrsqrt.pop %v2370
      %v2375 = vrsqrt.pop %v2371
      %v2376 = vrsqrt.pop %v2372
      %v2377 = vrsqrt.pop %v2373
      %v2378 = vmul.f32 %v2334, %v2374
      %v2379 = vmul.f32 %v2335, %v2375
      %v2380 = vmul.f32 %v2336, %v2376
      %v2381 = vmul.f32 %v2337, %v2377
      %2383 = vset.pattern.permute.xlu0 0
      %2384 = vperm.xlu0 %2383, %v352
      %v2385 = vpop.permute.xlu0 %2384
      %v2387 = vmul.f32 %v2378, %v2385
      %v2388 = vmul.f32 %v2379, %v2385
      %v2389 = vmul.f32 %v2380, %v2385
      %v2390 = vmul.f32 %v2381, %v2385
      %2392 = vset.pattern.permute.xlu0 0
      %2393 = vperm.xlu0 %2392, %v353
      %v2394 = vpop.permute.xlu0 %2393
      %v2396 = vadd.f32 %v2387, %v2394
      %v2397 = vadd.f32 %v2388, %v2394
      %v2398 = vadd.f32 %v2389, %v2394
      %v2399 = vadd.f32 %v2390, %v2394
      %v2400 = vpack.c.bf16 %v383, %v382
      %v2401 = vpack.c.bf16 %v385, %v384
      %v2402 = vpack.c.bf16 %v2396, %v2396
      %v2403 = vpack.c.bf16 %v2397, %v2397
      %v2404 = vpack.c.bf16 %v2398, %v2398
      %v2405 = vpack.c.bf16 %v2399, %v2399
      %2407 = vset.pattern.permute.xlu0 0
      %2408 = vperm.xlu0 %2407, %v362
      %v2409 = vpop.permute.xlu0 %2408
      %2412 = vset.pattern.permute.xlu0 0
      %2413 = vperm.xlu0 %2412, %v363
      %v2414 = vpop.permute.xlu0 %2413
      %2417 = vset.pattern.permute.xlu0 0
      %2418 = vperm.xlu0 %2417, %v364
      %v2419 = vpop.permute.xlu0 %2418
      %2422 = vset.pattern.permute.xlu0 0
      %2423 = vperm.xlu0 %2422, %v365
      %v2424 = vpop.permute.xlu0 %2423
      %v2427 = vsel %vm655, %v2400, 0
      %v2430 = vsel %vm655, %v2401, 0
      %v2433 = vsel %vm659, %v2402, 0
      %v2436 = vsel %vm659, %v2403, 0
      %v2439 = vsel %vm659, %v2404, 0
      %v2442 = vsel %vm659, %v2405, 0
      %2444 = vmatprep.subr.bf16.mxu0 0
      %2445 = vmatpush1.bf16.msra.mxu0 0
      %2446 = vmatprep.subr.bf16.mxu0 0
      %2447 = vmatpush1.bf16.msra.mxu0 0
      %2448 = vmatprep.subr.bf16.mxu0 0
      %2449 = vmatpush1.bf16.msra.mxu0 0
      %2450 = vmatprep.subr.bf16.mxu0 0
      %2451 = vmatpush1.bf16.msra.mxu0 0
      %2452 = vmatprep.subr.bf16.mxu0 0
      %2453 = vmatpush1.bf16.msra.mxu0 0
      %2454 = vmatprep.subr.bf16.mxu0 0
      %2455 = vmatpush1.bf16.msra.mxu0 0
      %2456 = vmatprep.subr.bf16.mxu0 0
      %2457 = vmatpush1.bf16.msra.mxu0 0
      %2458 = vmatprep.subr.bf16.mxu0 %v2436
      %2459 = vmatpush1.bf16.msra.mxu0 %v2433
      %2460 = vmatprep.subr.bf16.mxu0 0
      %2461 = vmatpush2.bf16.msra.mxu0 0
      %2462 = vmatprep.subr.bf16.mxu0 0
      %2463 = vmatpush2.bf16.msra.mxu0 0
      %2464 = vmatprep.subr.bf16.mxu0 0
      %2465 = vmatpush2.bf16.msra.mxu0 0
      %2466 = vmatprep.subr.bf16.mxu0 0
      %2467 = vmatpush2.bf16.msra.mxu0 0
      %2468 = vmatprep.subr.bf16.mxu0 0
      %2469 = vmatpush2.bf16.msra.mxu0 0
      %2470 = vmatprep.subr.bf16.mxu0 0
      %2471 = vmatpush2.bf16.msra.mxu0 0
      %2472 = vmatprep.subr.bf16.mxu0 0
      %2473 = vmatpush2.bf16.msra.mxu0 0
      %2474 = vmatprep.subr.bf16.mxu0 0
      %2475 = vmatpush2.bf16.msra.mxu0 0
      %2476 = vmatprep.mubr.bf16.mxu0 0
      %2477 = vmatmul.mubr.bf16.gmra.mxu0 %v2427
      %v2478 = vpop.f32.mrf.mxu0
      %v2479 = vadd.f32 %v2409, %v2478
      %v2480 = vpop.f32.mrf.mxu0
      %v2481 = vadd.f32 %v2409, %v2480
      %v2482 = vpop.f32.mrf.mxu0
      %v2483 = vadd.f32 %v2414, %v2482
      %v2484 = vpop.f32.mrf.mxu0
      %v2485 = vadd.f32 %v2414, %v2484
      %2486 = vmatprep.mubr.bf16.mxu0 0
      %2487 = vmatmul.mubr.bf16.gmra.mxu0 %v2430
      %v2488 = vpop.f32.mrf.mxu0
      %v2489 = vadd.f32 %v2419, %v2488
      %v2490 = vpop.f32.mrf.mxu0
      %v2491 = vadd.f32 %v2419, %v2490
      %v2492 = vpop.f32.mrf.mxu0
      %v2493 = vadd.f32 %v2424, %v2492
      %v2494 = vpop.f32.mrf.mxu0
      %v2495 = vadd.f32 %v2424, %v2494
      %2496 = vdwg.mxu0
      %2497 = vmatprep.subr.bf16.mxu0 0
      %2498 = vmatpush1.bf16.msra.mxu0 0
      %2499 = vmatprep.subr.bf16.mxu0 0
      %2500 = vmatpush1.bf16.msra.mxu0 0
      %2501 = vmatprep.subr.bf16.mxu0 0
      %2502 = vmatpush1.bf16.msra.mxu0 0
      %2503 = vmatprep.subr.bf16.mxu0 0
      %2504 = vmatpush1.bf16.msra.mxu0 0
      %2505 = vmatprep.subr.bf16.mxu0 0
      %2506 = vmatpush1.bf16.msra.mxu0 0
      %2507 = vmatprep.subr.bf16.mxu0 0
      %2508 = vmatpush1.bf16.msra.mxu0 0
      %2509 = vmatprep.subr.bf16.mxu0 0
      %2510 = vmatpush1.bf16.msra.mxu0 0
      %2511 = vmatprep.subr.bf16.mxu0 %v2442
      %2512 = vmatpush1.bf16.msra.mxu0 %v2439
      %2513 = vmatprep.subr.bf16.mxu0 0
      %2514 = vmatpush2.bf16.msra.mxu0 0
      %2515 = vmatprep.subr.bf16.mxu0 0
      %2516 = vmatpush2.bf16.msra.mxu0 0
      %2517 = vmatprep.subr.bf16.mxu0 0
      %2518 = vmatpush2.bf16.msra.mxu0 0
      %2519 = vmatprep.subr.bf16.mxu0 0
      %2520 = vmatpush2.bf16.msra.mxu0 0
      %2521 = vmatprep.subr.bf16.mxu0 0
      %2522 = vmatpush2.bf16.msra.mxu0 0
      %2523 = vmatprep.subr.bf16.mxu0 0
      %2524 = vmatpush2.bf16.msra.mxu0 0
      %2525 = vmatprep.subr.bf16.mxu0 0
      %2526 = vmatpush2.bf16.msra.mxu0 0
      %2527 = vmatprep.subr.bf16.mxu0 0
      %2528 = vmatpush2.bf16.msra.mxu0 0
      %2529 = vmatprep.mubr.bf16.mxu0 0
      %2530 = vmatmul.mubr.bf16.gmra.mxu0 %v2427
      %v2531 = vpop.f32.mrf.mxu0
      %v2532 = vadd.f32 %v2409, %v2531
      %v2533 = vpop.f32.mrf.mxu0
      %v2534 = vadd.f32 %v2409, %v2533
      %v2535 = vpop.f32.mrf.mxu0
      %v2536 = vadd.f32 %v2414, %v2535
      %v2537 = vpop.f32.mrf.mxu0
      %v2538 = vadd.f32 %v2414, %v2537
      %2539 = vmatprep.mubr.bf16.mxu0 0
      %2540 = vmatmul.mubr.bf16.gmra.mxu0 %v2430
      %v2541 = vpop.f32.mrf.mxu0
      %v2542 = vadd.f32 %v2419, %v2541
      %v2543 = vpop.f32.mrf.mxu0
      %v2544 = vadd.f32 %v2419, %v2543
      %v2545 = vpop.f32.mrf.mxu0
      %v2546 = vadd.f32 %v2424, %v2545
      %v2547 = vpop.f32.mrf.mxu0
      %v2548 = vadd.f32 %v2424, %v2547
      %2549 = vdwg.mxu0
      %2551 = vset.pattern.permute.xlu0 4
      %2552 = vperm.xlu0 %2551, %v374
      %v2553 = vpop.permute.xlu0 %2552
      %2556 = vset.pattern.permute.xlu0 4
      %2557 = vperm.xlu0 %2556, %v375
      %v2558 = vpop.permute.xlu0 %2557
      %2561 = vset.pattern.permute.xlu0 4
      %2562 = vperm.xlu0 %2561, %v376
      %v2563 = vpop.permute.xlu0 %2562
      %2566 = vset.pattern.permute.xlu0 4
      %2567 = vperm.xlu0 %2566, %v377
      %v2568 = vpop.permute.xlu0 %2567
      %v2570 = vmul.f32 %v2479, %v2553
      %v2571 = vmul.f32 %v2481, %v2553
      %v2572 = vmul.f32 %v2532, %v2553
      %v2573 = vmul.f32 %v2534, %v2553
      %v2574 = vmul.f32 %v2483, %v2558
      %v2575 = vmul.f32 %v2485, %v2558
      %v2576 = vmul.f32 %v2536, %v2558
      %v2577 = vmul.f32 %v2538, %v2558
      %v2578 = vmul.f32 %v2489, %v2563
      %v2579 = vmul.f32 %v2491, %v2563
      %v2580 = vmul.f32 %v2542, %v2563
      %v2581 = vmul.f32 %v2544, %v2563
      %v2582 = vmul.f32 %v2493, %v2568
      %v2583 = vmul.f32 %v2495, %v2568
      %v2584 = vmul.f32 %v2546, %v2568
      %v2585 = vmul.f32 %v2548, %v2568
      %2586 = vrot.lane.b32.xlu0 %v2479, 17
      %v2587 = vpop.permute.xlu0 %2586
      %2588 = vrot.lane.b32.xlu0 %v2483, 17
      %v2589 = vpop.permute.xlu0 %2588
      %2590 = vrot.lane.b32.xlu0 %v2489, 17
      %v2591 = vpop.permute.xlu0 %2590
      %2592 = vrot.lane.b32.xlu0 %v2493, 17
      %v2593 = vpop.permute.xlu0 %2592
      %2594 = vrot.lane.b32.xlu0 %v2481, 17
      %v2595 = vpop.permute.xlu0 %2594
      %2596 = vrot.lane.b32.xlu0 %v2485, 17
      %v2597 = vpop.permute.xlu0 %2596
      %2598 = vrot.lane.b32.xlu0 %v2491, 17
      %v2599 = vpop.permute.xlu0 %2598
      %2600 = vrot.lane.b32.xlu0 %v2495, 17
      %v2601 = vpop.permute.xlu0 %2600
      %2602 = vrot.lane.b32.xlu0 %v2532, 17
      %v2603 = vpop.permute.xlu0 %2602
      %2604 = vrot.lane.b32.xlu0 %v2536, 17
      %v2605 = vpop.permute.xlu0 %2604
      %2606 = vrot.lane.b32.xlu0 %v2542, 17
      %v2607 = vpop.permute.xlu0 %2606
      %2608 = vrot.lane.b32.xlu0 %v2546, 17
      %v2609 = vpop.permute.xlu0 %2608
      %2610 = vrot.lane.b32.xlu0 %v2534, 17
      %v2611 = vpop.permute.xlu0 %2610
      %2612 = vrot.lane.b32.xlu0 %v2538, 17
      %v2613 = vpop.permute.xlu0 %2612
      %2614 = vrot.lane.b32.xlu0 %v2544, 17
      %v2615 = vpop.permute.xlu0 %2614
      %2616 = vrot.lane.b32.xlu0 %v2548, 17
      %v2617 = vpop.permute.xlu0 %2616
      %v2618 = vsel %vm773, %v2603, %v2611
      %v2619 = vsel %vm773, %v2605, %v2613
      %v2620 = vsel %vm773, %v2607, %v2615
      %v2621 = vsel %vm773, %v2609, %v2617
      %v2622 = vsel %vm773, %v2595, %v2603
      %v2623 = vsel %vm773, %v2597, %v2605
      %v2624 = vsel %vm773, %v2599, %v2607
      %v2625 = vsel %vm773, %v2601, %v2609
      %v2626 = vsel %vm773, %v2587, %v2595
      %v2627 = vsel %vm773, %v2589, %v2597
      %v2628 = vsel %vm773, %v2591, %v2599
      %v2629 = vsel %vm773, %v2593, %v2601
      %v2630 = vsel %vm773, %v2611, %v2587
      %v2631 = vsel %vm773, %v2613, %v2589
      %v2632 = vsel %vm773, %v2615, %v2591
      %v2633 = vsel %vm773, %v2617, %v2593
      %v2634 = vmul.f32 %v2630, %v802
      %v2635 = vmul.f32 %v2626, %v806
      %v2636 = vmul.f32 %v2622, %v810
      %v2637 = vmul.f32 %v2618, %v814
      %v2638 = vmul.f32 %v2631, %v802
      %v2639 = vmul.f32 %v2627, %v806
      %v2640 = vmul.f32 %v2623, %v810
      %v2641 = vmul.f32 %v2619, %v814
      %v2642 = vmul.f32 %v2632, %v802
      %v2643 = vmul.f32 %v2628, %v806
      %v2644 = vmul.f32 %v2624, %v810
      %v2645 = vmul.f32 %v2620, %v814
      %v2646 = vmul.f32 %v2633, %v802
      %v2647 = vmul.f32 %v2629, %v806
      %v2648 = vmul.f32 %v2625, %v810
      %v2649 = vmul.f32 %v2621, %v814
      %2650 = vset.pattern.permute.xlu0 0
      %2651 = vperm.xlu0 %2650, %v374
      %v2652 = vpop.permute.xlu0 %2651
      %2654 = vset.pattern.permute.xlu0 0
      %2655 = vperm.xlu0 %2654, %v375
      %v2656 = vpop.permute.xlu0 %2655
      %2658 = vset.pattern.permute.xlu0 0
      %2659 = vperm.xlu0 %2658, %v376
      %v2660 = vpop.permute.xlu0 %2659
      %2662 = vset.pattern.permute.xlu0 0
      %2663 = vperm.xlu0 %2662, %v377
      %v2664 = vpop.permute.xlu0 %2663
      %v2666 = vmul.f32 %v2634, %v2652
      %v2667 = vmul.f32 %v2635, %v2652
      %v2668 = vmul.f32 %v2636, %v2652
      %v2669 = vmul.f32 %v2637, %v2652
      %v2670 = vmul.f32 %v2638, %v2656
      %v2671 = vmul.f32 %v2639, %v2656
      %v2672 = vmul.f32 %v2640, %v2656
      %v2673 = vmul.f32 %v2641, %v2656
      %v2674 = vmul.f32 %v2642, %v2660
      %v2675 = vmul.f32 %v2643, %v2660
      %v2676 = vmul.f32 %v2644, %v2660
      %v2677 = vmul.f32 %v2645, %v2660
      %v2678 = vmul.f32 %v2646, %v2664
      %v2679 = vmul.f32 %v2647, %v2664
      %v2680 = vmul.f32 %v2648, %v2664
      %v2681 = vmul.f32 %v2649, %v2664
      %v2682 = vadd.f32 %v2570, %v2666
      %v2683 = vadd.f32 %v2571, %v2667
      %v2684 = vadd.f32 %v2572, %v2668
      %v2685 = vadd.f32 %v2573, %v2669
      %v2686 = vadd.f32 %v2574, %v2670
      %v2687 = vadd.f32 %v2575, %v2671
      %v2688 = vadd.f32 %v2576, %v2672
      %v2689 = vadd.f32 %v2577, %v2673
      %v2690 = vadd.f32 %v2578, %v2674
      %v2691 = vadd.f32 %v2579, %v2675
      %v2692 = vadd.f32 %v2580, %v2676
      %v2693 = vadd.f32 %v2581, %v2677
      %v2694 = vadd.f32 %v2582, %v2678
      %v2695 = vadd.f32 %v2583, %v2679
      %v2696 = vadd.f32 %v2584, %v2680
      %v2697 = vadd.f32 %v2585, %v2681
      %2698 = vrot.lane.b32.xlu0 %v2479, 16
      %v2699 = vpop.permute.xlu0 %2698
      %2700 = vrot.lane.b32.xlu0 %v2483, 16
      %v2701 = vpop.permute.xlu0 %2700
      %2702 = vrot.lane.b32.xlu0 %v2489, 16
      %v2703 = vpop.permute.xlu0 %2702
      %2704 = vrot.lane.b32.xlu0 %v2493, 16
      %v2705 = vpop.permute.xlu0 %2704
      %2706 = vrot.lane.b32.xlu0 %v2481, 16
      %v2707 = vpop.permute.xlu0 %2706
      %2708 = vrot.lane.b32.xlu0 %v2485, 16
      %v2709 = vpop.permute.xlu0 %2708
      %2710 = vrot.lane.b32.xlu0 %v2491, 16
      %v2711 = vpop.permute.xlu0 %2710
      %2712 = vrot.lane.b32.xlu0 %v2495, 16
      %v2713 = vpop.permute.xlu0 %2712
      %2714 = vrot.lane.b32.xlu0 %v2532, 16
      %v2715 = vpop.permute.xlu0 %2714
      %2716 = vrot.lane.b32.xlu0 %v2536, 16
      %v2717 = vpop.permute.xlu0 %2716
      %2718 = vrot.lane.b32.xlu0 %v2542, 16
      %v2719 = vpop.permute.xlu0 %2718
      %2720 = vrot.lane.b32.xlu0 %v2546, 16
      %v2721 = vpop.permute.xlu0 %2720
      %2722 = vrot.lane.b32.xlu0 %v2534, 16
      %v2723 = vpop.permute.xlu0 %2722
      %2724 = vrot.lane.b32.xlu0 %v2538, 16
      %v2725 = vpop.permute.xlu0 %2724
      %2726 = vrot.lane.b32.xlu0 %v2544, 16
      %v2727 = vpop.permute.xlu0 %2726
      %2728 = vrot.lane.b32.xlu0 %v2548, 16
      %v2729 = vpop.permute.xlu0 %2728
      %v2730 = vsel %vm839, %v2715, %v2723
      %v2731 = vsel %vm839, %v2717, %v2725
      %v2732 = vsel %vm839, %v2719, %v2727
      %v2733 = vsel %vm839, %v2721, %v2729
      %v2734 = vsel %vm839, %v2707, %v2715
      %v2735 = vsel %vm839, %v2709, %v2717
      %v2736 = vsel %vm839, %v2711, %v2719
      %v2737 = vsel %vm839, %v2713, %v2721
      %v2738 = vsel %vm839, %v2699, %v2707
      %v2739 = vsel %vm839, %v2701, %v2709
      %v2740 = vsel %vm839, %v2703, %v2711
      %v2741 = vsel %vm839, %v2705, %v2713
      %v2742 = vsel %vm839, %v2723, %v2699
      %v2743 = vsel %vm839, %v2725, %v2701
      %v2744 = vsel %vm839, %v2727, %v2703
      %v2745 = vsel %vm839, %v2729, %v2705
      %v2746 = vmul.f32 %v2742, %v868
      %v2747 = vmul.f32 %v2738, %v872
      %v2748 = vmul.f32 %v2734, %v876
      %v2749 = vmul.f32 %v2730, %v880
      %v2750 = vmul.f32 %v2743, %v868
      %v2751 = vmul.f32 %v2739, %v872
      %v2752 = vmul.f32 %v2735, %v876
      %v2753 = vmul.f32 %v2731, %v880
      %v2754 = vmul.f32 %v2744, %v868
      %v2755 = vmul.f32 %v2740, %v872
      %v2756 = vmul.f32 %v2736, %v876
      %v2757 = vmul.f32 %v2732, %v880
      %v2758 = vmul.f32 %v2745, %v868
      %v2759 = vmul.f32 %v2741, %v872
      %v2760 = vmul.f32 %v2737, %v876
      %v2761 = vmul.f32 %v2733, %v880
      %2762 = vset.pattern.permute.xlu0 1
      %2763 = vperm.xlu0 %2762, %v374
      %v2764 = vpop.permute.xlu0 %2763
      %2766 = vset.pattern.permute.xlu0 1
      %2767 = vperm.xlu0 %2766, %v375
      %v2768 = vpop.permute.xlu0 %2767
      %2770 = vset.pattern.permute.xlu0 1
      %2771 = vperm.xlu0 %2770, %v376
      %v2772 = vpop.permute.xlu0 %2771
      %2774 = vset.pattern.permute.xlu0 1
      %2775 = vperm.xlu0 %2774, %v377
      %v2776 = vpop.permute.xlu0 %2775
      %v2778 = vmul.f32 %v2746, %v2764
      %v2779 = vmul.f32 %v2747, %v2764
      %v2780 = vmul.f32 %v2748, %v2764
      %v2781 = vmul.f32 %v2749, %v2764
      %v2782 = vmul.f32 %v2750, %v2768
      %v2783 = vmul.f32 %v2751, %v2768
      %v2784 = vmul.f32 %v2752, %v2768
      %v2785 = vmul.f32 %v2753, %v2768
      %v2786 = vmul.f32 %v2754, %v2772
      %v2787 = vmul.f32 %v2755, %v2772
      %v2788 = vmul.f32 %v2756, %v2772
      %v2789 = vmul.f32 %v2757, %v2772
      %v2790 = vmul.f32 %v2758, %v2776
      %v2791 = vmul.f32 %v2759, %v2776
      %v2792 = vmul.f32 %v2760, %v2776
      %v2793 = vmul.f32 %v2761, %v2776
      %v2794 = vadd.f32 %v2682, %v2778
      %v2795 = vadd.f32 %v2683, %v2779
      %v2796 = vadd.f32 %v2684, %v2780
      %v2797 = vadd.f32 %v2685, %v2781
      %v2798 = vadd.f32 %v2686, %v2782
      %v2799 = vadd.f32 %v2687, %v2783
      %v2800 = vadd.f32 %v2688, %v2784
      %v2801 = vadd.f32 %v2689, %v2785
      %v2802 = vadd.f32 %v2690, %v2786
      %v2803 = vadd.f32 %v2691, %v2787
      %v2804 = vadd.f32 %v2692, %v2788
      %v2805 = vadd.f32 %v2693, %v2789
      %v2806 = vadd.f32 %v2694, %v2790
      %v2807 = vadd.f32 %v2695, %v2791
      %v2808 = vadd.f32 %v2696, %v2792
      %v2809 = vadd.f32 %v2697, %v2793
      %2810 = vrot.lane.b32.xlu0 %v2479, 15
      %v2811 = vpop.permute.xlu0 %2810
      %2812 = vrot.lane.b32.xlu0 %v2483, 15
      %v2813 = vpop.permute.xlu0 %2812
      %2814 = vrot.lane.b32.xlu0 %v2489, 15
      %v2815 = vpop.permute.xlu0 %2814
      %2816 = vrot.lane.b32.xlu0 %v2493, 15
      %v2817 = vpop.permute.xlu0 %2816
      %2818 = vrot.lane.b32.xlu0 %v2481, 15
      %v2819 = vpop.permute.xlu0 %2818
      %2820 = vrot.lane.b32.xlu0 %v2485, 15
      %v2821 = vpop.permute.xlu0 %2820
      %2822 = vrot.lane.b32.xlu0 %v2491, 15
      %v2823 = vpop.permute.xlu0 %2822
      %2824 = vrot.lane.b32.xlu0 %v2495, 15
      %v2825 = vpop.permute.xlu0 %2824
      %2826 = vrot.lane.b32.xlu0 %v2532, 15
      %v2827 = vpop.permute.xlu0 %2826
      %2828 = vrot.lane.b32.xlu0 %v2536, 15
      %v2829 = vpop.permute.xlu0 %2828
      %2830 = vrot.lane.b32.xlu0 %v2542, 15
      %v2831 = vpop.permute.xlu0 %2830
      %2832 = vrot.lane.b32.xlu0 %v2546, 15
      %v2833 = vpop.permute.xlu0 %2832
      %2834 = vrot.lane.b32.xlu0 %v2534, 15
      %v2835 = vpop.permute.xlu0 %2834
      %2836 = vrot.lane.b32.xlu0 %v2538, 15
      %v2837 = vpop.permute.xlu0 %2836
      %2838 = vrot.lane.b32.xlu0 %v2544, 15
      %v2839 = vpop.permute.xlu0 %2838
      %2840 = vrot.lane.b32.xlu0 %v2548, 15
      %v2841 = vpop.permute.xlu0 %2840
      %v2842 = vsel %vm905, %v2827, %v2835
      %v2843 = vsel %vm905, %v2829, %v2837
      %v2844 = vsel %vm905, %v2831, %v2839
      %v2845 = vsel %vm905, %v2833, %v2841
      %v2846 = vsel %vm905, %v2819, %v2827
      %v2847 = vsel %vm905, %v2821, %v2829
      %v2848 = vsel %vm905, %v2823, %v2831
      %v2849 = vsel %vm905, %v2825, %v2833
      %v2850 = vsel %vm905, %v2811, %v2819
      %v2851 = vsel %vm905, %v2813, %v2821
      %v2852 = vsel %vm905, %v2815, %v2823
      %v2853 = vsel %vm905, %v2817, %v2825
      %v2854 = vsel %vm905, %v2835, %v2811
      %v2855 = vsel %vm905, %v2837, %v2813
      %v2856 = vsel %vm905, %v2839, %v2815
      %v2857 = vsel %vm905, %v2841, %v2817
      %v2858 = vmul.f32 %v2854, %v934
      %v2859 = vmul.f32 %v2850, %v938
      %v2860 = vmul.f32 %v2846, %v942
      %v2861 = vmul.f32 %v2842, %v946
      %v2862 = vmul.f32 %v2855, %v934
      %v2863 = vmul.f32 %v2851, %v938
      %v2864 = vmul.f32 %v2847, %v942
      %v2865 = vmul.f32 %v2843, %v946
      %v2866 = vmul.f32 %v2856, %v934
      %v2867 = vmul.f32 %v2852, %v938
      %v2868 = vmul.f32 %v2848, %v942
      %v2869 = vmul.f32 %v2844, %v946
      %v2870 = vmul.f32 %v2857, %v934
      %v2871 = vmul.f32 %v2853, %v938
      %v2872 = vmul.f32 %v2849, %v942
      %v2873 = vmul.f32 %v2845, %v946
      %2874 = vset.pattern.permute.xlu0 2
      %2875 = vperm.xlu0 %2874, %v374
      %v2876 = vpop.permute.xlu0 %2875
      %2878 = vset.pattern.permute.xlu0 2
      %2879 = vperm.xlu0 %2878, %v375
      %v2880 = vpop.permute.xlu0 %2879
      %2882 = vset.pattern.permute.xlu0 2
      %2883 = vperm.xlu0 %2882, %v376
      %v2884 = vpop.permute.xlu0 %2883
      %2886 = vset.pattern.permute.xlu0 2
      %2887 = vperm.xlu0 %2886, %v377
      %v2888 = vpop.permute.xlu0 %2887
      %v2890 = vmul.f32 %v2858, %v2876
      %v2891 = vmul.f32 %v2859, %v2876
      %v2892 = vmul.f32 %v2860, %v2876
      %v2893 = vmul.f32 %v2861, %v2876
      %v2894 = vmul.f32 %v2862, %v2880
      %v2895 = vmul.f32 %v2863, %v2880
      %v2896 = vmul.f32 %v2864, %v2880
      %v2897 = vmul.f32 %v2865, %v2880
      %v2898 = vmul.f32 %v2866, %v2884
      %v2899 = vmul.f32 %v2867, %v2884
      %v2900 = vmul.f32 %v2868, %v2884
      %v2901 = vmul.f32 %v2869, %v2884
      %v2902 = vmul.f32 %v2870, %v2888
      %v2903 = vmul.f32 %v2871, %v2888
      %v2904 = vmul.f32 %v2872, %v2888
      %v2905 = vmul.f32 %v2873, %v2888
      %v2906 = vadd.f32 %v2794, %v2890
      %v2907 = vadd.f32 %v2795, %v2891
      %v2908 = vadd.f32 %v2796, %v2892
      %v2909 = vadd.f32 %v2797, %v2893
      %v2910 = vadd.f32 %v2798, %v2894
      %v2911 = vadd.f32 %v2799, %v2895
      %v2912 = vadd.f32 %v2800, %v2896
      %v2913 = vadd.f32 %v2801, %v2897
      %v2914 = vadd.f32 %v2802, %v2898
      %v2915 = vadd.f32 %v2803, %v2899
      %v2916 = vadd.f32 %v2804, %v2900
      %v2917 = vadd.f32 %v2805, %v2901
      %v2918 = vadd.f32 %v2806, %v2902
      %v2919 = vadd.f32 %v2807, %v2903
      %v2920 = vadd.f32 %v2808, %v2904
      %v2921 = vadd.f32 %v2809, %v2905
      %2922 = vrot.lane.b32.xlu0 %v2479, 1
      %v2923 = vpop.permute.xlu0 %2922
      %2924 = vrot.lane.b32.xlu0 %v2483, 1
      %v2925 = vpop.permute.xlu0 %2924
      %2926 = vrot.lane.b32.xlu0 %v2489, 1
      %v2927 = vpop.permute.xlu0 %2926
      %2928 = vrot.lane.b32.xlu0 %v2493, 1
      %v2929 = vpop.permute.xlu0 %2928
      %2930 = vrot.lane.b32.xlu0 %v2481, 1
      %v2931 = vpop.permute.xlu0 %2930
      %2932 = vrot.lane.b32.xlu0 %v2485, 1
      %v2933 = vpop.permute.xlu0 %2932
      %2934 = vrot.lane.b32.xlu0 %v2491, 1
      %v2935 = vpop.permute.xlu0 %2934
      %2936 = vrot.lane.b32.xlu0 %v2495, 1
      %v2937 = vpop.permute.xlu0 %2936
      %2938 = vrot.lane.b32.xlu0 %v2532, 1
      %v2939 = vpop.permute.xlu0 %2938
      %2940 = vrot.lane.b32.xlu0 %v2536, 1
      %v2941 = vpop.permute.xlu0 %2940
      %2942 = vrot.lane.b32.xlu0 %v2542, 1
      %v2943 = vpop.permute.xlu0 %2942
      %2944 = vrot.lane.b32.xlu0 %v2546, 1
      %v2945 = vpop.permute.xlu0 %2944
      %2946 = vrot.lane.b32.xlu0 %v2534, 1
      %v2947 = vpop.permute.xlu0 %2946
      %2948 = vrot.lane.b32.xlu0 %v2538, 1
      %v2949 = vpop.permute.xlu0 %2948
      %2950 = vrot.lane.b32.xlu0 %v2544, 1
      %v2951 = vpop.permute.xlu0 %2950
      %2952 = vrot.lane.b32.xlu0 %v2548, 1
      %v2953 = vpop.permute.xlu0 %2952
      %v2954 = vsel %vm971, %v2939, %v2947
      %v2955 = vsel %vm971, %v2941, %v2949
      %v2956 = vsel %vm971, %v2943, %v2951
      %v2957 = vsel %vm971, %v2945, %v2953
      %v2958 = vsel %vm971, %v2931, %v2939
      %v2959 = vsel %vm971, %v2933, %v2941
      %v2960 = vsel %vm971, %v2935, %v2943
      %v2961 = vsel %vm971, %v2937, %v2945
      %v2962 = vsel %vm971, %v2923, %v2931
      %v2963 = vsel %vm971, %v2925, %v2933
      %v2964 = vsel %vm971, %v2927, %v2935
      %v2965 = vsel %vm971, %v2929, %v2937
      %v2966 = vsel %vm971, %v2947, %v2923
      %v2967 = vsel %vm971, %v2949, %v2925
      %v2968 = vsel %vm971, %v2951, %v2927
      %v2969 = vsel %vm971, %v2953, %v2929
      %v2970 = vmul.f32 %v2966, %v1000
      %v2971 = vmul.f32 %v2962, %v1004
      %v2972 = vmul.f32 %v2958, %v1008
      %v2973 = vmul.f32 %v2954, %v1012
      %v2974 = vmul.f32 %v2967, %v1000
      %v2975 = vmul.f32 %v2963, %v1004
      %v2976 = vmul.f32 %v2959, %v1008
      %v2977 = vmul.f32 %v2955, %v1012
      %v2978 = vmul.f32 %v2968, %v1000
      %v2979 = vmul.f32 %v2964, %v1004
      %v2980 = vmul.f32 %v2960, %v1008
      %v2981 = vmul.f32 %v2956, %v1012
      %v2982 = vmul.f32 %v2969, %v1000
      %v2983 = vmul.f32 %v2965, %v1004
      %v2984 = vmul.f32 %v2961, %v1008
      %v2985 = vmul.f32 %v2957, %v1012
      %2986 = vset.pattern.permute.xlu0 3
      %2987 = vperm.xlu0 %2986, %v374
      %v2988 = vpop.permute.xlu0 %2987
      %2990 = vset.pattern.permute.xlu0 3
      %2991 = vperm.xlu0 %2990, %v375
      %v2992 = vpop.permute.xlu0 %2991
      %2994 = vset.pattern.permute.xlu0 3
      %2995 = vperm.xlu0 %2994, %v376
      %v2996 = vpop.permute.xlu0 %2995
      %2998 = vset.pattern.permute.xlu0 3
      %2999 = vperm.xlu0 %2998, %v377
      %v3000 = vpop.permute.xlu0 %2999
      %v3002 = vmul.f32 %v2970, %v2988
      %v3003 = vmul.f32 %v2971, %v2988
      %v3004 = vmul.f32 %v2972, %v2988
      %v3005 = vmul.f32 %v2973, %v2988
      %v3006 = vmul.f32 %v2974, %v2992
      %v3007 = vmul.f32 %v2975, %v2992
      %v3008 = vmul.f32 %v2976, %v2992
      %v3009 = vmul.f32 %v2977, %v2992
      %v3010 = vmul.f32 %v2978, %v2996
      %v3011 = vmul.f32 %v2979, %v2996
      %v3012 = vmul.f32 %v2980, %v2996
      %v3013 = vmul.f32 %v2981, %v2996
      %v3014 = vmul.f32 %v2982, %v3000
      %v3015 = vmul.f32 %v2983, %v3000
      %v3016 = vmul.f32 %v2984, %v3000
      %v3017 = vmul.f32 %v2985, %v3000
      %v3018 = vadd.f32 %v2906, %v3002
      %v3019 = vadd.f32 %v2907, %v3003
      %v3020 = vadd.f32 %v2908, %v3004
      %v3021 = vadd.f32 %v2909, %v3005
      %v3022 = vadd.f32 %v2910, %v3006
      %v3023 = vadd.f32 %v2911, %v3007
      %v3024 = vadd.f32 %v2912, %v3008
      %v3025 = vadd.f32 %v2913, %v3009
      %v3026 = vadd.f32 %v2914, %v3010
      %v3027 = vadd.f32 %v2915, %v3011
      %v3028 = vadd.f32 %v2916, %v3012
      %v3029 = vadd.f32 %v2917, %v3013
      %v3030 = vadd.f32 %v2918, %v3014
      %v3031 = vadd.f32 %v2919, %v3015
      %v3032 = vadd.f32 %v2920, %v3016
      %v3033 = vadd.f32 %v2921, %v3017
      %3034 = vrot.lane.b32.xlu0 %v2479, 127
      %v3035 = vpop.permute.xlu0 %3034
      %3036 = vrot.lane.b32.xlu0 %v2483, 127
      %v3037 = vpop.permute.xlu0 %3036
      %3038 = vrot.lane.b32.xlu0 %v2489, 127
      %v3039 = vpop.permute.xlu0 %3038
      %3040 = vrot.lane.b32.xlu0 %v2493, 127
      %v3041 = vpop.permute.xlu0 %3040
      %3042 = vrot.lane.b32.xlu0 %v2481, 127
      %v3043 = vpop.permute.xlu0 %3042
      %3044 = vrot.lane.b32.xlu0 %v2485, 127
      %v3045 = vpop.permute.xlu0 %3044
      %3046 = vrot.lane.b32.xlu0 %v2491, 127
      %v3047 = vpop.permute.xlu0 %3046
      %3048 = vrot.lane.b32.xlu0 %v2495, 127
      %v3049 = vpop.permute.xlu0 %3048
      %3050 = vrot.lane.b32.xlu0 %v2532, 127
      %v3051 = vpop.permute.xlu0 %3050
      %3052 = vrot.lane.b32.xlu0 %v2536, 127
      %v3053 = vpop.permute.xlu0 %3052
      %3054 = vrot.lane.b32.xlu0 %v2542, 127
      %v3055 = vpop.permute.xlu0 %3054
      %3056 = vrot.lane.b32.xlu0 %v2546, 127
      %v3057 = vpop.permute.xlu0 %3056
      %3058 = vrot.lane.b32.xlu0 %v2534, 127
      %v3059 = vpop.permute.xlu0 %3058
      %3060 = vrot.lane.b32.xlu0 %v2538, 127
      %v3061 = vpop.permute.xlu0 %3060
      %3062 = vrot.lane.b32.xlu0 %v2544, 127
      %v3063 = vpop.permute.xlu0 %3062
      %3064 = vrot.lane.b32.xlu0 %v2548, 127
      %v3065 = vpop.permute.xlu0 %3064
      %v3066 = vsel %vm1037, %v3051, %v3059
      %v3067 = vsel %vm1037, %v3053, %v3061
      %v3068 = vsel %vm1037, %v3055, %v3063
      %v3069 = vsel %vm1037, %v3057, %v3065
      %v3070 = vsel %vm1037, %v3043, %v3051
      %v3071 = vsel %vm1037, %v3045, %v3053
      %v3072 = vsel %vm1037, %v3047, %v3055
      %v3073 = vsel %vm1037, %v3049, %v3057
      %v3074 = vsel %vm1037, %v3035, %v3043
      %v3075 = vsel %vm1037, %v3037, %v3045
      %v3076 = vsel %vm1037, %v3039, %v3047
      %v3077 = vsel %vm1037, %v3041, %v3049
      %v3078 = vsel %vm1037, %v3059, %v3035
      %v3079 = vsel %vm1037, %v3061, %v3037
      %v3080 = vsel %vm1037, %v3063, %v3039
      %v3081 = vsel %vm1037, %v3065, %v3041
      %v3082 = vmul.f32 %v3074, %v1066
      %v3083 = vmul.f32 %v3070, %v1070
      %v3084 = vmul.f32 %v3066, %v1074
      %v3085 = vmul.f32 %v3078, %v1078
      %v3086 = vmul.f32 %v3075, %v1066
      %v3087 = vmul.f32 %v3071, %v1070
      %v3088 = vmul.f32 %v3067, %v1074
      %v3089 = vmul.f32 %v3079, %v1078
      %v3090 = vmul.f32 %v3076, %v1066
      %v3091 = vmul.f32 %v3072, %v1070
      %v3092 = vmul.f32 %v3068, %v1074
      %v3093 = vmul.f32 %v3080, %v1078
      %v3094 = vmul.f32 %v3077, %v1066
      %v3095 = vmul.f32 %v3073, %v1070
      %v3096 = vmul.f32 %v3069, %v1074
      %v3097 = vmul.f32 %v3081, %v1078
      %3098 = vset.pattern.permute.xlu0 5
      %3099 = vperm.xlu0 %3098, %v374
      %v3100 = vpop.permute.xlu0 %3099
      %3102 = vset.pattern.permute.xlu0 5
      %3103 = vperm.xlu0 %3102, %v375
      %v3104 = vpop.permute.xlu0 %3103
      %3106 = vset.pattern.permute.xlu0 5
      %3107 = vperm.xlu0 %3106, %v376
      %v3108 = vpop.permute.xlu0 %3107
      %3110 = vset.pattern.permute.xlu0 5
      %3111 = vperm.xlu0 %3110, %v377
      %v3112 = vpop.permute.xlu0 %3111
      %v3114 = vmul.f32 %v3082, %v3100
      %v3115 = vmul.f32 %v3083, %v3100
      %v3116 = vmul.f32 %v3084, %v3100
      %v3117 = vmul.f32 %v3085, %v3100
      %v3118 = vmul.f32 %v3086, %v3104
      %v3119 = vmul.f32 %v3087, %v3104
      %v3120 = vmul.f32 %v3088, %v3104
      %v3121 = vmul.f32 %v3089, %v3104
      %v3122 = vmul.f32 %v3090, %v3108
      %v3123 = vmul.f32 %v3091, %v3108
      %v3124 = vmul.f32 %v3092, %v3108
      %v3125 = vmul.f32 %v3093, %v3108
      %v3126 = vmul.f32 %v3094, %v3112
      %v3127 = vmul.f32 %v3095, %v3112
      %v3128 = vmul.f32 %v3096, %v3112
      %v3129 = vmul.f32 %v3097, %v3112
      %v3130 = vadd.f32 %v3018, %v3114
      %v3131 = vadd.f32 %v3019, %v3115
      %v3132 = vadd.f32 %v3020, %v3116
      %v3133 = vadd.f32 %v3021, %v3117
      %v3134 = vadd.f32 %v3022, %v3118
      %v3135 = vadd.f32 %v3023, %v3119
      %v3136 = vadd.f32 %v3024, %v3120
      %v3137 = vadd.f32 %v3025, %v3121
      %v3138 = vadd.f32 %v3026, %v3122
      %v3139 = vadd.f32 %v3027, %v3123
      %v3140 = vadd.f32 %v3028, %v3124
      %v3141 = vadd.f32 %v3029, %v3125
      %v3142 = vadd.f32 %v3030, %v3126
      %v3143 = vadd.f32 %v3031, %v3127
      %v3144 = vadd.f32 %v3032, %v3128
      %v3145 = vadd.f32 %v3033, %v3129
      %3146 = vrot.lane.b32.xlu0 %v2479, 113
      %v3147 = vpop.permute.xlu0 %3146
      %3148 = vrot.lane.b32.xlu0 %v2483, 113
      %v3149 = vpop.permute.xlu0 %3148
      %3150 = vrot.lane.b32.xlu0 %v2489, 113
      %v3151 = vpop.permute.xlu0 %3150
      %3152 = vrot.lane.b32.xlu0 %v2493, 113
      %v3153 = vpop.permute.xlu0 %3152
      %3154 = vrot.lane.b32.xlu0 %v2481, 113
      %v3155 = vpop.permute.xlu0 %3154
      %3156 = vrot.lane.b32.xlu0 %v2485, 113
      %v3157 = vpop.permute.xlu0 %3156
      %3158 = vrot.lane.b32.xlu0 %v2491, 113
      %v3159 = vpop.permute.xlu0 %3158
      %3160 = vrot.lane.b32.xlu0 %v2495, 113
      %v3161 = vpop.permute.xlu0 %3160
      %3162 = vrot.lane.b32.xlu0 %v2532, 113
      %v3163 = vpop.permute.xlu0 %3162
      %3164 = vrot.lane.b32.xlu0 %v2536, 113
      %v3165 = vpop.permute.xlu0 %3164
      %3166 = vrot.lane.b32.xlu0 %v2542, 113
      %v3167 = vpop.permute.xlu0 %3166
      %3168 = vrot.lane.b32.xlu0 %v2546, 113
      %v3169 = vpop.permute.xlu0 %3168
      %3170 = vrot.lane.b32.xlu0 %v2534, 113
      %v3171 = vpop.permute.xlu0 %3170
      %3172 = vrot.lane.b32.xlu0 %v2538, 113
      %v3173 = vpop.permute.xlu0 %3172
      %3174 = vrot.lane.b32.xlu0 %v2544, 113
      %v3175 = vpop.permute.xlu0 %3174
      %3176 = vrot.lane.b32.xlu0 %v2548, 113
      %v3177 = vpop.permute.xlu0 %3176
      %v3178 = vsel %vm1103, %v3163, %v3171
      %v3179 = vsel %vm1103, %v3165, %v3173
      %v3180 = vsel %vm1103, %v3167, %v3175
      %v3181 = vsel %vm1103, %v3169, %v3177
      %v3182 = vsel %vm1103, %v3155, %v3163
      %v3183 = vsel %vm1103, %v3157, %v3165
      %v3184 = vsel %vm1103, %v3159, %v3167
      %v3185 = vsel %vm1103, %v3161, %v3169
      %v3186 = vsel %vm1103, %v3147, %v3155
      %v3187 = vsel %vm1103, %v3149, %v3157
      %v3188 = vsel %vm1103, %v3151, %v3159
      %v3189 = vsel %vm1103, %v3153, %v3161
      %v3190 = vsel %vm1103, %v3171, %v3147
      %v3191 = vsel %vm1103, %v3173, %v3149
      %v3192 = vsel %vm1103, %v3175, %v3151
      %v3193 = vsel %vm1103, %v3177, %v3153
      %v3194 = vmul.f32 %v3186, %v1132
      %v3195 = vmul.f32 %v3182, %v1136
      %v3196 = vmul.f32 %v3178, %v1140
      %v3197 = vmul.f32 %v3190, %v1144
      %v3198 = vmul.f32 %v3187, %v1132
      %v3199 = vmul.f32 %v3183, %v1136
      %v3200 = vmul.f32 %v3179, %v1140
      %v3201 = vmul.f32 %v3191, %v1144
      %v3202 = vmul.f32 %v3188, %v1132
      %v3203 = vmul.f32 %v3184, %v1136
      %v3204 = vmul.f32 %v3180, %v1140
      %v3205 = vmul.f32 %v3192, %v1144
      %v3206 = vmul.f32 %v3189, %v1132
      %v3207 = vmul.f32 %v3185, %v1136
      %v3208 = vmul.f32 %v3181, %v1140
      %v3209 = vmul.f32 %v3193, %v1144
      %3210 = vset.pattern.permute.xlu0 6
      %3211 = vperm.xlu0 %3210, %v374
      %v3212 = vpop.permute.xlu0 %3211
      %3214 = vset.pattern.permute.xlu0 6
      %3215 = vperm.xlu0 %3214, %v375
      %v3216 = vpop.permute.xlu0 %3215
      %3218 = vset.pattern.permute.xlu0 6
      %3219 = vperm.xlu0 %3218, %v376
      %v3220 = vpop.permute.xlu0 %3219
      %3222 = vset.pattern.permute.xlu0 6
      %3223 = vperm.xlu0 %3222, %v377
      %v3224 = vpop.permute.xlu0 %3223
      %v3226 = vmul.f32 %v3194, %v3212
      %v3227 = vmul.f32 %v3195, %v3212
      %v3228 = vmul.f32 %v3196, %v3212
      %v3229 = vmul.f32 %v3197, %v3212
      %v3230 = vmul.f32 %v3198, %v3216
      %v3231 = vmul.f32 %v3199, %v3216
      %v3232 = vmul.f32 %v3200, %v3216
      %v3233 = vmul.f32 %v3201, %v3216
      %v3234 = vmul.f32 %v3202, %v3220
      %v3235 = vmul.f32 %v3203, %v3220
      %v3236 = vmul.f32 %v3204, %v3220
      %v3237 = vmul.f32 %v3205, %v3220
      %v3238 = vmul.f32 %v3206, %v3224
      %v3239 = vmul.f32 %v3207, %v3224
      %v3240 = vmul.f32 %v3208, %v3224
      %v3241 = vmul.f32 %v3209, %v3224
      %v3242 = vadd.f32 %v3130, %v3226
      %v3243 = vadd.f32 %v3131, %v3227
      %v3244 = vadd.f32 %v3132, %v3228
      %v3245 = vadd.f32 %v3133, %v3229
      %v3246 = vadd.f32 %v3134, %v3230
      %v3247 = vadd.f32 %v3135, %v3231
      %v3248 = vadd.f32 %v3136, %v3232
      %v3249 = vadd.f32 %v3137, %v3233
      %v3250 = vadd.f32 %v3138, %v3234
      %v3251 = vadd.f32 %v3139, %v3235
      %v3252 = vadd.f32 %v3140, %v3236
      %v3253 = vadd.f32 %v3141, %v3237
      %v3254 = vadd.f32 %v3142, %v3238
      %v3255 = vadd.f32 %v3143, %v3239
      %v3256 = vadd.f32 %v3144, %v3240
      %v3257 = vadd.f32 %v3145, %v3241
      %3258 = vrot.lane.b32.xlu0 %v2479, 112
      %v3259 = vpop.permute.xlu0 %3258
      %3260 = vrot.lane.b32.xlu0 %v2483, 112
      %v3261 = vpop.permute.xlu0 %3260
      %3262 = vrot.lane.b32.xlu0 %v2489, 112
      %v3263 = vpop.permute.xlu0 %3262
      %3264 = vrot.lane.b32.xlu0 %v2493, 112
      %v3265 = vpop.permute.xlu0 %3264
      %3266 = vrot.lane.b32.xlu0 %v2481, 112
      %v3267 = vpop.permute.xlu0 %3266
      %3268 = vrot.lane.b32.xlu0 %v2485, 112
      %v3269 = vpop.permute.xlu0 %3268
      %3270 = vrot.lane.b32.xlu0 %v2491, 112
      %v3271 = vpop.permute.xlu0 %3270
      %3272 = vrot.lane.b32.xlu0 %v2495, 112
      %v3273 = vpop.permute.xlu0 %3272
      %3274 = vrot.lane.b32.xlu0 %v2532, 112
      %v3275 = vpop.permute.xlu0 %3274
      %3276 = vrot.lane.b32.xlu0 %v2536, 112
      %v3277 = vpop.permute.xlu0 %3276
      %3278 = vrot.lane.b32.xlu0 %v2542, 112
      %v3279 = vpop.permute.xlu0 %3278
      %3280 = vrot.lane.b32.xlu0 %v2546, 112
      %v3281 = vpop.permute.xlu0 %3280
      %3282 = vrot.lane.b32.xlu0 %v2534, 112
      %v3283 = vpop.permute.xlu0 %3282
      %3284 = vrot.lane.b32.xlu0 %v2538, 112
      %v3285 = vpop.permute.xlu0 %3284
      %3286 = vrot.lane.b32.xlu0 %v2544, 112
      %v3287 = vpop.permute.xlu0 %3286
      %3288 = vrot.lane.b32.xlu0 %v2548, 112
      %v3289 = vpop.permute.xlu0 %3288
      %v3290 = vsel %vm1169, %v3275, %v3283
      %v3291 = vsel %vm1169, %v3277, %v3285
      %v3292 = vsel %vm1169, %v3279, %v3287
      %v3293 = vsel %vm1169, %v3281, %v3289
      %v3294 = vsel %vm1169, %v3267, %v3275
      %v3295 = vsel %vm1169, %v3269, %v3277
      %v3296 = vsel %vm1169, %v3271, %v3279
      %v3297 = vsel %vm1169, %v3273, %v3281
      %v3298 = vsel %vm1169, %v3259, %v3267
      %v3299 = vsel %vm1169, %v3261, %v3269
      %v3300 = vsel %vm1169, %v3263, %v3271
      %v3301 = vsel %vm1169, %v3265, %v3273
      %v3302 = vsel %vm1169, %v3283, %v3259
      %v3303 = vsel %vm1169, %v3285, %v3261
      %v3304 = vsel %vm1169, %v3287, %v3263
      %v3305 = vsel %vm1169, %v3289, %v3265
      %v3306 = vmul.f32 %v3298, %v1198
      %v3307 = vmul.f32 %v3294, %v1202
      %v3308 = vmul.f32 %v3290, %v1206
      %v3309 = vmul.f32 %v3302, %v1210
      %v3310 = vmul.f32 %v3299, %v1198
      %v3311 = vmul.f32 %v3295, %v1202
      %v3312 = vmul.f32 %v3291, %v1206
      %v3313 = vmul.f32 %v3303, %v1210
      %v3314 = vmul.f32 %v3300, %v1198
      %v3315 = vmul.f32 %v3296, %v1202
      %v3316 = vmul.f32 %v3292, %v1206
      %v3317 = vmul.f32 %v3304, %v1210
      %v3318 = vmul.f32 %v3301, %v1198
      %v3319 = vmul.f32 %v3297, %v1202
      %v3320 = vmul.f32 %v3293, %v1206
      %v3321 = vmul.f32 %v3305, %v1210
      %3322 = vset.pattern.permute.xlu0 7
      %3323 = vperm.xlu0 %3322, %v374
      %v3324 = vpop.permute.xlu0 %3323
      %3326 = vset.pattern.permute.xlu0 7
      %3327 = vperm.xlu0 %3326, %v375
      %v3328 = vpop.permute.xlu0 %3327
      %3330 = vset.pattern.permute.xlu0 7
      %3331 = vperm.xlu0 %3330, %v376
      %v3332 = vpop.permute.xlu0 %3331
      %3334 = vset.pattern.permute.xlu0 7
      %3335 = vperm.xlu0 %3334, %v377
      %v3336 = vpop.permute.xlu0 %3335
      %v3338 = vmul.f32 %v3306, %v3324
      %v3339 = vmul.f32 %v3307, %v3324
      %v3340 = vmul.f32 %v3308, %v3324
      %v3341 = vmul.f32 %v3309, %v3324
      %v3342 = vmul.f32 %v3310, %v3328
      %v3343 = vmul.f32 %v3311, %v3328
      %v3344 = vmul.f32 %v3312, %v3328
      %v3345 = vmul.f32 %v3313, %v3328
      %v3346 = vmul.f32 %v3314, %v3332
      %v3347 = vmul.f32 %v3315, %v3332
      %v3348 = vmul.f32 %v3316, %v3332
      %v3349 = vmul.f32 %v3317, %v3332
      %v3350 = vmul.f32 %v3318, %v3336
      %v3351 = vmul.f32 %v3319, %v3336
      %v3352 = vmul.f32 %v3320, %v3336
      %v3353 = vmul.f32 %v3321, %v3336
      %v3354 = vadd.f32 %v3242, %v3338
      %v3355 = vadd.f32 %v3243, %v3339
      %v3356 = vadd.f32 %v3244, %v3340
      %v3357 = vadd.f32 %v3245, %v3341
      %v3358 = vadd.f32 %v3246, %v3342
      %v3359 = vadd.f32 %v3247, %v3343
      %v3360 = vadd.f32 %v3248, %v3344
      %v3361 = vadd.f32 %v3249, %v3345
      %v3362 = vadd.f32 %v3250, %v3346
      %v3363 = vadd.f32 %v3251, %v3347
      %v3364 = vadd.f32 %v3252, %v3348
      %v3365 = vadd.f32 %v3253, %v3349
      %v3366 = vadd.f32 %v3254, %v3350
      %v3367 = vadd.f32 %v3255, %v3351
      %v3368 = vadd.f32 %v3256, %v3352
      %v3369 = vadd.f32 %v3257, %v3353
      %3370 = vrot.lane.b32.xlu0 %v2479, 111
      %v3371 = vpop.permute.xlu0 %3370
      %3372 = vrot.lane.b32.xlu0 %v2483, 111
      %v3373 = vpop.permute.xlu0 %3372
      %3374 = vrot.lane.b32.xlu0 %v2489, 111
      %v3375 = vpop.permute.xlu0 %3374
      %3376 = vrot.lane.b32.xlu0 %v2493, 111
      %v3377 = vpop.permute.xlu0 %3376
      %3378 = vrot.lane.b32.xlu0 %v2481, 111
      %v3379 = vpop.permute.xlu0 %3378
      %3380 = vrot.lane.b32.xlu0 %v2485, 111
      %v3381 = vpop.permute.xlu0 %3380
      %3382 = vrot.lane.b32.xlu0 %v2491, 111
      %v3383 = vpop.permute.xlu0 %3382
      %3384 = vrot.lane.b32.xlu0 %v2495, 111
      %v3385 = vpop.permute.xlu0 %3384
      %3386 = vrot.lane.b32.xlu0 %v2532, 111
      %v3387 = vpop.permute.xlu0 %3386
      %3388 = vrot.lane.b32.xlu0 %v2536, 111
      %v3389 = vpop.permute.xlu0 %3388
      %3390 = vrot.lane.b32.xlu0 %v2542, 111
      %v3391 = vpop.permute.xlu0 %3390
      %3392 = vrot.lane.b32.xlu0 %v2546, 111
      %v3393 = vpop.permute.xlu0 %3392
      %3394 = vrot.lane.b32.xlu0 %v2534, 111
      %v3395 = vpop.permute.xlu0 %3394
      %3396 = vrot.lane.b32.xlu0 %v2538, 111
      %v3397 = vpop.permute.xlu0 %3396
      %3398 = vrot.lane.b32.xlu0 %v2544, 111
      %v3399 = vpop.permute.xlu0 %3398
      %3400 = vrot.lane.b32.xlu0 %v2548, 111
      %v3401 = vpop.permute.xlu0 %3400
      %v3402 = vsel %vm1235, %v3387, %v3395
      %v3403 = vsel %vm1235, %v3389, %v3397
      %v3404 = vsel %vm1235, %v3391, %v3399
      %v3405 = vsel %vm1235, %v3393, %v3401
      %v3406 = vsel %vm1235, %v3379, %v3387
      %v3407 = vsel %vm1235, %v3381, %v3389
      %v3408 = vsel %vm1235, %v3383, %v3391
      %v3409 = vsel %vm1235, %v3385, %v3393
      %v3410 = vsel %vm1235, %v3371, %v3379
      %v3411 = vsel %vm1235, %v3373, %v3381
      %v3412 = vsel %vm1235, %v3375, %v3383
      %v3413 = vsel %vm1235, %v3377, %v3385
      %v3414 = vsel %vm1235, %v3395, %v3371
      %v3415 = vsel %vm1235, %v3397, %v3373
      %v3416 = vsel %vm1235, %v3399, %v3375
      %v3417 = vsel %vm1235, %v3401, %v3377
      %v3418 = vmul.f32 %v3410, %v1264
      %v3419 = vmul.f32 %v3406, %v1268
      %v3420 = vmul.f32 %v3402, %v1272
      %v3421 = vmul.f32 %v3414, %v1276
      %v3422 = vmul.f32 %v3411, %v1264
      %v3423 = vmul.f32 %v3407, %v1268
      %v3424 = vmul.f32 %v3403, %v1272
      %v3425 = vmul.f32 %v3415, %v1276
      %v3426 = vmul.f32 %v3412, %v1264
      %v3427 = vmul.f32 %v3408, %v1268
      %v3428 = vmul.f32 %v3404, %v1272
      %v3429 = vmul.f32 %v3416, %v1276
      %v3430 = vmul.f32 %v3413, %v1264
      %v3431 = vmul.f32 %v3409, %v1268
      %v3432 = vmul.f32 %v3405, %v1272
      %v3433 = vmul.f32 %v3417, %v1276
      %3434 = vset.pattern.permute.xlu0 8
      %3435 = vperm.xlu0 %3434, %v374
      %v3436 = vpop.permute.xlu0 %3435
      %3438 = vset.pattern.permute.xlu0 8
      %3439 = vperm.xlu0 %3438, %v375
      %v3440 = vpop.permute.xlu0 %3439
      %3442 = vset.pattern.permute.xlu0 8
      %3443 = vperm.xlu0 %3442, %v376
      %v3444 = vpop.permute.xlu0 %3443
      %3446 = vset.pattern.permute.xlu0 8
      %3447 = vperm.xlu0 %3446, %v377
      %v3448 = vpop.permute.xlu0 %3447
      %v3450 = vmul.f32 %v3418, %v3436
      %v3451 = vmul.f32 %v3419, %v3436
      %v3452 = vmul.f32 %v3420, %v3436
      %v3453 = vmul.f32 %v3421, %v3436
      %v3454 = vmul.f32 %v3422, %v3440
      %v3455 = vmul.f32 %v3423, %v3440
      %v3456 = vmul.f32 %v3424, %v3440
      %v3457 = vmul.f32 %v3425, %v3440
      %v3458 = vmul.f32 %v3426, %v3444
      %v3459 = vmul.f32 %v3427, %v3444
      %v3460 = vmul.f32 %v3428, %v3444
      %v3461 = vmul.f32 %v3429, %v3444
      %v3462 = vmul.f32 %v3430, %v3448
      %v3463 = vmul.f32 %v3431, %v3448
      %v3464 = vmul.f32 %v3432, %v3448
      %v3465 = vmul.f32 %v3433, %v3448
      %v3466 = vadd.f32 %v3354, %v3450
      %v3467 = vadd.f32 %v3355, %v3451
      %v3468 = vadd.f32 %v3356, %v3452
      %v3469 = vadd.f32 %v3357, %v3453
      %v3470 = vadd.f32 %v3358, %v3454
      %v3471 = vadd.f32 %v3359, %v3455
      %v3472 = vadd.f32 %v3360, %v3456
      %v3473 = vadd.f32 %v3361, %v3457
      %v3474 = vadd.f32 %v3362, %v3458
      %v3475 = vadd.f32 %v3363, %v3459
      %v3476 = vadd.f32 %v3364, %v3460
      %v3477 = vadd.f32 %v3365, %v3461
      %v3478 = vadd.f32 %v3366, %v3462
      %v3479 = vadd.f32 %v3367, %v3463
      %v3480 = vadd.f32 %v3368, %v3464
      %v3481 = vadd.f32 %v3369, %v3465
      %3483 = vset.pattern.permute.xlu0 0
      %3484 = vperm.xlu0 %3483, %v366
      %v3485 = vpop.permute.xlu0 %3484
      %3488 = vset.pattern.permute.xlu0 0
      %3489 = vperm.xlu0 %3488, %v367
      %v3490 = vpop.permute.xlu0 %3489
      %3493 = vset.pattern.permute.xlu0 0
      %3494 = vperm.xlu0 %3493, %v368
      %v3495 = vpop.permute.xlu0 %3494
      %3498 = vset.pattern.permute.xlu0 0
      %3499 = vperm.xlu0 %3498, %v369
      %v3500 = vpop.permute.xlu0 %3499
      %v3502 = vadd.f32 %v3466, %v3485
      %v3503 = vadd.f32 %v3467, %v3485
      %v3504 = vadd.f32 %v3468, %v3485
      %v3505 = vadd.f32 %v3469, %v3485
      %v3506 = vadd.f32 %v3470, %v3490
      %v3507 = vadd.f32 %v3471, %v3490
      %v3508 = vadd.f32 %v3472, %v3490
      %v3509 = vadd.f32 %v3473, %v3490
      %v3510 = vadd.f32 %v3474, %v3495
      %v3511 = vadd.f32 %v3475, %v3495
      %v3512 = vadd.f32 %v3476, %v3495
      %v3513 = vadd.f32 %v3477, %v3495
      %v3514 = vadd.f32 %v3478, %v3500
      %v3515 = vadd.f32 %v3479, %v3500
      %v3516 = vadd.f32 %v3480, %v3500
      %v3517 = vadd.f32 %v3481, %v3500
      %v3518 = vmul.f32 %v3502, 0.5
      %v3519 = vmul.f32 %v3503, 0.5
      %v3520 = vmul.f32 %v3504, 0.5
      %v3521 = vmul.f32 %v3505, 0.5
      %v3522 = vmul.f32 %v3506, 0.5
      %v3523 = vmul.f32 %v3507, 0.5
      %v3524 = vmul.f32 %v3508, 0.5
      %v3525 = vmul.f32 %v3509, 0.5
      %v3526 = vmul.f32 %v3502, 0.044715
      %v3527 = vmul.f32 %v3503, 0.044715
      %v3528 = vmul.f32 %v3504, 0.044715
      %v3529 = vmul.f32 %v3505, 0.044715
      %v3530 = vmul.f32 %v3506, 0.044715
      %v3531 = vmul.f32 %v3507, 0.044715
      %v3532 = vmul.f32 %v3508, 0.044715
      %v3533 = vmul.f32 %v3509, 0.044715
      %v3534 = vmul.f32 %v3526, %v3502
      %v3535 = vmul.f32 %v3527, %v3503
      %v3536 = vmul.f32 %v3528, %v3504
      %v3537 = vmul.f32 %v3529, %v3505
      %v3538 = vmul.f32 %v3530, %v3506
      %v3539 = vmul.f32 %v3531, %v3507
      %v3540 = vmul.f32 %v3532, %v3508
      %v3541 = vmul.f32 %v3533, %v3509
      %v3542 = vmul.f32 %v3534, %v3502
      %v3543 = vmul.f32 %v3535, %v3503
      %v3544 = vmul.f32 %v3536, %v3504
      %v3545 = vmul.f32 %v3537, %v3505
      %v3546 = vmul.f32 %v3538, %v3506
      %v3547 = vmul.f32 %v3539, %v3507
      %v3548 = vmul.f32 %v3540, %v3508
      %v3549 = vmul.f32 %v3541, %v3509
      %v3550 = vadd.f32 %v3502, %v3542
      %v3551 = vadd.f32 %v3503, %v3543
      %v3552 = vadd.f32 %v3504, %v3544
      %v3553 = vadd.f32 %v3505, %v3545
      %v3554 = vadd.f32 %v3506, %v3546
      %v3555 = vadd.f32 %v3507, %v3547
      %v3556 = vadd.f32 %v3508, %v3548
      %v3557 = vadd.f32 %v3509, %v3549
      %v3558 = vmul.f32 %v3550, 0.7978846
      %v3559 = vmul.f32 %v3551, 0.7978846
      %v3560 = vmul.f32 %v3552, 0.7978846
      %v3561 = vmul.f32 %v3553, 0.7978846
      %v3562 = vmul.f32 %v3554, 0.7978846
      %v3563 = vmul.f32 %v3555, 0.7978846
      %v3564 = vmul.f32 %v3556, 0.7978846
      %v3565 = vmul.f32 %v3557, 0.7978846
      %v3566 = vtanh.pop %v3558
      %v3567 = vtanh.pop %v3559
      %v3568 = vtanh.pop %v3560
      %v3569 = vtanh.pop %v3561
      %v3570 = vtanh.pop %v3562
      %v3571 = vtanh.pop %v3563
      %v3572 = vtanh.pop %v3564
      %v3573 = vtanh.pop %v3565
      %v3574 = vadd.f32 %v3566, 1.0
      %v3575 = vadd.f32 %v3567, 1.0
      %v3576 = vadd.f32 %v3568, 1.0
      %v3577 = vadd.f32 %v3569, 1.0
      %v3578 = vadd.f32 %v3570, 1.0
      %v3579 = vadd.f32 %v3571, 1.0
      %v3580 = vadd.f32 %v3572, 1.0
      %v3581 = vadd.f32 %v3573, 1.0
      %v3582 = vmul.f32 %v3518, %v3574
      %v3583 = vmul.f32 %v3519, %v3575
      %v3584 = vmul.f32 %v3520, %v3576
      %v3585 = vmul.f32 %v3521, %v3577
      %v3586 = vmul.f32 %v3522, %v3578
      %v3587 = vmul.f32 %v3523, %v3579
      %v3588 = vmul.f32 %v3524, %v3580
      %v3589 = vmul.f32 %v3525, %v3581
      %v3590 = vmul.f32 %v3582, %v3510
      %v3591 = vmul.f32 %v3583, %v3511
      %v3592 = vmul.f32 %v3584, %v3512
      %v3593 = vmul.f32 %v3585, %v3513
      %v3594 = vmul.f32 %v3586, %v3514
      %v3595 = vmul.f32 %v3587, %v3515
      %v3596 = vmul.f32 %v3588, %v3516
      %v3597 = vmul.f32 %v3589, %v3517
      %v3598 = vpack.c.bf16 %v386, %v386
      %v3599 = vpack.c.bf16 %v3594, %v3590
      %v3600 = vpack.c.bf16 %v3595, %v3591
      %v3601 = vpack.c.bf16 %v3596, %v3592
      %v3602 = vpack.c.bf16 %v3597, %v3593
      %vm3603 = vcmask 130048
      %v3605 = vsel %vm3603, %v3598, 0
      %3607 = vmatprep.subr.bf16.mxu0 0
      %3608 = vmatpush1.bf16.msra.mxu0 0
      %3609 = vmatprep.subr.bf16.mxu0 0
      %3610 = vmatpush1.bf16.msra.mxu0 0
      %3611 = vmatprep.subr.bf16.mxu0 0
      %3612 = vmatpush1.bf16.msra.mxu0 0
      %3613 = vmatprep.subr.bf16.mxu0 0
      %3614 = vmatpush1.bf16.msra.mxu0 0
      %3615 = vmatprep.subr.bf16.mxu0 0
      %3616 = vmatpush1.bf16.msra.mxu0 0
      %3617 = vmatprep.subr.bf16.mxu0 0
      %3618 = vmatpush1.bf16.msra.mxu0 0
      %3619 = vmatprep.subr.bf16.mxu0 0
      %3620 = vmatpush1.bf16.msra.mxu0 0
      %3621 = vmatprep.subr.bf16.mxu0 %v3600
      %3622 = vmatpush1.bf16.msra.mxu0 %v3599
      %3623 = vmatprep.subr.bf16.mxu0 0
      %3624 = vmatpush2.bf16.msra.mxu0 0
      %3625 = vmatprep.subr.bf16.mxu0 0
      %3626 = vmatpush2.bf16.msra.mxu0 0
      %3627 = vmatprep.subr.bf16.mxu0 0
      %3628 = vmatpush2.bf16.msra.mxu0 0
      %3629 = vmatprep.subr.bf16.mxu0 0
      %3630 = vmatpush2.bf16.msra.mxu0 0
      %3631 = vmatprep.subr.bf16.mxu0 0
      %3632 = vmatpush2.bf16.msra.mxu0 0
      %3633 = vmatprep.subr.bf16.mxu0 0
      %3634 = vmatpush2.bf16.msra.mxu0 0
      %3635 = vmatprep.subr.bf16.mxu0 0
      %3636 = vmatpush2.bf16.msra.mxu0 0
      %3637 = vmatprep.subr.bf16.mxu0 0
      %3638 = vmatpush2.bf16.msra.mxu0 0
      %3639 = vmatprep.mubr.bf16.mxu0 0
      %3640 = vmatmul.mubr.bf16.gmra.mxu0 %v3605
      %v3641 = vpop.f32.mrf.mxu0
      %v3642 = vadd.f32 0.0, %v3641
      %v3643 = vpop.f32.mrf.mxu0
      %v3644 = vadd.f32 0.0, %v3643
      %v3645 = vpop.f32.mrf.mxu0
      %v3646 = vpop.f32.mrf.mxu0
      %3647 = vdwg.mxu0
      %3648 = vmatprep.subr.bf16.mxu0 0
      %3649 = vmatpush1.bf16.msra.mxu0 0
      %3650 = vmatprep.subr.bf16.mxu0 0
      %3651 = vmatpush1.bf16.msra.mxu0 0
      %3652 = vmatprep.subr.bf16.mxu0 0
      %3653 = vmatpush1.bf16.msra.mxu0 0
      %3654 = vmatprep.subr.bf16.mxu0 0
      %3655 = vmatpush1.bf16.msra.mxu0 0
      %3656 = vmatprep.subr.bf16.mxu0 0
      %3657 = vmatpush1.bf16.msra.mxu0 0
      %3658 = vmatprep.subr.bf16.mxu0 0
      %3659 = vmatpush1.bf16.msra.mxu0 0
      %3660 = vmatprep.subr.bf16.mxu0 0
      %3661 = vmatpush1.bf16.msra.mxu0 0
      %3662 = vmatprep.subr.bf16.mxu0 %v3602
      %3663 = vmatpush1.bf16.msra.mxu0 %v3601
      %3664 = vmatprep.subr.bf16.mxu0 0
      %3665 = vmatpush2.bf16.msra.mxu0 0
      %3666 = vmatprep.subr.bf16.mxu0 0
      %3667 = vmatpush2.bf16.msra.mxu0 0
      %3668 = vmatprep.subr.bf16.mxu0 0
      %3669 = vmatpush2.bf16.msra.mxu0 0
      %3670 = vmatprep.subr.bf16.mxu0 0
      %3671 = vmatpush2.bf16.msra.mxu0 0
      %3672 = vmatprep.subr.bf16.mxu0 0
      %3673 = vmatpush2.bf16.msra.mxu0 0
      %3674 = vmatprep.subr.bf16.mxu0 0
      %3675 = vmatpush2.bf16.msra.mxu0 0
      %3676 = vmatprep.subr.bf16.mxu0 0
      %3677 = vmatpush2.bf16.msra.mxu0 0
      %3678 = vmatprep.subr.bf16.mxu0 0
      %3679 = vmatpush2.bf16.msra.mxu0 0
      %3680 = vmatprep.mubr.bf16.mxu0 0
      %3681 = vmatmul.mubr.bf16.gmra.mxu0 %v3605
      %v3682 = vpop.f32.mrf.mxu0
      %v3683 = vadd.f32 0.0, %v3682
      %v3684 = vpop.f32.mrf.mxu0
      %v3685 = vadd.f32 0.0, %v3684
      %v3686 = vpop.f32.mrf.mxu0
      %v3687 = vpop.f32.mrf.mxu0
      %3688 = vdwg.mxu0
      %v3689 = vadd.f32 %v2302, %v3642
      %v3690 = vadd.f32 %v2303, %v3644
      %v3691 = vadd.f32 %v2304, %v3683
      %v3692 = vadd.f32 %v2305, %v3685
      %3694 = vset.pattern.permute.xlu0 0
      %3695 = vperm.xlu0 %3694, %v370
      %v3696 = vpop.permute.xlu0 %3695
      %v3698 = vadd.f32 %v3689, %v3696
      %v3699 = vadd.f32 %v3690, %v3696
      %v3700 = vadd.f32 %v3691, %v3696
      %v3701 = vadd.f32 %v3692, %v3696
      %3702 = vst [vmem:[%s338] sm:$0xff] %v3698
      %3703 = vst [vmem:[%s338 + $0x8] sm:$0xff] %v3699
      %3704 = vst [vmem:[%s338 + $0x10] sm:$0xff] %v3700
      %3705 = vst [vmem:[%s338 + $0x18] sm:$0xff] %v3701
      %p3706 = scmp.lt.s32.totalorder %s18, 1
      %s3707 = scalar_select %p3706, %s18, 1
      %s3708 = smul.addr %s3707, 4
      %s3709 = smul.addr %s3708, 8
      %s3710 = scalar_lea.vmem %s7, %s3709
      // Predicated region
      $region49: #{spfi_forward.1} parent=47 // pred_check
        %p3711 = pneg %p203
      $region50: #{spfi_forward.1} parent=47 // pred_check_branch
        %3713 = sbr.rel (%p3711) target = $region52
      $region51: #{spfi_forward.1} parent=47 // pred_region
        _
      $region52: #{spfi_forward.1} parent=47 // pred_fallthru
        _
    $region48: #{spfi_forward.1} parent=5 // pred_fallthru
      _
    %p3714 = scmp.le.s32.totalorder 2, %s13
    // Predicated region
    $region53: #{spfi_forward.1} parent=5 // pred_check
      %p3715 = pneg %p3714
    $region54: #{spfi_forward.1} parent=5 // pred_check_branch
      %3717 = sbr.rel (%p3715) target = $region56
    $region55: #{spfi_forward.1} parent=5 // pred_region
      %s3718 = ssub.s32 %s13, 2
      // Predicated region
      $region57: #{spfi_forward.1} parent=55 // pred_check
        %p3719 = pneg %p209
      $region58: #{spfi_forward.1} parent=55 // pred_check_branch
        %3721 = sbr.rel (%p3719) target = $region60
      $region59: #{spfi_forward.1} parent=55 // pred_region
        %p3722 = scmp.lt.s32.totalorder %s19, 1
        %s3723 = scalar_select %p3722, %s19, 1
        %s3724 = smul.addr %s3723, 4
        %s3725 = smul.addr %s3724, 8
        %s3726 = scalar_lea.vmem %s7, %s3725
      $region60: #{spfi_forward.1} parent=55 // pred_fallthru
        _
    $region56: #{spfi_forward.1} parent=5 // pred_fallthru
      _
  $region6: #{spfi_forward.1} parent=0 // loop_footer
    %s17 = sadd.s32 1, %s13
  $region7: #{spfi_forward.1} parent=0 // loop_footer_branch
    %12 = sbr.rel target = $region3
  $region8: #{spfi_forward.1} parent=0 // loop_exit
    _

</llo_original>
